<compile_context>
chip_gen: v5e
topology: v5e:2x2
jax: 0.10.0
libtpu: 0.0.40
codegen_flags: <defaults>
</compile_context>

<pallas_src>
import functools

import jax
import jax.numpy as jnp
from jax.experimental import pallas as pl
from jax.experimental.pallas import tpu as pltpu


# -----------------------------------------------------------------------------
# Elementwise helpers
# -----------------------------------------------------------------------------
def _erf_approx(x):
    # Abramowitz & Stegun 7.1.26, |err| <= 1.5e-7 (safe to lower in Mosaic).
    a1, a2, a3, a4, a5 = (0.254829592, -0.284496736, 1.421413741,
                          -1.453152027, 1.061405429)
    p = 0.3275911
    ax = jnp.abs(x)
    t = 1.0 / (1.0 + p * ax)
    poly = ((((a5 * t + a4) * t + a3) * t + a2) * t + a1) * t
    y = 1.0 - poly * jnp.exp(-ax * ax)
    return jnp.where(x >= 0, y, -y)


def _gelu_kernel(x):
    # erf-based GELU (matches torch.nn.functional.gelu default to ~1e-7).
    return 0.5 * x * (1.0 + _erf_approx(x * 0.7071067811865476))


def _gelu_exact(x):
    return 0.5 * x * (1.0 + jax.lax.erf(x * 0.7071067811865476))


def _layernorm(x, gamma, beta, eps=1e-5):
    # LayerNorm over the last axis (PyTorch default eps=1e-5, biased variance).
    mu = jnp.mean(x, axis=-1, keepdims=True)
    xc = x - mu
    var = jnp.mean(xc * xc, axis=-1, keepdims=True)
    return xc * jax.lax.rsqrt(var + eps) * gamma + beta


# -----------------------------------------------------------------------------
# Fused Pallas kernel: whole network for ALL samples in one invocation.
# -----------------------------------------------------------------------------
def mlp_mixer_fused_kernel(p_ref, stem_ref, mats_ref, vecs_ref, head_ref, o_ref,
                           *, n, t, d, k, mdt):
    # p_ref    : (N*T, K)    flattened patches, batch folded into rows
    # stem_ref : (K+8, D)    rows [stem_w (K) | stem_b | ln_g | ln_b | pad]
    # mats_ref : (L, 6D, D)  rows [Wt1 | Wt2 | Wc1^T | Wc2^T | Bt1 | Bt2]
    #                        (token-MLP biases pre-broadcast to (T, D))
    # vecs_ref : (L, 8, D)   rows [g1, b1, g2, b2, bc1, bc2, 0, 0]
    # head_ref : (D+8, NCp)  rows [head_w^T (D) | head_b | pad], lane-padded
    # o_ref    : (N, NCp)    lane-dense logits (padded classes are zero)

    def mm(a, b):
        # f32 accumulation always; operands optionally cast (bf16 on v6e/v7x).
        return jnp.dot(a.astype(mdt), b.astype(mdt),
                       preferred_element_type=jnp.float32)

    sw = stem_ref[0:k, :]                  # (K, D)
    sb = stem_ref[k:k + 1, :]              # (1, D)
    ln_g = stem_ref[k + 1:k + 2, :]
    ln_b = stem_ref[k + 2:k + 3, :]

    # ---- stem: one (N*T, K) @ (K, D) matmul for all samples -----------------
    x = mm(p_ref[...], sw) + sb                                   # (N*T, D)

    num_blocks = mats_ref.shape[0]
    # Static unroll is fine for small L; switch to lax.fori_loop / a layer grid
    # axis carrying x in VMEM scratch when L grows.
    for l in range(num_blocks):
        wt1 = mats_ref[l, 0 * d:1 * d, :]                         # (T, T)
        wt2 = mats_ref[l, 1 * d:2 * d, :]                         # (T, T)
        wc1t = mats_ref[l, 2 * d:3 * d, :]                        # (D, D)
        wc2t = mats_ref[l, 3 * d:4 * d, :]                        # (D, D)
        bt1 = mats_ref[l, 4 * d:5 * d, :]                         # (T, D) pre-bcast
        bt2 = mats_ref[l, 5 * d:6 * d, :]                         # (T, D) pre-bcast
        g1 = vecs_ref[l, 0:1, :]
        b1 = vecs_ref[l, 1:2, :]
        g2 = vecs_ref[l, 2:3, :]
        b2 = vecs_ref[l, 3:4, :]
        bc1 = vecs_ref[l, 4:5, :]
        bc2 = vecs_ref[l, 5:6, :]

        # ---- token mixing ----------------------------------------------------
        # PyTorch: y = tokens_mlp(norm1(x).swap(-1,-2)).swap(-1,-2); per sample
        # this is y_s = Wt2 @ gelu(Wt1 @ norm1(x_s) + Bt1) + Bt2 (no transposes).
        y = _layernorm(x, g1, b1)                                 # (N*T, D)
        upd = []
        for s in range(n):               # tokens must not mix across samples
            ys = y[s * t:(s + 1) * t, :]                          # (T, D)
            hs = _gelu_kernel(mm(wt1, ys) + bt1)
            upd.append(mm(wt2, hs) + bt2)
        x = x + jnp.concatenate(upd, axis=0)

        # ---- channel mixing (fully batch-folded) -----------------------------
        z = _layernorm(x, g2, b2)                                 # (N*T, D)
        h = _gelu_kernel(mm(z, wc1t) + bc1)
        x = x + mm(h, wc2t) + bc2

    # ---- head: LayerNorm -> per-sample token mean -> classifier -------------
    z = _layernorm(x, ln_g, ln_b)                                 # (N*T, D)
    # Per-sample token mean as a single small matmul against a block "pooling"
    # matrix built from 2-D iota (avoids concatenating 1-row tiles).
    row = jax.lax.broadcasted_iota(jnp.int32, (n, n * t), 0)
    col = jax.lax.broadcasted_iota(jnp.int32, (n, n * t), 1)
    lower = row * t
    pool = jnp.where((col >= lower) & (col < lower + t), 1.0 / t, 0.0)
    m = mm(pool, z)                                               # (N, D)

    hw = head_ref[0:d, :]                                         # (D, NCp)
    hb = head_ref[d:d + 1, :]                                     # (1, NCp)
    o_ref[...] = mm(m, hw) + hb                                   # lane-dense store


# -----------------------------------------------------------------------------
# Host-side glue / wrapper
# -----------------------------------------------------------------------------
def _extract_patches(x, patch):
    # NCHW -> (N, T, C*patch*patch); features flattened in (c, kh, kw) order so
    # the stem Conv2d becomes a plain matmul against its OIHW weight.
    n, c, h, w = x.shape
    hp, wp = h // patch, w // patch
    x = x.reshape(n, c, hp, patch, wp, patch)
    x = x.transpose(0, 2, 4, 1, 3, 5)                 # (n, hp, wp, c, kh, kw)
    return x.reshape(n, hp * wp, c * patch * patch)


def mlp_mixer_forward(x, kp, matmul_dtype=jnp.float32):
    patches = _extract_patches(x, kp["patch"])         # (N, T, K)
    n, t, k = patches.shape
    d = kp["stem_slab"].shape[1]
    nc_pad = kp["head_slab"].shape[1]
    p2d = patches.reshape(n * t, k)                    # fold batch into rows

    vmem = pltpu.MemorySpace.VMEM
    kernel = functools.partial(mlp_mixer_fused_kernel,
                               n=n, t=t, d=d, k=k, mdt=matmul_dtype)
    out = pl.pallas_call(
        kernel,
        out_shape=jax.ShapeDtypeStruct((n, nc_pad), jnp.float32),
        # No grid: a single invocation with every operand fully VMEM-resident
        # and single-buffered (5 DMA streams total instead of 19 tiny ones).
        in_specs=[pl.BlockSpec(memory_space=vmem)] * 5,
        out_specs=pl.BlockSpec(memory_space=vmem),
    )(p2d, kp["stem_slab"], kp["mats"], kp["vecs"], kp["head_slab"])
    return out[:, :kp["num_classes"]]


# -----------------------------------------------------------------------------
# Deterministic parameter init (PyTorch-oriented shapes) + packed kernel slabs
# -----------------------------------------------------------------------------
def init_raw_params(key, num_classes, num_blocks, patch, hidden, tokens_dim,
                    channels_dim, scale=0.15):
    def dense(kk, out_d, in_d):
        kw, kb = jax.random.split(kk)
        return (scale * jax.random.normal(kw, (out_d, in_d), jnp.float32),
                scale * jax.random.normal(kb, (out_d,), jnp.float32))

    keys = jax.random.split(key, 3 + num_blocks)
    conv_w = scale * jax.random.normal(keys[0], (hidden, hidden, patch, patch),
                                       jnp.float32)
    conv_b = scale * jax.random.normal(keys[1], (hidden,), jnp.float32)
    blocks = []
    for i in range(num_blocks):
        bks = jax.random.split(keys[3 + i], 4)
        wt1, bt1 = dense(bks[0], tokens_dim, tokens_dim)
        wt2, bt2 = dense(bks[1], tokens_dim, tokens_dim)
        wc1, bc1 = dense(bks[2], tokens_dim, tokens_dim)
        wc2, bc2 = dense(bks[3], tokens_dim, tokens_dim)
        blocks.append(dict(
            g1=jnp.ones((channels_dim,), jnp.float32),
            b1=jnp.zeros((channels_dim,), jnp.float32),
            wt1=wt1, bt1=bt1, wt2=wt2, bt2=bt2,
            g2=jnp.ones((channels_dim,), jnp.float32),
            b2=jnp.zeros((channels_dim,), jnp.float32),
            wc1=wc1, bc1=bc1, wc2=wc2, bc2=bc2))
    head_w, head_b = dense(keys[2], num_classes, hidden)
    return dict(conv_w=conv_w, conv_b=conv_b, blocks=blocks,
                ln_g=jnp.ones((hidden,), jnp.float32),
                ln_b=jnp.zeros((hidden,), jnp.float32),
                head_w=head_w, head_b=head_b)


def to_kernel_params(raw, patch):
    d = raw["conv_b"].shape[0]
    k = d * patch * patch
    nc = raw["head_w"].shape[0]
    nc_pad = max(128, ((nc + 127) // 128) * 128)
    blocks = raw["blocks"]
    t = blocks[0]["wt1"].shape[0]
    assert t == d, "module requires hidden == tokens_mlp == channels_mlp == num_patches"

    # Stem / head-LayerNorm slab (K+8, D): [stem_w; stem_b; ln_g; ln_b; pad].
    stem_slab = jnp.concatenate(
        [raw["conv_w"].reshape(d, k).T,
         raw["conv_b"].reshape(1, d),
         raw["ln_g"].reshape(1, d),
         raw["ln_b"].reshape(1, d),
         jnp.zeros((5, d), jnp.float32)], axis=0)

    # Per-layer matrix slab (L, 6D, D): [Wt1; Wt2; Wc1^T; Wc2^T; Bt1; Bt2],
    # token-MLP biases pre-broadcast to lane-dense (T, D) matrices.
    mats, vecs = [], []
    for bp in blocks:
        bt1f = jnp.broadcast_to(bp["bt1"][:, None], (t, d))
        bt2f = jnp.broadcast_to(bp["bt2"][:, None], (t, d))
        mats.append(jnp.concatenate(
            [bp["wt1"], bp["wt2"], bp["wc1"].T, bp["wc2"].T, bt1f, bt2f], axis=0))
        vecs.append(jnp.stack(
            [bp["g1"], bp["b1"], bp["g2"], bp["b2"], bp["bc1"], bp["bc2"],
             jnp.zeros((d,), jnp.float32), jnp.zeros((d,), jnp.float32)], axis=0))
    mats = jnp.stack(mats, axis=0)                      # (L, 6D, D)
    vecs = jnp.stack(vecs, axis=0)                      # (L, 8, D)

    # Head slab (D+8, NCp): [head_w^T zero-padded to 128 lanes; head_b; pad].
    head_slab = jnp.zeros((d + 8, nc_pad), jnp.float32)
    head_slab = head_slab.at[0:d, 0:nc].set(raw["head_w"].T)
    head_slab = head_slab.at[d, 0:nc].set(raw["head_b"])

    return dict(patch=patch, num_classes=nc,
                stem_slab=stem_slab, mats=mats, vecs=vecs, head_slab=head_slab)


# -----------------------------------------------------------------------------
# Pure-JAX reference (mirrors the PyTorch forward, exact-erf GELU).
# -----------------------------------------------------------------------------
def reference_forward(x, raw, patch):
    hp = jax.lax.Precision.HIGHEST
    mm = functools.partial(jnp.matmul, precision=hp)
    y = jax.lax.conv_general_dilated(
        x, raw["conv_w"], window_strides=(patch, patch), padding="VALID",
        dimension_numbers=("NCHW", "OIHW", "NCHW"), precision=hp)
    y = y + raw["conv_b"][None, :, None, None]
    n, c, h, w = y.shape
    tok = jnp.transpose(y.reshape(n, c, h * w), (0, 2, 1))   # 'n c h w -> n (h w) c'
    for bp in raw["blocks"]:
        z = _layernorm(tok, bp["g1"], bp["b1"])
        z = jnp.swapaxes(z, 1, 2)                            # 'n c t -> n t c'
        z = mm(_gelu_exact(mm(z, bp["wt1"].T) + bp["bt1"]), bp["wt2"].T) + bp["bt2"]
        z = jnp.swapaxes(z, 1, 2)                            # 'n t c -> n c t'
        tok = tok + z
        z = _layernorm(tok, bp["g2"], bp["b2"])
        tok = tok + (mm(_gelu_exact(mm(z, bp["wc1"].T) + bp["bc1"]), bp["wc2"].T)
                     + bp["bc2"])
    z = _layernorm(tok, raw["ln_g"], raw["ln_b"])
    m = jnp.mean(z, axis=1)
    return mm(m, raw["head_w"].T) + raw["head_b"]


# -----------------------------------------------------------------------------
if __name__ == "__main__":
    NUM_CLASSES = 10
    NUM_BLOCKS = 2
    PATCH = 2
    HIDDEN = 32           # hidden == tokens_mlp == channels_mlp == num_patches
    N, H, W = 2, 8, 16    # (H//PATCH)*(W//PATCH) == 32 tokens == HIDDEN

    key = jax.random.PRNGKey(0)
    k_par, k_x = jax.random.split(key)
    raw = init_raw_params(k_par, NUM_CLASSES, NUM_BLOCKS, PATCH, HIDDEN,
                          HIDDEN, HIDDEN)
    kparams = to_kernel_params(raw, PATCH)

    # The stem Conv2d has in_channels == hidden_dim, so the image has HIDDEN channels.
    x = jax.random.normal(k_x, (N, HIDDEN, H, W), jnp.float32)

    logits = jax.block_until_ready(mlp_mixer_forward(x, kparams))
    assert logits.shape == (N, NUM_CLASSES)

    ref = reference_forward(x, raw, PATCH)
    err = float(jnp.max(jnp.abs(logits - ref)))
    if not err < 5e-3:
        raise AssertionError(f"Pallas output mismatch vs reference: max abs err = {err}")
    print("KERNEL_OK")
</pallas_src>

<mosaic_0001>
module attributes {stable_mosaic.version = 11 : i64} {
  func.func @mlp_mixer_fused_kernel(%arg0: memref<64x128xf32, #tpu.memory_space<vmem>>, %arg1: memref<136x32xf32, #tpu.memory_space<vmem>>, %arg2: memref<2x192x32xf32, #tpu.memory_space<vmem>>, %arg3: memref<2x8x32xf32, #tpu.memory_space<vmem>>, %arg4: memref<40x128xf32, #tpu.memory_space<vmem>>, %arg5: memref<2x128xf32, #tpu.memory_space<vmem>>) attributes {dimension_semantics = [], scalar_prefetch = 0 : i64, scratch_operands = 0 : i64, tpu.core_type = #tpu.core_type<tc>} {
    %c0 = arith.constant 0 : index
    %c0_0 = arith.constant 0 : index
    %0 = vector.load %arg1[%c0, %c0_0] : memref<136x32xf32, #tpu.memory_space<vmem>>, vector<128x32xf32>
    %c128 = arith.constant 128 : index
    %c0_1 = arith.constant 0 : index
    %1 = vector.load %arg1[%c128, %c0_1] : memref<136x32xf32, #tpu.memory_space<vmem>>, vector<1x32xf32>
    %c129 = arith.constant 129 : index
    %c0_2 = arith.constant 0 : index
    %2 = vector.load %arg1[%c129, %c0_2] : memref<136x32xf32, #tpu.memory_space<vmem>>, vector<1x32xf32>
    %c130 = arith.constant 130 : index
    %c0_3 = arith.constant 0 : index
    %3 = vector.load %arg1[%c130, %c0_3] : memref<136x32xf32, #tpu.memory_space<vmem>>, vector<1x32xf32>
    %c0_4 = arith.constant 0 : index
    %c0_5 = arith.constant 0 : index
    %4 = vector.load %arg0[%c0_4, %c0_5] : memref<64x128xf32, #tpu.memory_space<vmem>>, vector<64x128xf32>
    %cst = arith.constant dense<0.000000e+00> : vector<64x32xf32>
    %5 = tpu.matmul %4, %0, %cst {dimension_numbers = #tpu.dot_dimension_numbers<[1], [0], [0], [1], [0, 0, 1, 1], [], []>} : vector<64x128xf32>, vector<128x32xf32>, vector<64x32xf32> -> vector<64x32xf32>
    %6 = vector.broadcast %1 : vector<1x32xf32> to vector<64x32xf32>
    %7 = arith.addf %5, %6 : vector<64x32xf32>
    %c0_6 = arith.constant 0 : index
    %c0_7 = arith.constant 0 : index
    %c0_8 = arith.constant 0 : index
    %8 = vector.load %arg2[%c0_6, %c0_7, %c0_8] : memref<2x192x32xf32, #tpu.memory_space<vmem>>, vector<1x32x32xf32>
    %9 = vector.shape_cast %8 : vector<1x32x32xf32> to vector<32x32xf32>
    %c0_9 = arith.constant 0 : index
    %c32 = arith.constant 32 : index
    %c0_10 = arith.constant 0 : index
    %10 = vector.load %arg2[%c0_9, %c32, %c0_10] : memref<2x192x32xf32, #tpu.memory_space<vmem>>, vector<1x32x32xf32>
    %11 = vector.shape_cast %10 : vector<1x32x32xf32> to vector<32x32xf32>
    %c0_11 = arith.constant 0 : index
    %c64 = arith.constant 64 : index
    %c0_12 = arith.constant 0 : index
    %12 = vector.load %arg2[%c0_11, %c64, %c0_12] : memref<2x192x32xf32, #tpu.memory_space<vmem>>, vector<1x32x32xf32>
    %13 = vector.shape_cast %12 : vector<1x32x32xf32> to vector<32x32xf32>
    %c0_13 = arith.constant 0 : index
    %c96 = arith.constant 96 : index
    %c0_14 = arith.constant 0 : index
    %14 = vector.load %arg2[%c0_13, %c96, %c0_14] : memref<2x192x32xf32, #tpu.memory_space<vmem>>, vector<1x32x32xf32>
    %15 = vector.shape_cast %14 : vector<1x32x32xf32> to vector<32x32xf32>
    %c0_15 = arith.constant 0 : index
    %c128_16 = arith.constant 128 : index
    %c0_17 = arith.constant 0 : index
    %16 = vector.load %arg2[%c0_15, %c128_16, %c0_17] : memref<2x192x32xf32, #tpu.memory_space<vmem>>, vector<1x32x32xf32>
    %17 = vector.shape_cast %16 : vector<1x32x32xf32> to vector<32x32xf32>
    %c0_18 = arith.constant 0 : index
    %c160 = arith.constant 160 : index
    %c0_19 = arith.constant 0 : index
    %18 = vector.load %arg2[%c0_18, %c160, %c0_19] : memref<2x192x32xf32, #tpu.memory_space<vmem>>, vector<1x32x32xf32>
    %19 = vector.shape_cast %18 : vector<1x32x32xf32> to vector<32x32xf32>
    %c0_20 = arith.constant 0 : index
    %c0_21 = arith.constant 0 : index
    %c0_22 = arith.constant 0 : index
    %20 = vector.load %arg3[%c0_20, %c0_21, %c0_22] : memref<2x8x32xf32, #tpu.memory_space<vmem>>, vector<1x1x32xf32>
    %21 = vector.shape_cast %20 : vector<1x1x32xf32> to vector<1x32xf32>
    %c0_23 = arith.constant 0 : index
    %c1 = arith.constant 1 : index
    %c0_24 = arith.constant 0 : index
    %22 = vector.load %arg3[%c0_23, %c1, %c0_24] : memref<2x8x32xf32, #tpu.memory_space<vmem>>, vector<1x1x32xf32>
    %23 = vector.shape_cast %22 : vector<1x1x32xf32> to vector<1x32xf32>
    %c0_25 = arith.constant 0 : index
    %c2 = arith.constant 2 : index
    %c0_26 = arith.constant 0 : index
    %24 = vector.load %arg3[%c0_25, %c2, %c0_26] : memref<2x8x32xf32, #tpu.memory_space<vmem>>, vector<1x1x32xf32>
    %25 = vector.shape_cast %24 : vector<1x1x32xf32> to vector<1x32xf32>
    %c0_27 = arith.constant 0 : index
    %c3 = arith.constant 3 : index
    %c0_28 = arith.constant 0 : index
    %26 = vector.load %arg3[%c0_27, %c3, %c0_28] : memref<2x8x32xf32, #tpu.memory_space<vmem>>, vector<1x1x32xf32>
    %27 = vector.shape_cast %26 : vector<1x1x32xf32> to vector<1x32xf32>
    %c0_29 = arith.constant 0 : index
    %c4 = arith.constant 4 : index
    %c0_30 = arith.constant 0 : index
    %28 = vector.load %arg3[%c0_29, %c4, %c0_30] : memref<2x8x32xf32, #tpu.memory_space<vmem>>, vector<1x1x32xf32>
    %29 = vector.shape_cast %28 : vector<1x1x32xf32> to vector<1x32xf32>
    %c0_31 = arith.constant 0 : index
    %c5 = arith.constant 5 : index
    %c0_32 = arith.constant 0 : index
    %30 = vector.load %arg3[%c0_31, %c5, %c0_32] : memref<2x8x32xf32, #tpu.memory_space<vmem>>, vector<1x1x32xf32>
    %31 = vector.shape_cast %30 : vector<1x1x32xf32> to vector<1x32xf32>
    %cst_33 = arith.constant dense<0.000000e+00> : vector<64xf32>
    %32 = vector.multi_reduction <add>, %7, %cst_33 [1] : vector<64x32xf32> to vector<64xf32>
    %33 = vector.shape_cast %32 : vector<64xf32> to vector<64x1xf32>
    %cst_34 = arith.constant 3.200000e+01 : f32
    %34 = vector.broadcast %cst_34 : f32 to vector<64x1xf32>
    %35 = arith.divf %33, %34 : vector<64x1xf32>
    %36 = vector.broadcast %35 : vector<64x1xf32> to vector<64x32xf32>
    %37 = arith.subf %7, %36 : vector<64x32xf32>
    %38 = arith.mulf %37, %37 : vector<64x32xf32>
    %cst_35 = arith.constant dense<0.000000e+00> : vector<64xf32>
    %39 = vector.multi_reduction <add>, %38, %cst_35 [1] : vector<64x32xf32> to vector<64xf32>
    %40 = vector.shape_cast %39 : vector<64xf32> to vector<64x1xf32>
    %cst_36 = arith.constant 3.200000e+01 : f32
    %41 = vector.broadcast %cst_36 : f32 to vector<64x1xf32>
    %42 = arith.divf %40, %41 : vector<64x1xf32>
    %cst_37 = arith.constant 9.99999974E-6 : f32
    %43 = vector.broadcast %cst_37 : f32 to vector<64x1xf32>
    %44 = arith.addf %42, %43 : vector<64x1xf32>
    %45 = math.rsqrt %44 : vector<64x1xf32>
    %46 = vector.broadcast %45 : vector<64x1xf32> to vector<64x32xf32>
    %47 = arith.mulf %37, %46 : vector<64x32xf32>
    %48 = vector.broadcast %21 : vector<1x32xf32> to vector<64x32xf32>
    %49 = arith.mulf %47, %48 : vector<64x32xf32>
    %50 = vector.broadcast %23 : vector<1x32xf32> to vector<64x32xf32>
    %51 = arith.addf %49, %50 : vector<64x32xf32>
    %52 = vector.extract_strided_slice %51 {offsets = [0, 0], sizes = [32, 32], strides = [1, 1]} : vector<64x32xf32> to vector<32x32xf32>
    %cst_38 = arith.constant dense<0.000000e+00> : vector<32x32xf32>
    %53 = tpu.matmul %9, %52, %cst_38 {dimension_numbers = #tpu.dot_dimension_numbers<[1], [0], [0], [1], [0, 0, 1, 1], [], []>} : vector<32x32xf32>, vector<32x32xf32>, vector<32x32xf32> -> vector<32x32xf32>
    %54 = arith.addf %53, %17 : vector<32x32xf32>
    %cst_39 = arith.constant 5.000000e-01 : f32
    %55 = vector.broadcast %cst_39 : f32 to vector<32x32xf32>
    %56 = arith.mulf %55, %54 : vector<32x32xf32>
    %cst_40 = arith.constant 0.707106769 : f32
    %57 = vector.broadcast %cst_40 : f32 to vector<32x32xf32>
    %58 = arith.mulf %54, %57 : vector<32x32xf32>
    %59 = math.absf %58 : vector<32x32xf32>
    %cst_41 = arith.constant 0.327591091 : f32
    %60 = vector.broadcast %cst_41 : f32 to vector<32x32xf32>
    %61 = arith.mulf %60, %59 : vector<32x32xf32>
    %cst_42 = arith.constant 1.000000e+00 : f32
    %62 = vector.broadcast %cst_42 : f32 to vector<32x32xf32>
    %63 = arith.addf %62, %61 : vector<32x32xf32>
    %cst_43 = arith.constant 1.000000e+00 : f32
    %64 = vector.broadcast %cst_43 : f32 to vector<32x32xf32>
    %65 = arith.divf %64, %63 : vector<32x32xf32>
    %cst_44 = arith.constant 1.06140542 : f32
    %66 = vector.broadcast %cst_44 : f32 to vector<32x32xf32>
    %67 = arith.mulf %66, %65 : vector<32x32xf32>
    %cst_45 = arith.constant -1.45315206 : f32
    %68 = vector.broadcast %cst_45 : f32 to vector<32x32xf32>
    %69 = arith.addf %67, %68 : vector<32x32xf32>
    %70 = arith.mulf %69, %65 : vector<32x32xf32>
    %cst_46 = arith.constant 1.42141378 : f32
    %71 = vector.broadcast %cst_46 : f32 to vector<32x32xf32>
    %72 = arith.addf %70, %71 : vector<32x32xf32>
    %73 = arith.mulf %72, %65 : vector<32x32xf32>
    %cst_47 = arith.constant -0.284496725 : f32
    %74 = vector.broadcast %cst_47 : f32 to vector<32x32xf32>
    %75 = arith.addf %73, %74 : vector<32x32xf32>
    %76 = arith.mulf %75, %65 : vector<32x32xf32>
    %cst_48 = arith.constant 0.254829586 : f32
    %77 = vector.broadcast %cst_48 : f32 to vector<32x32xf32>
    %78 = arith.addf %76, %77 : vector<32x32xf32>
    %79 = arith.mulf %78, %65 : vector<32x32xf32>
    %cst_49 = arith.constant 0.000000e+00 : f32
    %80 = vector.broadcast %cst_49 : f32 to vector<32x32xf32>
    %81 = arith.subf %80, %59 : vector<32x32xf32>
    %82 = arith.mulf %81, %59 : vector<32x32xf32>
    %83 = math.exp %82 : vector<32x32xf32>
    %84 = arith.mulf %79, %83 : vector<32x32xf32>
    %cst_50 = arith.constant 1.000000e+00 : f32
    %85 = vector.broadcast %cst_50 : f32 to vector<32x32xf32>
    %86 = arith.subf %85, %84 : vector<32x32xf32>
    %cst_51 = arith.constant 0.000000e+00 : f32
    %87 = vector.broadcast %cst_51 : f32 to vector<32x32xf32>
    %88 = arith.cmpf oge, %58, %87 : vector<32x32xf32>
    %cst_52 = arith.constant 0.000000e+00 : f32
    %89 = vector.broadcast %cst_52 : f32 to vector<32x32xf32>
    %90 = arith.subf %89, %86 : vector<32x32xf32>
    %91 = arith.select %88, %86, %90 : vector<32x32xi1>, vector<32x32xf32>
    %cst_53 = arith.constant 1.000000e+00 : f32
    %92 = vector.broadcast %cst_53 : f32 to vector<32x32xf32>
    %93 = arith.addf %92, %91 : vector<32x32xf32>
    %94 = arith.mulf %56, %93 : vector<32x32xf32>
    %cst_54 = arith.constant dense<0.000000e+00> : vector<32x32xf32>
    %95 = tpu.matmul %11, %94, %cst_54 {dimension_numbers = #tpu.dot_dimension_numbers<[1], [0], [0], [1], [0, 0, 1, 1], [], []>} : vector<32x32xf32>, vector<32x32xf32>, vector<32x32xf32> -> vector<32x32xf32>
    %96 = arith.addf %95, %19 : vector<32x32xf32>
    %97 = vector.extract_strided_slice %51 {offsets = [32, 0], sizes = [32, 32], strides = [1, 1]} : vector<64x32xf32> to vector<32x32xf32>
    %cst_55 = arith.constant dense<0.000000e+00> : vector<32x32xf32>
    %98 = tpu.matmul %9, %97, %cst_55 {dimension_numbers = #tpu.dot_dimension_numbers<[1], [0], [0], [1], [0, 0, 1, 1], [], []>} : vector<32x32xf32>, vector<32x32xf32>, vector<32x32xf32> -> vector<32x32xf32>
    %99 = arith.addf %98, %17 : vector<32x32xf32>
    %cst_56 = arith.constant 5.000000e-01 : f32
    %100 = vector.broadcast %cst_56 : f32 to vector<32x32xf32>
    %101 = arith.mulf %100, %99 : vector<32x32xf32>
    %cst_57 = arith.constant 0.707106769 : f32
    %102 = vector.broadcast %cst_57 : f32 to vector<32x32xf32>
    %103 = arith.mulf %99, %102 : vector<32x32xf32>
    %104 = math.absf %103 : vector<32x32xf32>
    %cst_58 = arith.constant 0.327591091 : f32
    %105 = vector.broadcast %cst_58 : f32 to vector<32x32xf32>
    %106 = arith.mulf %105, %104 : vector<32x32xf32>
    %cst_59 = arith.constant 1.000000e+00 : f32
    %107 = vector.broadcast %cst_59 : f32 to vector<32x32xf32>
    %108 = arith.addf %107, %106 : vector<32x32xf32>
    %cst_60 = arith.constant 1.000000e+00 : f32
    %109 = vector.broadcast %cst_60 : f32 to vector<32x32xf32>
    %110 = arith.divf %109, %108 : vector<32x32xf32>
    %cst_61 = arith.constant 1.06140542 : f32
    %111 = vector.broadcast %cst_61 : f32 to vector<32x32xf32>
    %112 = arith.mulf %111, %110 : vector<32x32xf32>
    %cst_62 = arith.constant -1.45315206 : f32
    %113 = vector.broadcast %cst_62 : f32 to vector<32x32xf32>
    %114 = arith.addf %112, %113 : vector<32x32xf32>
    %115 = arith.mulf %114, %110 : vector<32x32xf32>
    %cst_63 = arith.constant 1.42141378 : f32
    %116 = vector.broadcast %cst_63 : f32 to vector<32x32xf32>
    %117 = arith.addf %115, %116 : vector<32x32xf32>
    %118 = arith.mulf %117, %110 : vector<32x32xf32>
    %cst_64 = arith.constant -0.284496725 : f32
    %119 = vector.broadcast %cst_64 : f32 to vector<32x32xf32>
    %120 = arith.addf %118, %119 : vector<32x32xf32>
    %121 = arith.mulf %120, %110 : vector<32x32xf32>
    %cst_65 = arith.constant 0.254829586 : f32
    %122 = vector.broadcast %cst_65 : f32 to vector<32x32xf32>
    %123 = arith.addf %121, %122 : vector<32x32xf32>
    %124 = arith.mulf %123, %110 : vector<32x32xf32>
    %cst_66 = arith.constant 0.000000e+00 : f32
    %125 = vector.broadcast %cst_66 : f32 to vector<32x32xf32>
    %126 = arith.subf %125, %104 : vector<32x32xf32>
    %127 = arith.mulf %126, %104 : vector<32x32xf32>
    %128 = math.exp %127 : vector<32x32xf32>
    %129 = arith.mulf %124, %128 : vector<32x32xf32>
    %cst_67 = arith.constant 1.000000e+00 : f32
    %130 = vector.broadcast %cst_67 : f32 to vector<32x32xf32>
    %131 = arith.subf %130, %129 : vector<32x32xf32>
    %cst_68 = arith.constant 0.000000e+00 : f32
    %132 = vector.broadcast %cst_68 : f32 to vector<32x32xf32>
    %133 = arith.cmpf oge, %103, %132 : vector<32x32xf32>
    %cst_69 = arith.constant 0.000000e+00 : f32
    %134 = vector.broadcast %cst_69 : f32 to vector<32x32xf32>
    %135 = arith.subf %134, %131 : vector<32x32xf32>
    %136 = arith.select %133, %131, %135 : vector<32x32xi1>, vector<32x32xf32>
    %cst_70 = arith.constant 1.000000e+00 : f32
    %137 = vector.broadcast %cst_70 : f32 to vector<32x32xf32>
    %138 = arith.addf %137, %136 : vector<32x32xf32>
    %139 = arith.mulf %101, %138 : vector<32x32xf32>
    %cst_71 = arith.constant dense<0.000000e+00> : vector<32x32xf32>
    %140 = tpu.matmul %11, %139, %cst_71 {dimension_numbers = #tpu.dot_dimension_numbers<[1], [0], [0], [1], [0, 0, 1, 1], [], []>} : vector<32x32xf32>, vector<32x32xf32>, vector<32x32xf32> -> vector<32x32xf32>
    %141 = arith.addf %140, %19 : vector<32x32xf32>
    %142 = tpu.concatenate %96, %141 in 0 : vector<32x32xf32>, vector<32x32xf32> -> vector<64x32xf32>
    %143 = arith.addf %7, %142 : vector<64x32xf32>
    %cst_72 = arith.constant dense<0.000000e+00> : vector<64xf32>
    %144 = vector.multi_reduction <add>, %143, %cst_72 [1] : vector<64x32xf32> to vector<64xf32>
    %145 = vector.shape_cast %144 : vector<64xf32> to vector<64x1xf32>
    %cst_73 = arith.constant 3.200000e+01 : f32
    %146 = vector.broadcast %cst_73 : f32 to vector<64x1xf32>
    %147 = arith.divf %145, %146 : vector<64x1xf32>
    %148 = vector.broadcast %147 : vector<64x1xf32> to vector<64x32xf32>
    %149 = arith.subf %143, %148 : vector<64x32xf32>
    %150 = arith.mulf %149, %149 : vector<64x32xf32>
    %cst_74 = arith.constant dense<0.000000e+00> : vector<64xf32>
    %151 = vector.multi_reduction <add>, %150, %cst_74 [1] : vector<64x32xf32> to vector<64xf32>
    %152 = vector.shape_cast %151 : vector<64xf32> to vector<64x1xf32>
    %cst_75 = arith.constant 3.200000e+01 : f32
    %153 = vector.broadcast %cst_75 : f32 to vector<64x1xf32>
    %154 = arith.divf %152, %153 : vector<64x1xf32>
    %cst_76 = arith.constant 9.99999974E-6 : f32
    %155 = vector.broadcast %cst_76 : f32 to vector<64x1xf32>
    %156 = arith.addf %154, %155 : vector<64x1xf32>
    %157 = math.rsqrt %156 : vector<64x1xf32>
    %158 = vector.broadcast %157 : vector<64x1xf32> to vector<64x32xf32>
    %159 = arith.mulf %149, %158 : vector<64x32xf32>
    %160 = vector.broadcast %25 : vector<1x32xf32> to vector<64x32xf32>
    %161 = arith.mulf %159, %160 : vector<64x32xf32>
    %162 = vector.broadcast %27 : vector<1x32xf32> to vector<64x32xf32>
    %163 = arith.addf %161, %162 : vector<64x32xf32>
    %cst_77 = arith.constant dense<0.000000e+00> : vector<64x32xf32>
    %164 = tpu.matmul %163, %13, %cst_77 {dimension_numbers = #tpu.dot_dimension_numbers<[1], [0], [0], [1], [0, 0, 1, 1], [], []>} : vector<64x32xf32>, vector<32x32xf32>, vector<64x32xf32> -> vector<64x32xf32>
    %165 = vector.broadcast %29 : vector<1x32xf32> to vector<64x32xf32>
    %166 = arith.addf %164, %165 : vector<64x32xf32>
    %cst_78 = arith.constant 5.000000e-01 : f32
    %167 = vector.broadcast %cst_78 : f32 to vector<64x32xf32>
    %168 = arith.mulf %167, %166 : vector<64x32xf32>
    %cst_79 = arith.constant 0.707106769 : f32
    %169 = vector.broadcast %cst_79 : f32 to vector<64x32xf32>
    %170 = arith.mulf %166, %169 : vector<64x32xf32>
    %171 = math.absf %170 : vector<64x32xf32>
    %cst_80 = arith.constant 0.327591091 : f32
    %172 = vector.broadcast %cst_80 : f32 to vector<64x32xf32>
    %173 = arith.mulf %172, %171 : vector<64x32xf32>
    %cst_81 = arith.constant 1.000000e+00 : f32
    %174 = vector.broadcast %cst_81 : f32 to vector<64x32xf32>
    %175 = arith.addf %174, %173 : vector<64x32xf32>
    %cst_82 = arith.constant 1.000000e+00 : f32
    %176 = vector.broadcast %cst_82 : f32 to vector<64x32xf32>
    %177 = arith.divf %176, %175 : vector<64x32xf32>
    %cst_83 = arith.constant 1.06140542 : f32
    %178 = vector.broadcast %cst_83 : f32 to vector<64x32xf32>
    %179 = arith.mulf %178, %177 : vector<64x32xf32>
    %cst_84 = arith.constant -1.45315206 : f32
    %180 = vector.broadcast %cst_84 : f32 to vector<64x32xf32>
    %181 = arith.addf %179, %180 : vector<64x32xf32>
    %182 = arith.mulf %181, %177 : vector<64x32xf32>
    %cst_85 = arith.constant 1.42141378 : f32
    %183 = vector.broadcast %cst_85 : f32 to vector<64x32xf32>
    %184 = arith.addf %182, %183 : vector<64x32xf32>
    %185 = arith.mulf %184, %177 : vector<64x32xf32>
    %cst_86 = arith.constant -0.284496725 : f32
    %186 = vector.broadcast %cst_86 : f32 to vector<64x32xf32>
    %187 = arith.addf %185, %186 : vector<64x32xf32>
    %188 = arith.mulf %187, %177 : vector<64x32xf32>
    %cst_87 = arith.constant 0.254829586 : f32
    %189 = vector.broadcast %cst_87 : f32 to vector<64x32xf32>
    %190 = arith.addf %188, %189 : vector<64x32xf32>
    %191 = arith.mulf %190, %177 : vector<64x32xf32>
    %cst_88 = arith.constant 0.000000e+00 : f32
    %192 = vector.broadcast %cst_88 : f32 to vector<64x32xf32>
    %193 = arith.subf %192, %171 : vector<64x32xf32>
    %194 = arith.mulf %193, %171 : vector<64x32xf32>
    %195 = math.exp %194 : vector<64x32xf32>
    %196 = arith.mulf %191, %195 : vector<64x32xf32>
    %cst_89 = arith.constant 1.000000e+00 : f32
    %197 = vector.broadcast %cst_89 : f32 to vector<64x32xf32>
    %198 = arith.subf %197, %196 : vector<64x32xf32>
    %cst_90 = arith.constant 0.000000e+00 : f32
    %199 = vector.broadcast %cst_90 : f32 to vector<64x32xf32>
    %200 = arith.cmpf oge, %170, %199 : vector<64x32xf32>
    %cst_91 = arith.constant 0.000000e+00 : f32
    %201 = vector.broadcast %cst_91 : f32 to vector<64x32xf32>
    %202 = arith.subf %201, %198 : vector<64x32xf32>
    %203 = arith.select %200, %198, %202 : vector<64x32xi1>, vector<64x32xf32>
    %cst_92 = arith.constant 1.000000e+00 : f32
    %204 = vector.broadcast %cst_92 : f32 to vector<64x32xf32>
    %205 = arith.addf %204, %203 : vector<64x32xf32>
    %206 = arith.mulf %168, %205 : vector<64x32xf32>
    %cst_93 = arith.constant dense<0.000000e+00> : vector<64x32xf32>
    %207 = tpu.matmul %206, %15, %cst_93 {dimension_numbers = #tpu.dot_dimension_numbers<[1], [0], [0], [1], [0, 0, 1, 1], [], []>} : vector<64x32xf32>, vector<32x32xf32>, vector<64x32xf32> -> vector<64x32xf32>
    %208 = arith.addf %143, %207 : vector<64x32xf32>
    %209 = vector.broadcast %31 : vector<1x32xf32> to vector<64x32xf32>
    %210 = arith.addf %208, %209 : vector<64x32xf32>
    %c1_94 = arith.constant 1 : index
    %c0_95 = arith.constant 0 : index
    %c0_96 = arith.constant 0 : index
    %211 = vector.load %arg2[%c1_94, %c0_95, %c0_96] : memref<2x192x32xf32, #tpu.memory_space<vmem>>, vector<1x32x32xf32>
    %212 = vector.shape_cast %211 : vector<1x32x32xf32> to vector<32x32xf32>
    %c1_97 = arith.constant 1 : index
    %c32_98 = arith.constant 32 : index
    %c0_99 = arith.constant 0 : index
    %213 = vector.load %arg2[%c1_97, %c32_98, %c0_99] : memref<2x192x32xf32, #tpu.memory_space<vmem>>, vector<1x32x32xf32>
    %214 = vector.shape_cast %213 : vector<1x32x32xf32> to vector<32x32xf32>
    %c1_100 = arith.constant 1 : index
    %c64_101 = arith.constant 64 : index
    %c0_102 = arith.constant 0 : index
    %215 = vector.load %arg2[%c1_100, %c64_101, %c0_102] : memref<2x192x32xf32, #tpu.memory_space<vmem>>, vector<1x32x32xf32>
    %216 = vector.shape_cast %215 : vector<1x32x32xf32> to vector<32x32xf32>
    %c1_103 = arith.constant 1 : index
    %c96_104 = arith.constant 96 : index
    %c0_105 = arith.constant 0 : index
    %217 = vector.load %arg2[%c1_103, %c96_104, %c0_105] : memref<2x192x32xf32, #tpu.memory_space<vmem>>, vector<1x32x32xf32>
    %218 = vector.shape_cast %217 : vector<1x32x32xf32> to vector<32x32xf32>
    %c1_106 = arith.constant 1 : index
    %c128_107 = arith.constant 128 : index
    %c0_108 = arith.constant 0 : index
    %219 = vector.load %arg2[%c1_106, %c128_107, %c0_108] : memref<2x192x32xf32, #tpu.memory_space<vmem>>, vector<1x32x32xf32>
    %220 = vector.shape_cast %219 : vector<1x32x32xf32> to vector<32x32xf32>
    %c1_109 = arith.constant 1 : index
    %c160_110 = arith.constant 160 : index
    %c0_111 = arith.constant 0 : index
    %221 = vector.load %arg2[%c1_109, %c160_110, %c0_111] : memref<2x192x32xf32, #tpu.memory_space<vmem>>, vector<1x32x32xf32>
    %222 = vector.shape_cast %221 : vector<1x32x32xf32> to vector<32x32xf32>
    %c1_112 = arith.constant 1 : index
    %c0_113 = arith.constant 0 : index
    %c0_114 = arith.constant 0 : index
    %223 = vector.load %arg3[%c1_112, %c0_113, %c0_114] : memref<2x8x32xf32, #tpu.memory_space<vmem>>, vector<1x1x32xf32>
    %224 = vector.shape_cast %223 : vector<1x1x32xf32> to vector<1x32xf32>
    %c1_115 = arith.constant 1 : index
    %c1_116 = arith.constant 1 : index
    %c0_117 = arith.constant 0 : index
    %225 = vector.load %arg3[%c1_115, %c1_116, %c0_117] : memref<2x8x32xf32, #tpu.memory_space<vmem>>, vector<1x1x32xf32>
    %226 = vector.shape_cast %225 : vector<1x1x32xf32> to vector<1x32xf32>
    %c1_118 = arith.constant 1 : index
    %c2_119 = arith.constant 2 : index
    %c0_120 = arith.constant 0 : index
    %227 = vector.load %arg3[%c1_118, %c2_119, %c0_120] : memref<2x8x32xf32, #tpu.memory_space<vmem>>, vector<1x1x32xf32>
    %228 = vector.shape_cast %227 : vector<1x1x32xf32> to vector<1x32xf32>
    %c1_121 = arith.constant 1 : index
    %c3_122 = arith.constant 3 : index
    %c0_123 = arith.constant 0 : index
    %229 = vector.load %arg3[%c1_121, %c3_122, %c0_123] : memref<2x8x32xf32, #tpu.memory_space<vmem>>, vector<1x1x32xf32>
    %230 = vector.shape_cast %229 : vector<1x1x32xf32> to vector<1x32xf32>
    %c1_124 = arith.constant 1 : index
    %c4_125 = arith.constant 4 : index
    %c0_126 = arith.constant 0 : index
    %231 = vector.load %arg3[%c1_124, %c4_125, %c0_126] : memref<2x8x32xf32, #tpu.memory_space<vmem>>, vector<1x1x32xf32>
    %232 = vector.shape_cast %231 : vector<1x1x32xf32> to vector<1x32xf32>
    %c1_127 = arith.constant 1 : index
    %c5_128 = arith.constant 5 : index
    %c0_129 = arith.constant 0 : index
    %233 = vector.load %arg3[%c1_127, %c5_128, %c0_129] : memref<2x8x32xf32, #tpu.memory_space<vmem>>, vector<1x1x32xf32>
    %234 = vector.shape_cast %233 : vector<1x1x32xf32> to vector<1x32xf32>
    %cst_130 = arith.constant dense<0.000000e+00> : vector<64xf32>
    %235 = vector.multi_reduction <add>, %210, %cst_130 [1] : vector<64x32xf32> to vector<64xf32>
    %236 = vector.shape_cast %235 : vector<64xf32> to vector<64x1xf32>
    %cst_131 = arith.constant 3.200000e+01 : f32
    %237 = vector.broadcast %cst_131 : f32 to vector<64x1xf32>
    %238 = arith.divf %236, %237 : vector<64x1xf32>
    %239 = vector.broadcast %238 : vector<64x1xf32> to vector<64x32xf32>
    %240 = arith.subf %210, %239 : vector<64x32xf32>
    %241 = arith.mulf %240, %240 : vector<64x32xf32>
    %cst_132 = arith.constant dense<0.000000e+00> : vector<64xf32>
    %242 = vector.multi_reduction <add>, %241, %cst_132 [1] : vector<64x32xf32> to vector<64xf32>
    %243 = vector.shape_cast %242 : vector<64xf32> to vector<64x1xf32>
    %cst_133 = arith.constant 3.200000e+01 : f32
    %244 = vector.broadcast %cst_133 : f32 to vector<64x1xf32>
    %245 = arith.divf %243, %244 : vector<64x1xf32>
    %cst_134 = arith.constant 9.99999974E-6 : f32
    %246 = vector.broadcast %cst_134 : f32 to vector<64x1xf32>
    %247 = arith.addf %245, %246 : vector<64x1xf32>
    %248 = math.rsqrt %247 : vector<64x1xf32>
    %249 = vector.broadcast %248 : vector<64x1xf32> to vector<64x32xf32>
    %250 = arith.mulf %240, %249 : vector<64x32xf32>
    %251 = vector.broadcast %224 : vector<1x32xf32> to vector<64x32xf32>
    %252 = arith.mulf %250, %251 : vector<64x32xf32>
    %253 = vector.broadcast %226 : vector<1x32xf32> to vector<64x32xf32>
    %254 = arith.addf %252, %253 : vector<64x32xf32>
    %255 = vector.extract_strided_slice %254 {offsets = [0, 0], sizes = [32, 32], strides = [1, 1]} : vector<64x32xf32> to vector<32x32xf32>
    %cst_135 = arith.constant dense<0.000000e+00> : vector<32x32xf32>
    %256 = tpu.matmul %212, %255, %cst_135 {dimension_numbers = #tpu.dot_dimension_numbers<[1], [0], [0], [1], [0, 0, 1, 1], [], []>} : vector<32x32xf32>, vector<32x32xf32>, vector<32x32xf32> -> vector<32x32xf32>
    %257 = arith.addf %256, %220 : vector<32x32xf32>
    %cst_136 = arith.constant 5.000000e-01 : f32
    %258 = vector.broadcast %cst_136 : f32 to vector<32x32xf32>
    %259 = arith.mulf %258, %257 : vector<32x32xf32>
    %cst_137 = arith.constant 0.707106769 : f32
    %260 = vector.broadcast %cst_137 : f32 to vector<32x32xf32>
    %261 = arith.mulf %257, %260 : vector<32x32xf32>
    %262 = math.absf %261 : vector<32x32xf32>
    %cst_138 = arith.constant 0.327591091 : f32
    %263 = vector.broadcast %cst_138 : f32 to vector<32x32xf32>
    %264 = arith.mulf %263, %262 : vector<32x32xf32>
    %cst_139 = arith.constant 1.000000e+00 : f32
    %265 = vector.broadcast %cst_139 : f32 to vector<32x32xf32>
    %266 = arith.addf %265, %264 : vector<32x32xf32>
    %cst_140 = arith.constant 1.000000e+00 : f32
    %267 = vector.broadcast %cst_140 : f32 to vector<32x32xf32>
    %268 = arith.divf %267, %266 : vector<32x32xf32>
    %cst_141 = arith.constant 1.06140542 : f32
    %269 = vector.broadcast %cst_141 : f32 to vector<32x32xf32>
    %270 = arith.mulf %269, %268 : vector<32x32xf32>
    %cst_142 = arith.constant -1.45315206 : f32
    %271 = vector.broadcast %cst_142 : f32 to vector<32x32xf32>
    %272 = arith.addf %270, %271 : vector<32x32xf32>
    %273 = arith.mulf %272, %268 : vector<32x32xf32>
    %cst_143 = arith.constant 1.42141378 : f32
    %274 = vector.broadcast %cst_143 : f32 to vector<32x32xf32>
    %275 = arith.addf %273, %274 : vector<32x32xf32>
    %276 = arith.mulf %275, %268 : vector<32x32xf32>
    %cst_144 = arith.constant -0.284496725 : f32
    %277 = vector.broadcast %cst_144 : f32 to vector<32x32xf32>
    %278 = arith.addf %276, %277 : vector<32x32xf32>
    %279 = arith.mulf %278, %268 : vector<32x32xf32>
    %cst_145 = arith.constant 0.254829586 : f32
    %280 = vector.broadcast %cst_145 : f32 to vector<32x32xf32>
    %281 = arith.addf %279, %280 : vector<32x32xf32>
    %282 = arith.mulf %281, %268 : vector<32x32xf32>
    %cst_146 = arith.constant 0.000000e+00 : f32
    %283 = vector.broadcast %cst_146 : f32 to vector<32x32xf32>
    %284 = arith.subf %283, %262 : vector<32x32xf32>
    %285 = arith.mulf %284, %262 : vector<32x32xf32>
    %286 = math.exp %285 : vector<32x32xf32>
    %287 = arith.mulf %282, %286 : vector<32x32xf32>
    %cst_147 = arith.constant 1.000000e+00 : f32
    %288 = vector.broadcast %cst_147 : f32 to vector<32x32xf32>
    %289 = arith.subf %288, %287 : vector<32x32xf32>
    %cst_148 = arith.constant 0.000000e+00 : f32
    %290 = vector.broadcast %cst_148 : f32 to vector<32x32xf32>
    %291 = arith.cmpf oge, %261, %290 : vector<32x32xf32>
    %cst_149 = arith.constant 0.000000e+00 : f32
    %292 = vector.broadcast %cst_149 : f32 to vector<32x32xf32>
    %293 = arith.subf %292, %289 : vector<32x32xf32>
    %294 = arith.select %291, %289, %293 : vector<32x32xi1>, vector<32x32xf32>
    %cst_150 = arith.constant 1.000000e+00 : f32
    %295 = vector.broadcast %cst_150 : f32 to vector<32x32xf32>
    %296 = arith.addf %295, %294 : vector<32x32xf32>
    %297 = arith.mulf %259, %296 : vector<32x32xf32>
    %cst_151 = arith.constant dense<0.000000e+00> : vector<32x32xf32>
    %298 = tpu.matmul %214, %297, %cst_151 {dimension_numbers = #tpu.dot_dimension_numbers<[1], [0], [0], [1], [0, 0, 1, 1], [], []>} : vector<32x32xf32>, vector<32x32xf32>, vector<32x32xf32> -> vector<32x32xf32>
    %299 = arith.addf %298, %222 : vector<32x32xf32>
    %300 = vector.extract_strided_slice %254 {offsets = [32, 0], sizes = [32, 32], strides = [1, 1]} : vector<64x32xf32> to vector<32x32xf32>
    %cst_152 = arith.constant dense<0.000000e+00> : vector<32x32xf32>
    %301 = tpu.matmul %212, %300, %cst_152 {dimension_numbers = #tpu.dot_dimension_numbers<[1], [0], [0], [1], [0, 0, 1, 1], [], []>} : vector<32x32xf32>, vector<32x32xf32>, vector<32x32xf32> -> vector<32x32xf32>
    %302 = arith.addf %301, %220 : vector<32x32xf32>
    %cst_153 = arith.constant 5.000000e-01 : f32
    %303 = vector.broadcast %cst_153 : f32 to vector<32x32xf32>
    %304 = arith.mulf %303, %302 : vector<32x32xf32>
    %cst_154 = arith.constant 0.707106769 : f32
    %305 = vector.broadcast %cst_154 : f32 to vector<32x32xf32>
    %306 = arith.mulf %302, %305 : vector<32x32xf32>
    %307 = math.absf %306 : vector<32x32xf32>
    %cst_155 = arith.constant 0.327591091 : f32
    %308 = vector.broadcast %cst_155 : f32 to vector<32x32xf32>
    %309 = arith.mulf %308, %307 : vector<32x32xf32>
    %cst_156 = arith.constant 1.000000e+00 : f32
    %310 = vector.broadcast %cst_156 : f32 to vector<32x32xf32>
    %311 = arith.addf %310, %309 : vector<32x32xf32>
    %cst_157 = arith.constant 1.000000e+00 : f32
    %312 = vector.broadcast %cst_157 : f32 to vector<32x32xf32>
    %313 = arith.divf %312, %311 : vector<32x32xf32>
    %cst_158 = arith.constant 1.06140542 : f32
    %314 = vector.broadcast %cst_158 : f32 to vector<32x32xf32>
    %315 = arith.mulf %314, %313 : vector<32x32xf32>
    %cst_159 = arith.constant -1.45315206 : f32
    %316 = vector.broadcast %cst_159 : f32 to vector<32x32xf32>
    %317 = arith.addf %315, %316 : vector<32x32xf32>
    %318 = arith.mulf %317, %313 : vector<32x32xf32>
    %cst_160 = arith.constant 1.42141378 : f32
    %319 = vector.broadcast %cst_160 : f32 to vector<32x32xf32>
    %320 = arith.addf %318, %319 : vector<32x32xf32>
    %321 = arith.mulf %320, %313 : vector<32x32xf32>
    %cst_161 = arith.constant -0.284496725 : f32
    %322 = vector.broadcast %cst_161 : f32 to vector<32x32xf32>
    %323 = arith.addf %321, %322 : vector<32x32xf32>
    %324 = arith.mulf %323, %313 : vector<32x32xf32>
    %cst_162 = arith.constant 0.254829586 : f32
    %325 = vector.broadcast %cst_162 : f32 to vector<32x32xf32>
    %326 = arith.addf %324, %325 : vector<32x32xf32>
    %327 = arith.mulf %326, %313 : vector<32x32xf32>
    %cst_163 = arith.constant 0.000000e+00 : f32
    %328 = vector.broadcast %cst_163 : f32 to vector<32x32xf32>
    %329 = arith.subf %328, %307 : vector<32x32xf32>
    %330 = arith.mulf %329, %307 : vector<32x32xf32>
    %331 = math.exp %330 : vector<32x32xf32>
    %332 = arith.mulf %327, %331 : vector<32x32xf32>
    %cst_164 = arith.constant 1.000000e+00 : f32
    %333 = vector.broadcast %cst_164 : f32 to vector<32x32xf32>
    %334 = arith.subf %333, %332 : vector<32x32xf32>
    %cst_165 = arith.constant 0.000000e+00 : f32
    %335 = vector.broadcast %cst_165 : f32 to vector<32x32xf32>
    %336 = arith.cmpf oge, %306, %335 : vector<32x32xf32>
    %cst_166 = arith.constant 0.000000e+00 : f32
    %337 = vector.broadcast %cst_166 : f32 to vector<32x32xf32>
    %338 = arith.subf %337, %334 : vector<32x32xf32>
    %339 = arith.select %336, %334, %338 : vector<32x32xi1>, vector<32x32xf32>
    %cst_167 = arith.constant 1.000000e+00 : f32
    %340 = vector.broadcast %cst_167 : f32 to vector<32x32xf32>
    %341 = arith.addf %340, %339 : vector<32x32xf32>
    %342 = arith.mulf %304, %341 : vector<32x32xf32>
    %cst_168 = arith.constant dense<0.000000e+00> : vector<32x32xf32>
    %343 = tpu.matmul %214, %342, %cst_168 {dimension_numbers = #tpu.dot_dimension_numbers<[1], [0], [0], [1], [0, 0, 1, 1], [], []>} : vector<32x32xf32>, vector<32x32xf32>, vector<32x32xf32> -> vector<32x32xf32>
    %344 = arith.addf %343, %222 : vector<32x32xf32>
    %345 = tpu.concatenate %299, %344 in 0 : vector<32x32xf32>, vector<32x32xf32> -> vector<64x32xf32>
    %346 = arith.addf %210, %345 : vector<64x32xf32>
    %cst_169 = arith.constant dense<0.000000e+00> : vector<64xf32>
    %347 = vector.multi_reduction <add>, %346, %cst_169 [1] : vector<64x32xf32> to vector<64xf32>
    %348 = vector.shape_cast %347 : vector<64xf32> to vector<64x1xf32>
    %cst_170 = arith.constant 3.200000e+01 : f32
    %349 = vector.broadcast %cst_170 : f32 to vector<64x1xf32>
    %350 = arith.divf %348, %349 : vector<64x1xf32>
    %351 = vector.broadcast %350 : vector<64x1xf32> to vector<64x32xf32>
    %352 = arith.subf %346, %351 : vector<64x32xf32>
    %353 = arith.mulf %352, %352 : vector<64x32xf32>
    %cst_171 = arith.constant dense<0.000000e+00> : vector<64xf32>
    %354 = vector.multi_reduction <add>, %353, %cst_171 [1] : vector<64x32xf32> to vector<64xf32>
    %355 = vector.shape_cast %354 : vector<64xf32> to vector<64x1xf32>
    %cst_172 = arith.constant 3.200000e+01 : f32
    %356 = vector.broadcast %cst_172 : f32 to vector<64x1xf32>
    %357 = arith.divf %355, %356 : vector<64x1xf32>
    %cst_173 = arith.constant 9.99999974E-6 : f32
    %358 = vector.broadcast %cst_173 : f32 to vector<64x1xf32>
    %359 = arith.addf %357, %358 : vector<64x1xf32>
    %360 = math.rsqrt %359 : vector<64x1xf32>
    %361 = vector.broadcast %360 : vector<64x1xf32> to vector<64x32xf32>
    %362 = arith.mulf %352, %361 : vector<64x32xf32>
    %363 = vector.broadcast %228 : vector<1x32xf32> to vector<64x32xf32>
    %364 = arith.mulf %362, %363 : vector<64x32xf32>
    %365 = vector.broadcast %230 : vector<1x32xf32> to vector<64x32xf32>
    %366 = arith.addf %364, %365 : vector<64x32xf32>
    %cst_174 = arith.constant dense<0.000000e+00> : vector<64x32xf32>
    %367 = tpu.matmul %366, %216, %cst_174 {dimension_numbers = #tpu.dot_dimension_numbers<[1], [0], [0], [1], [0, 0, 1, 1], [], []>} : vector<64x32xf32>, vector<32x32xf32>, vector<64x32xf32> -> vector<64x32xf32>
    %368 = vector.broadcast %232 : vector<1x32xf32> to vector<64x32xf32>
    %369 = arith.addf %367, %368 : vector<64x32xf32>
    %cst_175 = arith.constant 5.000000e-01 : f32
    %370 = vector.broadcast %cst_175 : f32 to vector<64x32xf32>
    %371 = arith.mulf %370, %369 : vector<64x32xf32>
    %cst_176 = arith.constant 0.707106769 : f32
    %372 = vector.broadcast %cst_176 : f32 to vector<64x32xf32>
    %373 = arith.mulf %369, %372 : vector<64x32xf32>
    %374 = math.absf %373 : vector<64x32xf32>
    %cst_177 = arith.constant 0.327591091 : f32
    %375 = vector.broadcast %cst_177 : f32 to vector<64x32xf32>
    %376 = arith.mulf %375, %374 : vector<64x32xf32>
    %cst_178 = arith.constant 1.000000e+00 : f32
    %377 = vector.broadcast %cst_178 : f32 to vector<64x32xf32>
    %378 = arith.addf %377, %376 : vector<64x32xf32>
    %cst_179 = arith.constant 1.000000e+00 : f32
    %379 = vector.broadcast %cst_179 : f32 to vector<64x32xf32>
    %380 = arith.divf %379, %378 : vector<64x32xf32>
    %cst_180 = arith.constant 1.06140542 : f32
    %381 = vector.broadcast %cst_180 : f32 to vector<64x32xf32>
    %382 = arith.mulf %381, %380 : vector<64x32xf32>
    %cst_181 = arith.constant -1.45315206 : f32
    %383 = vector.broadcast %cst_181 : f32 to vector<64x32xf32>
    %384 = arith.addf %382, %383 : vector<64x32xf32>
    %385 = arith.mulf %384, %380 : vector<64x32xf32>
    %cst_182 = arith.constant 1.42141378 : f32
    %386 = vector.broadcast %cst_182 : f32 to vector<64x32xf32>
    %387 = arith.addf %385, %386 : vector<64x32xf32>
    %388 = arith.mulf %387, %380 : vector<64x32xf32>
    %cst_183 = arith.constant -0.284496725 : f32
    %389 = vector.broadcast %cst_183 : f32 to vector<64x32xf32>
    %390 = arith.addf %388, %389 : vector<64x32xf32>
    %391 = arith.mulf %390, %380 : vector<64x32xf32>
    %cst_184 = arith.constant 0.254829586 : f32
    %392 = vector.broadcast %cst_184 : f32 to vector<64x32xf32>
    %393 = arith.addf %391, %392 : vector<64x32xf32>
    %394 = arith.mulf %393, %380 : vector<64x32xf32>
    %cst_185 = arith.constant 0.000000e+00 : f32
    %395 = vector.broadcast %cst_185 : f32 to vector<64x32xf32>
    %396 = arith.subf %395, %374 : vector<64x32xf32>
    %397 = arith.mulf %396, %374 : vector<64x32xf32>
    %398 = math.exp %397 : vector<64x32xf32>
    %399 = arith.mulf %394, %398 : vector<64x32xf32>
    %cst_186 = arith.constant 1.000000e+00 : f32
    %400 = vector.broadcast %cst_186 : f32 to vector<64x32xf32>
    %401 = arith.subf %400, %399 : vector<64x32xf32>
    %cst_187 = arith.constant 0.000000e+00 : f32
    %402 = vector.broadcast %cst_187 : f32 to vector<64x32xf32>
    %403 = arith.cmpf oge, %373, %402 : vector<64x32xf32>
    %cst_188 = arith.constant 0.000000e+00 : f32
    %404 = vector.broadcast %cst_188 : f32 to vector<64x32xf32>
    %405 = arith.subf %404, %401 : vector<64x32xf32>
    %406 = arith.select %403, %401, %405 : vector<64x32xi1>, vector<64x32xf32>
    %cst_189 = arith.constant 1.000000e+00 : f32
    %407 = vector.broadcast %cst_189 : f32 to vector<64x32xf32>
    %408 = arith.addf %407, %406 : vector<64x32xf32>
    %409 = arith.mulf %371, %408 : vector<64x32xf32>
    %cst_190 = arith.constant dense<0.000000e+00> : vector<64x32xf32>
    %410 = tpu.matmul %409, %218, %cst_190 {dimension_numbers = #tpu.dot_dimension_numbers<[1], [0], [0], [1], [0, 0, 1, 1], [], []>} : vector<64x32xf32>, vector<32x32xf32>, vector<64x32xf32> -> vector<64x32xf32>
    %411 = arith.addf %346, %410 : vector<64x32xf32>
    %412 = vector.broadcast %234 : vector<1x32xf32> to vector<64x32xf32>
    %413 = arith.addf %411, %412 : vector<64x32xf32>
    %cst_191 = arith.constant dense<0.000000e+00> : vector<64xf32>
    %414 = vector.multi_reduction <add>, %413, %cst_191 [1] : vector<64x32xf32> to vector<64xf32>
    %415 = vector.shape_cast %414 : vector<64xf32> to vector<64x1xf32>
    %cst_192 = arith.constant 3.200000e+01 : f32
    %416 = vector.broadcast %cst_192 : f32 to vector<64x1xf32>
    %417 = arith.divf %415, %416 : vector<64x1xf32>
    %418 = vector.broadcast %417 : vector<64x1xf32> to vector<64x32xf32>
    %419 = arith.subf %413, %418 : vector<64x32xf32>
    %420 = arith.mulf %419, %419 : vector<64x32xf32>
    %cst_193 = arith.constant dense<0.000000e+00> : vector<64xf32>
    %421 = vector.multi_reduction <add>, %420, %cst_193 [1] : vector<64x32xf32> to vector<64xf32>
    %422 = vector.shape_cast %421 : vector<64xf32> to vector<64x1xf32>
    %cst_194 = arith.constant 3.200000e+01 : f32
    %423 = vector.broadcast %cst_194 : f32 to vector<64x1xf32>
    %424 = arith.divf %422, %423 : vector<64x1xf32>
    %cst_195 = arith.constant 9.99999974E-6 : f32
    %425 = vector.broadcast %cst_195 : f32 to vector<64x1xf32>
    %426 = arith.addf %424, %425 : vector<64x1xf32>
    %427 = math.rsqrt %426 : vector<64x1xf32>
    %428 = vector.broadcast %427 : vector<64x1xf32> to vector<64x32xf32>
    %429 = arith.mulf %419, %428 : vector<64x32xf32>
    %430 = vector.broadcast %2 : vector<1x32xf32> to vector<64x32xf32>
    %431 = arith.mulf %429, %430 : vector<64x32xf32>
    %432 = vector.broadcast %3 : vector<1x32xf32> to vector<64x32xf32>
    %433 = arith.addf %431, %432 : vector<64x32xf32>
    %434 = tpu.iota {dimensions = array<i32: 0>} : vector<2x64xi32>
    %435 = tpu.iota {dimensions = array<i32: 1>} : vector<2x64xi32>
    %c32_i32 = arith.constant 32 : i32
    %436 = vector.broadcast %c32_i32 : i32 to vector<2x64xi32>
    %437 = arith.muli %434, %436 : vector<2x64xi32>
    %438 = arith.cmpi sge, %435, %437 : vector<2x64xi32>
    %c32_i32_196 = arith.constant 32 : i32
    %439 = vector.broadcast %c32_i32_196 : i32 to vector<2x64xi32>
    %440 = arith.addi %437, %439 : vector<2x64xi32>
    %441 = arith.cmpi slt, %435, %440 : vector<2x64xi32>
    %442 = arith.andi %438, %441 : vector<2x64xi1>
    %cst_197 = arith.constant 3.125000e-02 : f32
    %cst_198 = arith.constant 0.000000e+00 : f32
    %443 = vector.broadcast %cst_197 : f32 to vector<2x64xf32>
    %444 = vector.broadcast %cst_198 : f32 to vector<2x64xf32>
    %445 = arith.select %442, %443, %444 : vector<2x64xi1>, vector<2x64xf32>
    %cst_199 = arith.constant dense<0.000000e+00> : vector<2x32xf32>
    %446 = tpu.matmul %445, %433, %cst_199 {dimension_numbers = #tpu.dot_dimension_numbers<[1], [0], [0], [1], [0, 0, 1, 1], [], []>} : vector<2x64xf32>, vector<64x32xf32>, vector<2x32xf32> -> vector<2x32xf32>
    %c0_200 = arith.constant 0 : index
    %c0_201 = arith.constant 0 : index
    %447 = vector.load %arg4[%c0_200, %c0_201] : memref<40x128xf32, #tpu.memory_space<vmem>>, vector<32x128xf32>
    %c32_202 = arith.constant 32 : index
    %c0_203 = arith.constant 0 : index
    %448 = vector.load %arg4[%c32_202, %c0_203] : memref<40x128xf32, #tpu.memory_space<vmem>>, vector<1x128xf32>
    %cst_204 = arith.constant dense<0.000000e+00> : vector<2x128xf32>
    %449 = tpu.matmul %446, %447, %cst_204 {dimension_numbers = #tpu.dot_dimension_numbers<[1], [0], [0], [1], [0, 0, 1, 1], [], []>} : vector<2x32xf32>, vector<32x128xf32>, vector<2x128xf32> -> vector<2x128xf32>
    %450 = vector.broadcast %448 : vector<1x128xf32> to vector<2x128xf32>
    %451 = arith.addf %449, %450 : vector<2x128xf32>
    %c0_205 = arith.constant 0 : index
    %c0_206 = arith.constant 0 : index
    %452 = vector.load %arg5[%c0_205, %c0_206] : memref<2x128xf32, #tpu.memory_space<vmem>>, vector<2x128xf32>
    tpu.vector_store %arg5[%c0_205, %c0_206], %451 {strides = array<i32>} : memref<2x128xf32, #tpu.memory_space<vmem>>, vector<2x128xf32>,
    return
  }
}

</mosaic_0001>

<llo_original>
// kernel: tpu_custom_call.1
$region0: #{tpu_custom_call.1}
  #allocation0 [shape = 'u32[]', space=smem, size = 0x4, offset = 0x4, fixed_abs, tag = 'smem constant byte address 0x4 - core index']
  #allocation1 [shape = 'u32[72,128]{1,0:T(1,128)}', space=vmem, size = 0x9000, scoped, tag = 'internal scratch']
  %s0 = inlined_call_operand.vmem [shape: f32[64,128], index: 0, kind: input, shape index: {}]
  %s1 = inlined_call_operand.vmem [shape: f32[136,32], index: 1, kind: input, shape index: {}]
  %s2 = inlined_call_operand.vmem [shape: f32[2,192,32], index: 2, kind: input, shape index: {}]
  %s3 = inlined_call_operand.vmem [shape: f32[2,8,32], index: 3, kind: input, shape index: {}]
  %s4 = inlined_call_operand.vmem [shape: f32[40,128], index: 4, kind: input, shape index: {}]
  %s5 = inlined_call_operand.hbm [shape: f32[2,128], index: 5, kind: output, shape index: {}]
  %s6 = sld [smem:[#allocation0]]
  $region30: #{tpu_custom_call.1} parent=0
    _
  %s8 = ssub.s32 1, %s6
  %s9 = scalar_select 0, %s8, %s6
  $region1: #{tpu_custom_call.1} parent=0
    #allocation2 [shape = 'u8[1024]{0}', space=vmem, size = 0x400, scoped, tag = 'output window, operand 0, single buffered']
    #allocation3 [shape = 's32[1]{0}', space=sflag, size = 0x4, scoped, tag = 'scoped memory for tpu_custom_call.1']
    %10 = vsyncpa [#allocation3], 0
    // Predicated region
    $region2: #{tpu_custom_call.1} parent=1 // pred_check
      _
    $region3: #{tpu_custom_call.1} parent=1 // pred_check_branch
      %12 = sbr.rel (0) target = $region5
    $region4: #{tpu_custom_call.1} parent=1 // pred_region
      _
    $region5: #{tpu_custom_call.1} parent=1 // pred_fallthru
      _
    // Predicated region
    $region6: #{tpu_custom_call.1} parent=1 // pred_check
      _
    $region7: #{tpu_custom_call.1} parent=1 // pred_check_branch
      %14 = sbr.rel (0) target = $region9
    $region8: #{tpu_custom_call.1} parent=1 // pred_region
      _
    $region9: #{tpu_custom_call.1} parent=1 // pred_fallthru
      _
    // Predicated region
    $region10: #{tpu_custom_call.1} parent=1 // pred_check
      _
    $region11: #{tpu_custom_call.1} parent=1 // pred_check_branch
      %16 = sbr.rel (0) target = $region13
    $region12: #{tpu_custom_call.1} parent=1 // pred_region
      _
    $region13: #{tpu_custom_call.1} parent=1 // pred_fallthru
      _
    // Predicated region
    $region14: #{tpu_custom_call.1} parent=1 // pred_check
      _
    $region15: #{tpu_custom_call.1} parent=1 // pred_check_branch
      %18 = sbr.rel (0) target = $region17
    $region16: #{tpu_custom_call.1} parent=1 // pred_region
      _
    $region17: #{tpu_custom_call.1} parent=1 // pred_fallthru
      _
    // Predicated region
    $region18: #{tpu_custom_call.1} parent=1 // pred_check
      _
    $region19: #{tpu_custom_call.1} parent=1 // pred_check_branch
      %20 = sbr.rel (0) target = $region21
    $region20: #{tpu_custom_call.1} parent=1 // pred_region
      _
    $region21: #{tpu_custom_call.1} parent=1 // pred_fallthru
      _
    %v21 = vld [vmem:[%s1] sm:$0xff]
    %v22 = vld [vmem:[%s1 + $0x8] sm:$0xff]
    %v23 = vld [vmem:[%s1 + $0x10] sm:$0xff]
    %v24 = vld [vmem:[%s1 + $0x18] sm:$0xff]
    %v25 = vld [vmem:[%s1 + $0x20] sm:$0xff]
    %v26 = vld [vmem:[%s1 + $0x28] sm:$0xff]
    %v27 = vld [vmem:[%s1 + $0x30] sm:$0xff]
    %v28 = vld [vmem:[%s1 + $0x38] sm:$0xff]
    %v29 = vld [vmem:[%s1 + $0x40] sm:$0xff]
    %v30 = vld [vmem:[%s1 + $0x48] sm:$0xff]
    %v31 = vld [vmem:[%s1 + $0x50] sm:$0xff]
    %v32 = vld [vmem:[%s1 + $0x58] sm:$0xff]
    %v33 = vld [vmem:[%s1 + $0x60] sm:$0xff]
    %v34 = vld [vmem:[%s1 + $0x68] sm:$0xff]
    %v35 = vld [vmem:[%s1 + $0x70] sm:$0xff]
    %v36 = vld [vmem:[%s1 + $0x78] sm:$0xff]
    %v37 = vld [vmem:[%s1 + $0x80] sm:$0x1]
    %v38 = vld [vmem:[%s1 + $0x81] sm:$0x1]
    %v39 = vld [vmem:[%s1 + $0x82] sm:$0x1]
    %v40 = vld [vmem:[%s0] sm:$0xff]
    %v41 = vld [vmem:[%s0 + $0x8] sm:$0xff]
    %v42 = vld [vmem:[%s0 + $0x10] sm:$0xff]
    %v43 = vld [vmem:[%s0 + $0x18] sm:$0xff]
    %v44 = vld [vmem:[%s0 + $0x20] sm:$0xff]
    %v45 = vld [vmem:[%s0 + $0x28] sm:$0xff]
    %v46 = vld [vmem:[%s0 + $0x30] sm:$0xff]
    %v47 = vld [vmem:[%s0 + $0x38] sm:$0xff]
    %v48 = vperm.slane %v37, 0
    %49 = vmatpush.msra.mxu0 %v36
    %50 = vmatpush.msra.mxu0 %v35
    %51 = vmatpush.msra.mxu0 %v34
    %52 = vmatpush.msra.mxu0 %v33
    %53 = vmatpush.msra.mxu0 %v32
    %54 = vmatpush.msra.mxu0 %v31
    %55 = vmatpush.msra.mxu0 %v30
    %56 = vmatpush.msra.mxu0 %v29
    %57 = vmatpush.msra.mxu0 %v28
    %58 = vmatpush.msra.mxu0 %v27
    %59 = vmatpush.msra.mxu0 %v26
    %60 = vmatpush.msra.mxu0 %v25
    %61 = vmatpush.msra.mxu0 %v24
    %62 = vmatpush.msra.mxu0 %v23
    %63 = vmatpush.msra.mxu0 %v22
    %64 = vmatpush.msra.mxu0 %v21
    %65 = vmatmul.f32.gmra.mxu0 %v40
    %v66 = vpop.f32.mrf.mxu0
    %v67 = vadd.f32 %v48, %v66
    %68 = vmatmul.f32.gmra.mxu0 %v41
    %v69 = vpop.f32.mrf.mxu0
    %v70 = vadd.f32 %v48, %v69
    %71 = vmatmul.f32.gmra.mxu0 %v42
    %v72 = vpop.f32.mrf.mxu0
    %v73 = vadd.f32 %v48, %v72
    %74 = vmatmul.f32.gmra.mxu0 %v43
    %v75 = vpop.f32.mrf.mxu0
    %v76 = vadd.f32 %v48, %v75
    %77 = vmatmul.f32.gmra.mxu0 %v44
    %v78 = vpop.f32.mrf.mxu0
    %v79 = vadd.f32 %v48, %v78
    %80 = vmatmul.f32.gmra.mxu0 %v45
    %v81 = vpop.f32.mrf.mxu0
    %v82 = vadd.f32 %v48, %v81
    %83 = vmatmul.f32.gmra.mxu0 %v46
    %v84 = vpop.f32.mrf.mxu0
    %v85 = vadd.f32 %v48, %v84
    %86 = vmatmul.f32.gmra.mxu0 %v47
    %v87 = vpop.f32.mrf.mxu0
    %v88 = vadd.f32 %v48, %v87
    %89 = vdwg.mxu0
    %v90 = vld [vmem:[%s2] sm:$0xff]
    %v91 = vld [vmem:[%s2 + $0x8] sm:$0xff]
    %v92 = vld [vmem:[%s2 + $0x10] sm:$0xff]
    %v93 = vld [vmem:[%s2 + $0x18] sm:$0xff]
    %v94 = vld [vmem:[%s2 + $0x20] sm:$0xff]
    %v95 = vld [vmem:[%s2 + $0x28] sm:$0xff]
    %v96 = vld [vmem:[%s2 + $0x30] sm:$0xff]
    %v97 = vld [vmem:[%s2 + $0x38] sm:$0xff]
    %v98 = vld [vmem:[%s2 + $0x40] sm:$0xff]
    %v99 = vld [vmem:[%s2 + $0x48] sm:$0xff]
    %v100 = vld [vmem:[%s2 + $0x50] sm:$0xff]
    %v101 = vld [vmem:[%s2 + $0x58] sm:$0xff]
    %v102 = vld [vmem:[%s2 + $0x60] sm:$0xff]
    %v103 = vld [vmem:[%s2 + $0x68] sm:$0xff]
    %v104 = vld [vmem:[%s2 + $0x70] sm:$0xff]
    %v105 = vld [vmem:[%s2 + $0x78] sm:$0xff]
    %v106 = vld [vmem:[%s2 + $0x80] sm:$0xff]
    %v107 = vld [vmem:[%s2 + $0x88] sm:$0xff]
    %v108 = vld [vmem:[%s2 + $0x90] sm:$0xff]
    %v109 = vld [vmem:[%s2 + $0x98] sm:$0xff]
    %v110 = vld [vmem:[%s2 + $0xa0] sm:$0xff]
    %v111 = vld [vmem:[%s2 + $0xa8] sm:$0xff]
    %v112 = vld [vmem:[%s2 + $0xb0] sm:$0xff]
    %v113 = vld [vmem:[%s2 + $0xb8] sm:$0xff]
    %v114 = vld [vmem:[%s3] sm:$0x1]
    %v115 = vld [vmem:[%s3 + $0x1] sm:$0x1]
    %v116 = vld [vmem:[%s3 + $0x2] sm:$0x1]
    %v117 = vld [vmem:[%s3 + $0x3] sm:$0x1]
    %v118 = vld [vmem:[%s3 + $0x4] sm:$0x1]
    %v119 = vld [vmem:[%s3 + $0x5] sm:$0x1]
    %vm120 = vcmask 261120
    %v121 = vsel %vm120, %v67, 0.0
    %122 = vadd.xlane.f32.xlu0 %v121
    %v123 = vpop.xlane.xlu0 %122
    %v124 = vsel %vm120, %v70, 0.0
    %125 = vadd.xlane.f32.xlu0 %v124
    %v126 = vpop.xlane.xlu0 %125
    %v127 = vsel %vm120, %v73, 0.0
    %128 = vadd.xlane.f32.xlu0 %v127
    %v129 = vpop.xlane.xlu0 %128
    %v130 = vsel %vm120, %v76, 0.0
    %131 = vadd.xlane.f32.xlu0 %v130
    %v132 = vpop.xlane.xlu0 %131
    %v133 = vsel %vm120, %v79, 0.0
    %134 = vadd.xlane.f32.xlu0 %v133
    %v135 = vpop.xlane.xlu0 %134
    %v136 = vsel %vm120, %v82, 0.0
    %137 = vadd.xlane.f32.xlu0 %v136
    %v138 = vpop.xlane.xlu0 %137
    %v139 = vsel %vm120, %v85, 0.0
    %140 = vadd.xlane.f32.xlu0 %v139
    %v141 = vpop.xlane.xlu0 %140
    %v142 = vsel %vm120, %v88, 0.0
    %143 = vadd.xlane.f32.xlu0 %v142
    %v144 = vpop.xlane.xlu0 %143
    %v145 = vrcp.pop 32.0
    %v146 = vmul.f32 32.0, %v145
    %v147 = vsub.f32 1.0, %v146
    %v148 = vmul.f32 %v145, %v147
    %v149 = vadd.f32 %v145, %v148
    %vm150 = vweird.f32 %v145
    %v151 = vsel %vm150, %v145, %v149
    %v152 = vmul.f32 %v123, %v151
    %v153 = vmul.f32 %v126, %v151
    %v154 = vmul.f32 %v129, %v151
    %v155 = vmul.f32 %v132, %v151
    %v156 = vmul.f32 %v135, %v151
    %v157 = vmul.f32 %v138, %v151
    %v158 = vmul.f32 %v141, %v151
    %v159 = vmul.f32 %v144, %v151
    %v160 = vsub.f32 %v67, %v152
    %v161 = vsub.f32 %v70, %v153
    %v162 = vsub.f32 %v73, %v154
    %v163 = vsub.f32 %v76, %v155
    %v164 = vsub.f32 %v79, %v156
    %v165 = vsub.f32 %v82, %v157
    %v166 = vsub.f32 %v85, %v158
    %v167 = vsub.f32 %v88, %v159
    %v168 = vmul.f32 %v160, %v160
    %v169 = vmul.f32 %v161, %v161
    %v170 = vmul.f32 %v162, %v162
    %v171 = vmul.f32 %v163, %v163
    %v172 = vmul.f32 %v164, %v164
    %v173 = vmul.f32 %v165, %v165
    %v174 = vmul.f32 %v166, %v166
    %v175 = vmul.f32 %v167, %v167
    %v176 = vsel %vm120, %v168, 0.0
    %177 = vadd.xlane.f32.xlu0 %v176
    %v178 = vpop.xlane.xlu0 %177
    %v179 = vsel %vm120, %v169, 0.0
    %180 = vadd.xlane.f32.xlu0 %v179
    %v181 = vpop.xlane.xlu0 %180
    %v182 = vsel %vm120, %v170, 0.0
    %183 = vadd.xlane.f32.xlu0 %v182
    %v184 = vpop.xlane.xlu0 %183
    %v185 = vsel %vm120, %v171, 0.0
    %186 = vadd.xlane.f32.xlu0 %v185
    %v187 = vpop.xlane.xlu0 %186
    %v188 = vsel %vm120, %v172, 0.0
    %189 = vadd.xlane.f32.xlu0 %v188
    %v190 = vpop.xlane.xlu0 %189
    %v191 = vsel %vm120, %v173, 0.0
    %192 = vadd.xlane.f32.xlu0 %v191
    %v193 = vpop.xlane.xlu0 %192
    %v194 = vsel %vm120, %v174, 0.0
    %195 = vadd.xlane.f32.xlu0 %v194
    %v196 = vpop.xlane.xlu0 %195
    %v197 = vsel %vm120, %v175, 0.0
    %198 = vadd.xlane.f32.xlu0 %v197
    %v199 = vpop.xlane.xlu0 %198
    %v200 = vmul.f32 %v178, %v151
    %v201 = vmul.f32 %v181, %v151
    %v202 = vmul.f32 %v184, %v151
    %v203 = vmul.f32 %v187, %v151
    %v204 = vmul.f32 %v190, %v151
    %v205 = vmul.f32 %v193, %v151
    %v206 = vmul.f32 %v196, %v151
    %v207 = vmul.f32 %v199, %v151
    %v208 = vadd.f32 %v200, 1e-05
    %v209 = vadd.f32 %v201, 1e-05
    %v210 = vadd.f32 %v202, 1e-05
    %v211 = vadd.f32 %v203, 1e-05
    %v212 = vadd.f32 %v204, 1e-05
    %v213 = vadd.f32 %v205, 1e-05
    %v214 = vadd.f32 %v206, 1e-05
    %v215 = vadd.f32 %v207, 1e-05
    %v216 = vrsqrt.pop %v208
    %v217 = vmul.f32 %v216, %v208
    %v218 = vmul.f32 %v217, %v216
    %v219 = vmul.f32 0.5, %v218
    %v220 = vsub.f32 1.5, %v219
    %v221 = vmul.f32 %v216, %v220
    %vm222 = vweird.f32 %v208
    %vm223 = vweird.f32 %v216
    %vm224 = vmor %vm222, %vm223
    %v225 = vsel %vm224, %v216, %v221
    %v226 = vrsqrt.pop %v209
    %v227 = vmul.f32 %v226, %v209
    %v228 = vmul.f32 %v227, %v226
    %v229 = vmul.f32 0.5, %v228
    %v230 = vsub.f32 1.5, %v229
    %v231 = vmul.f32 %v226, %v230
    %vm232 = vweird.f32 %v209
    %vm233 = vweird.f32 %v226
    %vm234 = vmor %vm232, %vm233
    %v235 = vsel %vm234, %v226, %v231
    %v236 = vrsqrt.pop %v210
    %v237 = vmul.f32 %v236, %v210
    %v238 = vmul.f32 %v237, %v236
    %v239 = vmul.f32 0.5, %v238
    %v240 = vsub.f32 1.5, %v239
    %v241 = vmul.f32 %v236, %v240
    %vm242 = vweird.f32 %v210
    %vm243 = vweird.f32 %v236
    %vm244 = vmor %vm242, %vm243
    %v245 = vsel %vm244, %v236, %v241
    %v246 = vrsqrt.pop %v211
    %v247 = vmul.f32 %v246, %v211
    %v248 = vmul.f32 %v247, %v246
    %v249 = vmul.f32 0.5, %v248
    %v250 = vsub.f32 1.5, %v249
    %v251 = vmul.f32 %v246, %v250
    %vm252 = vweird.f32 %v211
    %vm253 = vweird.f32 %v246
    %vm254 = vmor %vm252, %vm253
    %v255 = vsel %vm254, %v246, %v251
    %v256 = vrsqrt.pop %v212
    %v257 = vmul.f32 %v256, %v212
    %v258 = vmul.f32 %v257, %v256
    %v259 = vmul.f32 0.5, %v258
    %v260 = vsub.f32 1.5, %v259
    %v261 = vmul.f32 %v256, %v260
    %vm262 = vweird.f32 %v212
    %vm263 = vweird.f32 %v256
    %vm264 = vmor %vm262, %vm263
    %v265 = vsel %vm264, %v256, %v261
    %v266 = vrsqrt.pop %v213
    %v267 = vmul.f32 %v266, %v213
    %v268 = vmul.f32 %v267, %v266
    %v269 = vmul.f32 0.5, %v268
    %v270 = vsub.f32 1.5, %v269
    %v271 = vmul.f32 %v266, %v270
    %vm272 = vweird.f32 %v213
    %vm273 = vweird.f32 %v266
    %vm274 = vmor %vm272, %vm273
    %v275 = vsel %vm274, %v266, %v271
    %v276 = vrsqrt.pop %v214
    %v277 = vmul.f32 %v276, %v214
    %v278 = vmul.f32 %v277, %v276
    %v279 = vmul.f32 0.5, %v278
    %v280 = vsub.f32 1.5, %v279
    %v281 = vmul.f32 %v276, %v280
    %vm282 = vweird.f32 %v214
    %vm283 = vweird.f32 %v276
    %vm284 = vmor %vm282, %vm283
    %v285 = vsel %vm284, %v276, %v281
    %v286 = vrsqrt.pop %v215
    %v287 = vmul.f32 %v286, %v215
    %v288 = vmul.f32 %v287, %v286
    %v289 = vmul.f32 0.5, %v288
    %v290 = vsub.f32 1.5, %v289
    %v291 = vmul.f32 %v286, %v290
    %vm292 = vweird.f32 %v215
    %vm293 = vweird.f32 %v286
    %vm294 = vmor %vm292, %vm293
    %v295 = vsel %vm294, %v286, %v291
    %v296 = vmul.f32 %v160, %v225
    %v297 = vmul.f32 %v161, %v235
    %v298 = vmul.f32 %v162, %v245
    %v299 = vmul.f32 %v163, %v255
    %v300 = vmul.f32 %v164, %v265
    %v301 = vmul.f32 %v165, %v275
    %v302 = vmul.f32 %v166, %v285
    %v303 = vmul.f32 %v167, %v295
    %v304 = vperm.slane %v114, 0
    %v305 = vmul.f32 %v296, %v304
    %v306 = vmul.f32 %v297, %v304
    %v307 = vmul.f32 %v298, %v304
    %v308 = vmul.f32 %v299, %v304
    %v309 = vmul.f32 %v300, %v304
    %v310 = vmul.f32 %v301, %v304
    %v311 = vmul.f32 %v302, %v304
    %v312 = vmul.f32 %v303, %v304
    %v313 = vperm.slane %v115, 0
    %v314 = vadd.f32 %v305, %v313
    %v315 = vadd.f32 %v306, %v313
    %v316 = vadd.f32 %v307, %v313
    %v317 = vadd.f32 %v308, %v313
    %v318 = vadd.f32 %v309, %v313
    %v319 = vadd.f32 %v310, %v313
    %v320 = vadd.f32 %v311, %v313
    %v321 = vadd.f32 %v312, %v313
    %v323 = vsel %vm120, %v90, 0
    %v326 = vsel %vm120, %v91, 0
    %v329 = vsel %vm120, %v92, 0
    %v332 = vsel %vm120, %v93, 0
    %334 = vmatpush.msra.mxu0 0.0
    %335 = vmatpush.msra.mxu0 0.0
    %336 = vmatpush.msra.mxu0 0.0
    %337 = vmatpush.msra.mxu0 0.0
    %338 = vmatpush.msra.mxu0 0.0
    %339 = vmatpush.msra.mxu0 0.0
    %340 = vmatpush.msra.mxu0 0.0
    %341 = vmatpush.msra.mxu0 0.0
    %342 = vmatpush.msra.mxu0 0.0
    %343 = vmatpush.msra.mxu0 0.0
    %344 = vmatpush.msra.mxu0 0.0
    %345 = vmatpush.msra.mxu0 0.0
    %346 = vmatpush.msra.mxu0 %v317
    %347 = vmatpush.msra.mxu0 %v316
    %348 = vmatpush.msra.mxu0 %v315
    %349 = vmatpush.msra.mxu0 %v314
    %350 = vmatmul.f32.gmra.mxu0 %v323
    %v351 = vpop.f32.mrf.mxu0
    %v352 = vadd.f32 %v106, %v351
    %353 = vmatmul.f32.gmra.mxu0 %v326
    %v354 = vpop.f32.mrf.mxu0
    %v355 = vadd.f32 %v107, %v354
    %356 = vmatmul.f32.gmra.mxu0 %v329
    %v357 = vpop.f32.mrf.mxu0
    %v358 = vadd.f32 %v108, %v357
    %359 = vmatmul.f32.gmra.mxu0 %v332
    %v360 = vpop.f32.mrf.mxu0
    %v361 = vadd.f32 %v109, %v360
    %362 = vdwg.mxu0
    %v363 = vmul.f32 %v352, 0.5
    %v364 = vmul.f32 %v355, 0.5
    %v365 = vmul.f32 %v358, 0.5
    %v366 = vmul.f32 %v361, 0.5
    %v367 = vmul.f32 %v352, 0.70710677
    %v368 = vmul.f32 %v355, 0.70710677
    %v369 = vmul.f32 %v358, 0.70710677
    %v370 = vmul.f32 %v361, 0.70710677
    %v371 = vand.u32 2147483647, %v367
    %v372 = vand.u32 2147483647, %v368
    %v373 = vand.u32 2147483647, %v369
    %v374 = vand.u32 2147483647, %v370
    %v375 = vmul.f32 %v371, 0.3275911
    %v376 = vmul.f32 %v372, 0.3275911
    %v377 = vmul.f32 %v373, 0.3275911
    %v378 = vmul.f32 %v374, 0.3275911
    %v379 = vadd.f32 %v375, 1.0
    %v380 = vadd.f32 %v376, 1.0
    %v381 = vadd.f32 %v377, 1.0
    %v382 = vadd.f32 %v378, 1.0
    %v383 = vrcp.pop %v379
    %v384 = vmul.f32 %v379, %v383
    %v385 = vsub.f32 1.0, %v384
    %v386 = vmul.f32 %v383, %v385
    %v387 = vadd.f32 %v383, %v386
    %vm388 = vweird.f32 %v379
    %vm389 = vweird.f32 %v383
    %vm390 = vmor %vm388, %vm389
    %v391 = vsel %vm390, %v383, %v387
    %v392 = vand.u32 2147483647, %v379
    %vm393 = vcmp.eq.f32.partialorder %v392, 8.507059e+37
    %v394 = vand.u32 %v379, 2147483648
    %v395 = vor.u32 1.1754944e-38, %v394
    %v396 = vsel %vm393, %v395, %v391
    %v397 = vmul.f32 1.0, %v396
    %v398 = vrcp.pop %v380
    %v399 = vmul.f32 %v380, %v398
    %v400 = vsub.f32 1.0, %v399
    %v401 = vmul.f32 %v398, %v400
    %v402 = vadd.f32 %v398, %v401
    %vm403 = vweird.f32 %v380
    %vm404 = vweird.f32 %v398
    %vm405 = vmor %vm403, %vm404
    %v406 = vsel %vm405, %v398, %v402
    %v407 = vand.u32 2147483647, %v380
    %vm408 = vcmp.eq.f32.partialorder %v407, 8.507059e+37
    %v409 = vand.u32 %v380, 2147483648
    %v410 = vor.u32 1.1754944e-38, %v409
    %v411 = vsel %vm408, %v410, %v406
    %v412 = vmul.f32 1.0, %v411
    %v413 = vrcp.pop %v381
    %v414 = vmul.f32 %v381, %v413
    %v415 = vsub.f32 1.0, %v414
    %v416 = vmul.f32 %v413, %v415
    %v417 = vadd.f32 %v413, %v416
    %vm418 = vweird.f32 %v381
    %vm419 = vweird.f32 %v413
    %vm420 = vmor %vm418, %vm419
    %v421 = vsel %vm420, %v413, %v417
    %v422 = vand.u32 2147483647, %v381
    %vm423 = vcmp.eq.f32.partialorder %v422, 8.507059e+37
    %v424 = vand.u32 %v381, 2147483648
    %v425 = vor.u32 1.1754944e-38, %v424
    %v426 = vsel %vm423, %v425, %v421
    %v427 = vmul.f32 1.0, %v426
    %v428 = vrcp.pop %v382
    %v429 = vmul.f32 %v382, %v428
    %v430 = vsub.f32 1.0, %v429
    %v431 = vmul.f32 %v428, %v430
    %v432 = vadd.f32 %v428, %v431
    %vm433 = vweird.f32 %v382
    %vm434 = vweird.f32 %v428
    %vm435 = vmor %vm433, %vm434
    %v436 = vsel %vm435, %v428, %v432
    %v437 = vand.u32 2147483647, %v382
    %vm438 = vcmp.eq.f32.partialorder %v437, 8.507059e+37
    %v439 = vand.u32 %v382, 2147483648
    %v440 = vor.u32 1.1754944e-38, %v439
    %v441 = vsel %vm438, %v440, %v436
    %v442 = vmul.f32 1.0, %v441
    %v443 = vmul.f32 %v397, 1.0614054
    %v444 = vmul.f32 %v412, 1.0614054
    %v445 = vmul.f32 %v427, 1.0614054
    %v446 = vmul.f32 %v442, 1.0614054
    %v447 = vadd.f32 %v443, -1.4531521
    %v448 = vadd.f32 %v444, -1.4531521
    %v449 = vadd.f32 %v445, -1.4531521
    %v450 = vadd.f32 %v446, -1.4531521
    %v451 = vmul.f32 %v447, %v397
    %v452 = vmul.f32 %v448, %v412
    %v453 = vmul.f32 %v449, %v427
    %v454 = vmul.f32 %v450, %v442
    %v455 = vadd.f32 %v451, 1.4214138
    %v456 = vadd.f32 %v452, 1.4214138
    %v457 = vadd.f32 %v453, 1.4214138
    %v458 = vadd.f32 %v454, 1.4214138
    %v459 = vmul.f32 %v455, %v397
    %v460 = vmul.f32 %v456, %v412
    %v461 = vmul.f32 %v457, %v427
    %v462 = vmul.f32 %v458, %v442
    %v463 = vadd.f32 %v459, -0.28449672
    %v464 = vadd.f32 %v460, -0.28449672
    %v465 = vadd.f32 %v461, -0.28449672
    %v466 = vadd.f32 %v462, -0.28449672
    %v467 = vmul.f32 %v463, %v397
    %v468 = vmul.f32 %v464, %v412
    %v469 = vmul.f32 %v465, %v427
    %v470 = vmul.f32 %v466, %v442
    %v471 = vadd.f32 %v467, 0.2548296
    %v472 = vadd.f32 %v468, 0.2548296
    %v473 = vadd.f32 %v469, 0.2548296
    %v474 = vadd.f32 %v470, 0.2548296
    %v475 = vmul.f32 %v471, %v397
    %v476 = vmul.f32 %v472, %v412
    %v477 = vmul.f32 %v473, %v427
    %v478 = vmul.f32 %v474, %v442
    %v479 = vsub.f32 0.0, %v371
    %v480 = vsub.f32 0.0, %v372
    %v481 = vsub.f32 0.0, %v373
    %v482 = vsub.f32 0.0, %v374
    %v483 = vmul.f32 %v479, %v371
    %v484 = vmul.f32 %v480, %v372
    %v485 = vmul.f32 %v481, %v373
    %v486 = vmul.f32 %v482, %v374
    %v487 = vmul.f32 %v483, 1.442695
    %v488 = vpow.pop %v487
    %v489 = vmul.f32 %v484, 1.442695
    %v490 = vpow.pop %v489
    %v491 = vmul.f32 %v485, 1.442695
    %v492 = vpow.pop %v491
    %v493 = vmul.f32 %v486, 1.442695
    %v494 = vpow.pop %v493
    %v495 = vmul.f32 %v475, %v488
    %v496 = vmul.f32 %v476, %v490
    %v497 = vmul.f32 %v477, %v492
    %v498 = vmul.f32 %v478, %v494
    %v499 = vsub.f32 1.0, %v495
    %v500 = vsub.f32 1.0, %v496
    %v501 = vsub.f32 1.0, %v497
    %v502 = vsub.f32 1.0, %v498
    %vm503 = vcmp.ge.f32.partialorder %v367, 0.0
    %vm504 = vcmp.ge.f32.partialorder %v368, 0.0
    %vm505 = vcmp.ge.f32.partialorder %v369, 0.0
    %vm506 = vcmp.ge.f32.partialorder %v370, 0.0
    %v507 = vsub.f32 0.0, %v499
    %v508 = vsub.f32 0.0, %v500
    %v509 = vsub.f32 0.0, %v501
    %v510 = vsub.f32 0.0, %v502
    %v511 = vsel %vm503, %v499, %v507
    %v512 = vsel %vm504, %v500, %v508
    %v513 = vsel %vm505, %v501, %v509
    %v514 = vsel %vm506, %v502, %v510
    %v515 = vadd.f32 %v511, 1.0
    %v516 = vadd.f32 %v512, 1.0
    %v517 = vadd.f32 %v513, 1.0
    %v518 = vadd.f32 %v514, 1.0
    %v519 = vmul.f32 %v363, %v515
    %v520 = vmul.f32 %v364, %v516
    %v521 = vmul.f32 %v365, %v517
    %v522 = vmul.f32 %v366, %v518
    %v524 = vsel %vm120, %v94, 0
    %v527 = vsel %vm120, %v95, 0
    %v530 = vsel %vm120, %v96, 0
    %v533 = vsel %vm120, %v97, 0
    %535 = vmatpush.msra.mxu0 0.0
    %536 = vmatpush.msra.mxu0 0.0
    %537 = vmatpush.msra.mxu0 0.0
    %538 = vmatpush.msra.mxu0 0.0
    %539 = vmatpush.msra.mxu0 0.0
    %540 = vmatpush.msra.mxu0 0.0
    %541 = vmatpush.msra.mxu0 0.0
    %542 = vmatpush.msra.mxu0 0.0
    %543 = vmatpush.msra.mxu0 0.0
    %544 = vmatpush.msra.mxu0 0.0
    %545 = vmatpush.msra.mxu0 0.0
    %546 = vmatpush.msra.mxu0 0.0
    %547 = vmatpush.msra.mxu0 %v522
    %548 = vmatpush.msra.mxu0 %v521
    %549 = vmatpush.msra.mxu0 %v520
    %550 = vmatpush.msra.mxu0 %v519
    %551 = vmatmul.f32.gmra.mxu0 %v524
    %v552 = vpop.f32.mrf.mxu0
    %v553 = vadd.f32 %v110, %v552
    %554 = vmatmul.f32.gmra.mxu0 %v527
    %v555 = vpop.f32.mrf.mxu0
    %v556 = vadd.f32 %v111, %v555
    %557 = vmatmul.f32.gmra.mxu0 %v530
    %v558 = vpop.f32.mrf.mxu0
    %v559 = vadd.f32 %v112, %v558
    %560 = vmatmul.f32.gmra.mxu0 %v533
    %v561 = vpop.f32.mrf.mxu0
    %v562 = vadd.f32 %v113, %v561
    %563 = vdwg.mxu0
    %564 = vmatpush.msra.mxu0 0.0
    %565 = vmatpush.msra.mxu0 0.0
    %566 = vmatpush.msra.mxu0 0.0
    %567 = vmatpush.msra.mxu0 0.0
    %568 = vmatpush.msra.mxu0 0.0
    %569 = vmatpush.msra.mxu0 0.0
    %570 = vmatpush.msra.mxu0 0.0
    %571 = vmatpush.msra.mxu0 0.0
    %572 = vmatpush.msra.mxu0 0.0
    %573 = vmatpush.msra.mxu0 0.0
    %574 = vmatpush.msra.mxu0 0.0
    %575 = vmatpush.msra.mxu0 0.0
    %576 = vmatpush.msra.mxu0 %v321
    %577 = vmatpush.msra.mxu0 %v320
    %578 = vmatpush.msra.mxu0 %v319
    %579 = vmatpush.msra.mxu0 %v318
    %580 = vmatmul.f32.gmra.mxu0 %v323
    %v581 = vpop.f32.mrf.mxu0
    %v582 = vadd.f32 %v106, %v581
    %583 = vmatmul.f32.gmra.mxu0 %v326
    %v584 = vpop.f32.mrf.mxu0
    %v585 = vadd.f32 %v107, %v584
    %586 = vmatmul.f32.gmra.mxu0 %v329
    %v587 = vpop.f32.mrf.mxu0
    %v588 = vadd.f32 %v108, %v587
    %589 = vmatmul.f32.gmra.mxu0 %v332
    %v590 = vpop.f32.mrf.mxu0
    %v591 = vadd.f32 %v109, %v590
    %592 = vdwg.mxu0
    %v593 = vmul.f32 %v582, 0.5
    %v594 = vmul.f32 %v585, 0.5
    %v595 = vmul.f32 %v588, 0.5
    %v596 = vmul.f32 %v591, 0.5
    %v597 = vmul.f32 %v582, 0.70710677
    %v598 = vmul.f32 %v585, 0.70710677
    %v599 = vmul.f32 %v588, 0.70710677
    %v600 = vmul.f32 %v591, 0.70710677
    %v601 = vand.u32 2147483647, %v597
    %v602 = vand.u32 2147483647, %v598
    %v603 = vand.u32 2147483647, %v599
    %v604 = vand.u32 2147483647, %v600
    %v605 = vmul.f32 %v601, 0.3275911
    %v606 = vmul.f32 %v602, 0.3275911
    %v607 = vmul.f32 %v603, 0.3275911
    %v608 = vmul.f32 %v604, 0.3275911
    %v609 = vadd.f32 %v605, 1.0
    %v610 = vadd.f32 %v606, 1.0
    %v611 = vadd.f32 %v607, 1.0
    %v612 = vadd.f32 %v608, 1.0
    %v613 = vrcp.pop %v609
    %v614 = vmul.f32 %v609, %v613
    %v615 = vsub.f32 1.0, %v614
    %v616 = vmul.f32 %v613, %v615
    %v617 = vadd.f32 %v613, %v616
    %vm618 = vweird.f32 %v609
    %vm619 = vweird.f32 %v613
    %vm620 = vmor %vm618, %vm619
    %v621 = vsel %vm620, %v613, %v617
    %v622 = vand.u32 2147483647, %v609
    %vm623 = vcmp.eq.f32.partialorder %v622, 8.507059e+37
    %v624 = vand.u32 %v609, 2147483648
    %v625 = vor.u32 1.1754944e-38, %v624
    %v626 = vsel %vm623, %v625, %v621
    %v627 = vmul.f32 1.0, %v626
    %v628 = vrcp.pop %v610
    %v629 = vmul.f32 %v610, %v628
    %v630 = vsub.f32 1.0, %v629
    %v631 = vmul.f32 %v628, %v630
    %v632 = vadd.f32 %v628, %v631
    %vm633 = vweird.f32 %v610
    %vm634 = vweird.f32 %v628
    %vm635 = vmor %vm633, %vm634
    %v636 = vsel %vm635, %v628, %v632
    %v637 = vand.u32 2147483647, %v610
    %vm638 = vcmp.eq.f32.partialorder %v637, 8.507059e+37
    %v639 = vand.u32 %v610, 2147483648
    %v640 = vor.u32 1.1754944e-38, %v639
    %v641 = vsel %vm638, %v640, %v636
    %v642 = vmul.f32 1.0, %v641
    %v643 = vrcp.pop %v611
    %v644 = vmul.f32 %v611, %v643
    %v645 = vsub.f32 1.0, %v644
    %v646 = vmul.f32 %v643, %v645
    %v647 = vadd.f32 %v643, %v646
    %vm648 = vweird.f32 %v611
    %vm649 = vweird.f32 %v643
    %vm650 = vmor %vm648, %vm649
    %v651 = vsel %vm650, %v643, %v647
    %v652 = vand.u32 2147483647, %v611
    %vm653 = vcmp.eq.f32.partialorder %v652, 8.507059e+37
    %v654 = vand.u32 %v611, 2147483648
    %v655 = vor.u32 1.1754944e-38, %v654
    %v656 = vsel %vm653, %v655, %v651
    %v657 = vmul.f32 1.0, %v656
    %v658 = vrcp.pop %v612
    %v659 = vmul.f32 %v612, %v658
    %v660 = vsub.f32 1.0, %v659
    %v661 = vmul.f32 %v658, %v660
    %v662 = vadd.f32 %v658, %v661
    %vm663 = vweird.f32 %v612
    %vm664 = vweird.f32 %v658
    %vm665 = vmor %vm663, %vm664
    %v666 = vsel %vm665, %v658, %v662
    %v667 = vand.u32 2147483647, %v612
    %vm668 = vcmp.eq.f32.partialorder %v667, 8.507059e+37
    %v669 = vand.u32 %v612, 2147483648
    %v670 = vor.u32 1.1754944e-38, %v669
    %v671 = vsel %vm668, %v670, %v666
    %v672 = vmul.f32 1.0, %v671
    %v673 = vmul.f32 %v627, 1.0614054
    %v674 = vmul.f32 %v642, 1.0614054
    %v675 = vmul.f32 %v657, 1.0614054
    %v676 = vmul.f32 %v672, 1.0614054
    %v677 = vadd.f32 %v673, -1.4531521
    %v678 = vadd.f32 %v674, -1.4531521
    %v679 = vadd.f32 %v675, -1.4531521
    %v680 = vadd.f32 %v676, -1.4531521
    %v681 = vmul.f32 %v677, %v627
    %v682 = vmul.f32 %v678, %v642
    %v683 = vmul.f32 %v679, %v657
    %v684 = vmul.f32 %v680, %v672
    %v685 = vadd.f32 %v681, 1.4214138
    %v686 = vadd.f32 %v682, 1.4214138
    %v687 = vadd.f32 %v683, 1.4214138
    %v688 = vadd.f32 %v684, 1.4214138
    %v689 = vmul.f32 %v685, %v627
    %v690 = vmul.f32 %v686, %v642
    %v691 = vmul.f32 %v687, %v657
    %v692 = vmul.f32 %v688, %v672
    %v693 = vadd.f32 %v689, -0.28449672
    %v694 = vadd.f32 %v690, -0.28449672
    %v695 = vadd.f32 %v691, -0.28449672
    %v696 = vadd.f32 %v692, -0.28449672
    %v697 = vmul.f32 %v693, %v627
    %v698 = vmul.f32 %v694, %v642
    %v699 = vmul.f32 %v695, %v657
    %v700 = vmul.f32 %v696, %v672
    %v701 = vadd.f32 %v697, 0.2548296
    %v702 = vadd.f32 %v698, 0.2548296
    %v703 = vadd.f32 %v699, 0.2548296
    %v704 = vadd.f32 %v700, 0.2548296
    %v705 = vmul.f32 %v701, %v627
    %v706 = vmul.f32 %v702, %v642
    %v707 = vmul.f32 %v703, %v657
    %v708 = vmul.f32 %v704, %v672
    %v709 = vsub.f32 0.0, %v601
    %v710 = vsub.f32 0.0, %v602
    %v711 = vsub.f32 0.0, %v603
    %v712 = vsub.f32 0.0, %v604
    %v713 = vmul.f32 %v709, %v601
    %v714 = vmul.f32 %v710, %v602
    %v715 = vmul.f32 %v711, %v603
    %v716 = vmul.f32 %v712, %v604
    %v717 = vmul.f32 %v713, 1.442695
    %v718 = vpow.pop %v717
    %v719 = vmul.f32 %v714, 1.442695
    %v720 = vpow.pop %v719
    %v721 = vmul.f32 %v715, 1.442695
    %v722 = vpow.pop %v721
    %v723 = vmul.f32 %v716, 1.442695
    %v724 = vpow.pop %v723
    %v725 = vmul.f32 %v705, %v718
    %v726 = vmul.f32 %v706, %v720
    %v727 = vmul.f32 %v707, %v722
    %v728 = vmul.f32 %v708, %v724
    %v729 = vsub.f32 1.0, %v725
    %v730 = vsub.f32 1.0, %v726
    %v731 = vsub.f32 1.0, %v727
    %v732 = vsub.f32 1.0, %v728
    %vm733 = vcmp.ge.f32.partialorder %v597, 0.0
    %vm734 = vcmp.ge.f32.partialorder %v598, 0.0
    %vm735 = vcmp.ge.f32.partialorder %v599, 0.0
    %vm736 = vcmp.ge.f32.partialorder %v600, 0.0
    %v737 = vsub.f32 0.0, %v729
    %v738 = vsub.f32 0.0, %v730
    %v739 = vsub.f32 0.0, %v731
    %v740 = vsub.f32 0.0, %v732
    %v741 = vsel %vm733, %v729, %v737
    %v742 = vsel %vm734, %v730, %v738
    %v743 = vsel %vm735, %v731, %v739
    %v744 = vsel %vm736, %v732, %v740
    %v745 = vadd.f32 %v741, 1.0
    %v746 = vadd.f32 %v742, 1.0
    %v747 = vadd.f32 %v743, 1.0
    %v748 = vadd.f32 %v744, 1.0
    %v749 = vmul.f32 %v593, %v745
    %v750 = vmul.f32 %v594, %v746
    %v751 = vmul.f32 %v595, %v747
    %v752 = vmul.f32 %v596, %v748
    %753 = vmatpush.msra.mxu0 0.0
    %754 = vmatpush.msra.mxu0 0.0
    %755 = vmatpush.msra.mxu0 0.0
    %756 = vmatpush.msra.mxu0 0.0
    %757 = vmatpush.msra.mxu0 0.0
    %758 = vmatpush.msra.mxu0 0.0
    %759 = vmatpush.msra.mxu0 0.0
    %760 = vmatpush.msra.mxu0 0.0
    %761 = vmatpush.msra.mxu0 0.0
    %762 = vmatpush.msra.mxu0 0.0
    %763 = vmatpush.msra.mxu0 0.0
    %764 = vmatpush.msra.mxu0 0.0
    %765 = vmatpush.msra.mxu0 %v752
    %766 = vmatpush.msra.mxu0 %v751
    %767 = vmatpush.msra.mxu0 %v750
    %768 = vmatpush.msra.mxu0 %v749
    %769 = vmatmul.f32.gmra.mxu0 %v524
    %v770 = vpop.f32.mrf.mxu0
    %v771 = vadd.f32 %v110, %v770
    %772 = vmatmul.f32.gmra.mxu0 %v527
    %v773 = vpop.f32.mrf.mxu0
    %v774 = vadd.f32 %v111, %v773
    %775 = vmatmul.f32.gmra.mxu0 %v530
    %v776 = vpop.f32.mrf.mxu0
    %v777 = vadd.f32 %v112, %v776
    %778 = vmatmul.f32.gmra.mxu0 %v533
    %v779 = vpop.f32.mrf.mxu0
    %v780 = vadd.f32 %v113, %v779
    %781 = vdwg.mxu0
    %v782 = vadd.f32 %v67, %v553
    %v783 = vadd.f32 %v70, %v556
    %v784 = vadd.f32 %v73, %v559
    %v785 = vadd.f32 %v76, %v562
    %v786 = vadd.f32 %v79, %v771
    %v787 = vadd.f32 %v82, %v774
    %v788 = vadd.f32 %v85, %v777
    %v789 = vadd.f32 %v88, %v780
    %v790 = vsel %vm120, %v782, 0.0
    %791 = vadd.xlane.f32.xlu0 %v790
    %v792 = vpop.xlane.xlu0 %791
    %v793 = vsel %vm120, %v783, 0.0
    %794 = vadd.xlane.f32.xlu0 %v793
    %v795 = vpop.xlane.xlu0 %794
    %v796 = vsel %vm120, %v784, 0.0
    %797 = vadd.xlane.f32.xlu0 %v796
    %v798 = vpop.xlane.xlu0 %797
    %v799 = vsel %vm120, %v785, 0.0
    %800 = vadd.xlane.f32.xlu0 %v799
    %v801 = vpop.xlane.xlu0 %800
    %v802 = vsel %vm120, %v786, 0.0
    %803 = vadd.xlane.f32.xlu0 %v802
    %v804 = vpop.xlane.xlu0 %803
    %v805 = vsel %vm120, %v787, 0.0
    %806 = vadd.xlane.f32.xlu0 %v805
    %v807 = vpop.xlane.xlu0 %806
    %v808 = vsel %vm120, %v788, 0.0
    %809 = vadd.xlane.f32.xlu0 %v808
    %v810 = vpop.xlane.xlu0 %809
    %v811 = vsel %vm120, %v789, 0.0
    %812 = vadd.xlane.f32.xlu0 %v811
    %v813 = vpop.xlane.xlu0 %812
    %v814 = vmul.f32 %v792, %v151
    %v815 = vmul.f32 %v795, %v151
    %v816 = vmul.f32 %v798, %v151
    %v817 = vmul.f32 %v801, %v151
    %v818 = vmul.f32 %v804, %v151
    %v819 = vmul.f32 %v807, %v151
    %v820 = vmul.f32 %v810, %v151
    %v821 = vmul.f32 %v813, %v151
    %v822 = vsub.f32 %v782, %v814
    %v823 = vsub.f32 %v783, %v815
    %v824 = vsub.f32 %v784, %v816
    %v825 = vsub.f32 %v785, %v817
    %v826 = vsub.f32 %v786, %v818
    %v827 = vsub.f32 %v787, %v819
    %v828 = vsub.f32 %v788, %v820
    %v829 = vsub.f32 %v789, %v821
    %v830 = vmul.f32 %v822, %v822
    %v831 = vmul.f32 %v823, %v823
    %v832 = vmul.f32 %v824, %v824
    %v833 = vmul.f32 %v825, %v825
    %v834 = vmul.f32 %v826, %v826
    %v835 = vmul.f32 %v827, %v827
    %v836 = vmul.f32 %v828, %v828
    %v837 = vmul.f32 %v829, %v829
    %v838 = vsel %vm120, %v830, 0.0
    %839 = vadd.xlane.f32.xlu0 %v838
    %v840 = vpop.xlane.xlu0 %839
    %v841 = vsel %vm120, %v831, 0.0
    %842 = vadd.xlane.f32.xlu0 %v841
    %v843 = vpop.xlane.xlu0 %842
    %v844 = vsel %vm120, %v832, 0.0
    %845 = vadd.xlane.f32.xlu0 %v844
    %v846 = vpop.xlane.xlu0 %845
    %v847 = vsel %vm120, %v833, 0.0
    %848 = vadd.xlane.f32.xlu0 %v847
    %v849 = vpop.xlane.xlu0 %848
    %v850 = vsel %vm120, %v834, 0.0
    %851 = vadd.xlane.f32.xlu0 %v850
    %v852 = vpop.xlane.xlu0 %851
    %v853 = vsel %vm120, %v835, 0.0
    %854 = vadd.xlane.f32.xlu0 %v853
    %v855 = vpop.xlane.xlu0 %854
    %v856 = vsel %vm120, %v836, 0.0
    %857 = vadd.xlane.f32.xlu0 %v856
    %v858 = vpop.xlane.xlu0 %857
    %v859 = vsel %vm120, %v837, 0.0
    %860 = vadd.xlane.f32.xlu0 %v859
    %v861 = vpop.xlane.xlu0 %860
    %v862 = vmul.f32 %v840, %v151
    %v863 = vmul.f32 %v843, %v151
    %v864 = vmul.f32 %v846, %v151
    %v865 = vmul.f32 %v849, %v151
    %v866 = vmul.f32 %v852, %v151
    %v867 = vmul.f32 %v855, %v151
    %v868 = vmul.f32 %v858, %v151
    %v869 = vmul.f32 %v861, %v151
    %v870 = vadd.f32 %v862, 1e-05
    %v871 = vadd.f32 %v863, 1e-05
    %v872 = vadd.f32 %v864, 1e-05
    %v873 = vadd.f32 %v865, 1e-05
    %v874 = vadd.f32 %v866, 1e-05
    %v875 = vadd.f32 %v867, 1e-05
    %v876 = vadd.f32 %v868, 1e-05
    %v877 = vadd.f32 %v869, 1e-05
    %v878 = vrsqrt.pop %v870
    %v879 = vmul.f32 %v878, %v870
    %v880 = vmul.f32 %v879, %v878
    %v881 = vmul.f32 0.5, %v880
    %v882 = vsub.f32 1.5, %v881
    %v883 = vmul.f32 %v878, %v882
    %vm884 = vweird.f32 %v870
    %vm885 = vweird.f32 %v878
    %vm886 = vmor %vm884, %vm885
    %v887 = vsel %vm886, %v878, %v883
    %v888 = vrsqrt.pop %v871
    %v889 = vmul.f32 %v888, %v871
    %v890 = vmul.f32 %v889, %v888
    %v891 = vmul.f32 0.5, %v890
    %v892 = vsub.f32 1.5, %v891
    %v893 = vmul.f32 %v888, %v892
    %vm894 = vweird.f32 %v871
    %vm895 = vweird.f32 %v888
    %vm896 = vmor %vm894, %vm895
    %v897 = vsel %vm896, %v888, %v893
    %v898 = vrsqrt.pop %v872
    %v899 = vmul.f32 %v898, %v872
    %v900 = vmul.f32 %v899, %v898
    %v901 = vmul.f32 0.5, %v900
    %v902 = vsub.f32 1.5, %v901
    %v903 = vmul.f32 %v898, %v902
    %vm904 = vweird.f32 %v872
    %vm905 = vweird.f32 %v898
    %vm906 = vmor %vm904, %vm905
    %v907 = vsel %vm906, %v898, %v903
    %v908 = vrsqrt.pop %v873
    %v909 = vmul.f32 %v908, %v873
    %v910 = vmul.f32 %v909, %v908
    %v911 = vmul.f32 0.5, %v910
    %v912 = vsub.f32 1.5, %v911
    %v913 = vmul.f32 %v908, %v912
    %vm914 = vweird.f32 %v873
    %vm915 = vweird.f32 %v908
    %vm916 = vmor %vm914, %vm915
    %v917 = vsel %vm916, %v908, %v913
    %v918 = vrsqrt.pop %v874
    %v919 = vmul.f32 %v918, %v874
    %v920 = vmul.f32 %v919, %v918
    %v921 = vmul.f32 0.5, %v920
    %v922 = vsub.f32 1.5, %v921
    %v923 = vmul.f32 %v918, %v922
    %vm924 = vweird.f32 %v874
    %vm925 = vweird.f32 %v918
    %vm926 = vmor %vm924, %vm925
    %v927 = vsel %vm926, %v918, %v923
    %v928 = vrsqrt.pop %v875
    %v929 = vmul.f32 %v928, %v875
    %v930 = vmul.f32 %v929, %v928
    %v931 = vmul.f32 0.5, %v930
    %v932 = vsub.f32 1.5, %v931
    %v933 = vmul.f32 %v928, %v932
    %vm934 = vweird.f32 %v875
    %vm935 = vweird.f32 %v928
    %vm936 = vmor %vm934, %vm935
    %v937 = vsel %vm936, %v928, %v933
    %v938 = vrsqrt.pop %v876
    %v939 = vmul.f32 %v938, %v876
    %v940 = vmul.f32 %v939, %v938
    %v941 = vmul.f32 0.5, %v940
    %v942 = vsub.f32 1.5, %v941
    %v943 = vmul.f32 %v938, %v942
    %vm944 = vweird.f32 %v876
    %vm945 = vweird.f32 %v938
    %vm946 = vmor %vm944, %vm945
    %v947 = vsel %vm946, %v938, %v943
    %v948 = vrsqrt.pop %v877
    %v949 = vmul.f32 %v948, %v877
    %v950 = vmul.f32 %v949, %v948
    %v951 = vmul.f32 0.5, %v950
    %v952 = vsub.f32 1.5, %v951
    %v953 = vmul.f32 %v948, %v952
    %vm954 = vweird.f32 %v877
    %vm955 = vweird.f32 %v948
    %vm956 = vmor %vm954, %vm955
    %v957 = vsel %vm956, %v948, %v953
    %v958 = vmul.f32 %v822, %v887
    %v959 = vmul.f32 %v823, %v897
    %v960 = vmul.f32 %v824, %v907
    %v961 = vmul.f32 %v825, %v917
    %v962 = vmul.f32 %v826, %v927
    %v963 = vmul.f32 %v827, %v937
    %v964 = vmul.f32 %v828, %v947
    %v965 = vmul.f32 %v829, %v957
    %v966 = vperm.slane %v116, 0
    %v967 = vmul.f32 %v958, %v966
    %v968 = vmul.f32 %v959, %v966
    %v969 = vmul.f32 %v960, %v966
    %v970 = vmul.f32 %v961, %v966
    %v971 = vmul.f32 %v962, %v966
    %v972 = vmul.f32 %v963, %v966
    %v973 = vmul.f32 %v964, %v966
    %v974 = vmul.f32 %v965, %v966
    %v975 = vperm.slane %v117, 0
    %v976 = vadd.f32 %v967, %v975
    %v977 = vadd.f32 %v968, %v975
    %v978 = vadd.f32 %v969, %v975
    %v979 = vadd.f32 %v970, %v975
    %v980 = vadd.f32 %v971, %v975
    %v981 = vadd.f32 %v972, %v975
    %v982 = vadd.f32 %v973, %v975
    %v983 = vadd.f32 %v974, %v975
    %v984 = vperm.slane %v118, 0
    %v986 = vsel %vm120, %v976, 0
    %v989 = vsel %vm120, %v977, 0
    %v992 = vsel %vm120, %v978, 0
    %v995 = vsel %vm120, %v979, 0
    %v998 = vsel %vm120, %v980, 0
    %v1001 = vsel %vm120, %v981, 0
    %v1004 = vsel %vm120, %v982, 0
    %v1007 = vsel %vm120, %v983, 0
    %1009 = vmatpush.msra.mxu0 0.0
    %1010 = vmatpush.msra.mxu0 0.0
    %1011 = vmatpush.msra.mxu0 0.0
    %1012 = vmatpush.msra.mxu0 0.0
    %1013 = vmatpush.msra.mxu0 0.0
    %1014 = vmatpush.msra.mxu0 0.0
    %1015 = vmatpush.msra.mxu0 0.0
    %1016 = vmatpush.msra.mxu0 0.0
    %1017 = vmatpush.msra.mxu0 0.0
    %1018 = vmatpush.msra.mxu0 0.0
    %1019 = vmatpush.msra.mxu0 0.0
    %1020 = vmatpush.msra.mxu0 0.0
    %1021 = vmatpush.msra.mxu0 %v101
    %1022 = vmatpush.msra.mxu0 %v100
    %1023 = vmatpush.msra.mxu0 %v99
    %1024 = vmatpush.msra.mxu0 %v98
    %1025 = vmatmul.f32.gmra.mxu0 %v986
    %v1026 = vpop.f32.mrf.mxu0
    %v1027 = vadd.f32 %v984, %v1026
    %1028 = vmatmul.f32.gmra.mxu0 %v989
    %v1029 = vpop.f32.mrf.mxu0
    %v1030 = vadd.f32 %v984, %v1029
    %1031 = vmatmul.f32.gmra.mxu0 %v992
    %v1032 = vpop.f32.mrf.mxu0
    %v1033 = vadd.f32 %v984, %v1032
    %1034 = vmatmul.f32.gmra.mxu0 %v995
    %v1035 = vpop.f32.mrf.mxu0
    %v1036 = vadd.f32 %v984, %v1035
    %1037 = vmatmul.f32.gmra.mxu0 %v998
    %v1038 = vpop.f32.mrf.mxu0
    %v1039 = vadd.f32 %v984, %v1038
    %1040 = vmatmul.f32.gmra.mxu0 %v1001
    %v1041 = vpop.f32.mrf.mxu0
    %v1042 = vadd.f32 %v984, %v1041
    %1043 = vmatmul.f32.gmra.mxu0 %v1004
    %v1044 = vpop.f32.mrf.mxu0
    %v1045 = vadd.f32 %v984, %v1044
    %1046 = vmatmul.f32.gmra.mxu0 %v1007
    %v1047 = vpop.f32.mrf.mxu0
    %v1048 = vadd.f32 %v984, %v1047
    %1049 = vdwg.mxu0
    %v1050 = vmul.f32 %v1027, 0.5
    %v1051 = vmul.f32 %v1030, 0.5
    %v1052 = vmul.f32 %v1033, 0.5
    %v1053 = vmul.f32 %v1036, 0.5
    %v1054 = vmul.f32 %v1039, 0.5
    %v1055 = vmul.f32 %v1042, 0.5
    %v1056 = vmul.f32 %v1045, 0.5
    %v1057 = vmul.f32 %v1048, 0.5
    %v1058 = vmul.f32 %v1027, 0.70710677
    %v1059 = vmul.f32 %v1030, 0.70710677
    %v1060 = vmul.f32 %v1033, 0.70710677
    %v1061 = vmul.f32 %v1036, 0.70710677
    %v1062 = vmul.f32 %v1039, 0.70710677
    %v1063 = vmul.f32 %v1042, 0.70710677
    %v1064 = vmul.f32 %v1045, 0.70710677
    %v1065 = vmul.f32 %v1048, 0.70710677
    %v1066 = vand.u32 2147483647, %v1058
    %v1067 = vand.u32 2147483647, %v1059
    %v1068 = vand.u32 2147483647, %v1060
    %v1069 = vand.u32 2147483647, %v1061
    %v1070 = vand.u32 2147483647, %v1062
    %v1071 = vand.u32 2147483647, %v1063
    %v1072 = vand.u32 2147483647, %v1064
    %v1073 = vand.u32 2147483647, %v1065
    %v1074 = vmul.f32 %v1066, 0.3275911
    %v1075 = vmul.f32 %v1067, 0.3275911
    %v1076 = vmul.f32 %v1068, 0.3275911
    %v1077 = vmul.f32 %v1069, 0.3275911
    %v1078 = vmul.f32 %v1070, 0.3275911
    %v1079 = vmul.f32 %v1071, 0.3275911
    %v1080 = vmul.f32 %v1072, 0.3275911
    %v1081 = vmul.f32 %v1073, 0.3275911
    %v1082 = vadd.f32 %v1074, 1.0
    %v1083 = vadd.f32 %v1075, 1.0
    %v1084 = vadd.f32 %v1076, 1.0
    %v1085 = vadd.f32 %v1077, 1.0
    %v1086 = vadd.f32 %v1078, 1.0
    %v1087 = vadd.f32 %v1079, 1.0
    %v1088 = vadd.f32 %v1080, 1.0
    %v1089 = vadd.f32 %v1081, 1.0
    %v1090 = vrcp.pop %v1082
    %v1091 = vmul.f32 %v1082, %v1090
    %v1092 = vsub.f32 1.0, %v1091
    %v1093 = vmul.f32 %v1090, %v1092
    %v1094 = vadd.f32 %v1090, %v1093
    %vm1095 = vweird.f32 %v1082
    %vm1096 = vweird.f32 %v1090
    %vm1097 = vmor %vm1095, %vm1096
    %v1098 = vsel %vm1097, %v1090, %v1094
    %v1099 = vand.u32 2147483647, %v1082
    %vm1100 = vcmp.eq.f32.partialorder %v1099, 8.507059e+37
    %v1101 = vand.u32 %v1082, 2147483648
    %v1102 = vor.u32 1.1754944e-38, %v1101
    %v1103 = vsel %vm1100, %v1102, %v1098
    %v1104 = vmul.f32 1.0, %v1103
    %v1105 = vrcp.pop %v1083
    %v1106 = vmul.f32 %v1083, %v1105
    %v1107 = vsub.f32 1.0, %v1106
    %v1108 = vmul.f32 %v1105, %v1107
    %v1109 = vadd.f32 %v1105, %v1108
    %vm1110 = vweird.f32 %v1083
    %vm1111 = vweird.f32 %v1105
    %vm1112 = vmor %vm1110, %vm1111
    %v1113 = vsel %vm1112, %v1105, %v1109
    %v1114 = vand.u32 2147483647, %v1083
    %vm1115 = vcmp.eq.f32.partialorder %v1114, 8.507059e+37
    %v1116 = vand.u32 %v1083, 2147483648
    %v1117 = vor.u32 1.1754944e-38, %v1116
    %v1118 = vsel %vm1115, %v1117, %v1113
    %v1119 = vmul.f32 1.0, %v1118
    %v1120 = vrcp.pop %v1084
    %v1121 = vmul.f32 %v1084, %v1120
    %v1122 = vsub.f32 1.0, %v1121
    %v1123 = vmul.f32 %v1120, %v1122
    %v1124 = vadd.f32 %v1120, %v1123
    %vm1125 = vweird.f32 %v1084
    %vm1126 = vweird.f32 %v1120
    %vm1127 = vmor %vm1125, %vm1126
    %v1128 = vsel %vm1127, %v1120, %v1124
    %v1129 = vand.u32 2147483647, %v1084
    %vm1130 = vcmp.eq.f32.partialorder %v1129, 8.507059e+37
    %v1131 = vand.u32 %v1084, 2147483648
    %v1132 = vor.u32 1.1754944e-38, %v1131
    %v1133 = vsel %vm1130, %v1132, %v1128
    %v1134 = vmul.f32 1.0, %v1133
    %v1135 = vrcp.pop %v1085
    %v1136 = vmul.f32 %v1085, %v1135
    %v1137 = vsub.f32 1.0, %v1136
    %v1138 = vmul.f32 %v1135, %v1137
    %v1139 = vadd.f32 %v1135, %v1138
    %vm1140 = vweird.f32 %v1085
    %vm1141 = vweird.f32 %v1135
    %vm1142 = vmor %vm1140, %vm1141
    %v1143 = vsel %vm1142, %v1135, %v1139
    %v1144 = vand.u32 2147483647, %v1085
    %vm1145 = vcmp.eq.f32.partialorder %v1144, 8.507059e+37
    %v1146 = vand.u32 %v1085, 2147483648
    %v1147 = vor.u32 1.1754944e-38, %v1146
    %v1148 = vsel %vm1145, %v1147, %v1143
    %v1149 = vmul.f32 1.0, %v1148
    %v1150 = vrcp.pop %v1086
    %v1151 = vmul.f32 %v1086, %v1150
    %v1152 = vsub.f32 1.0, %v1151
    %v1153 = vmul.f32 %v1150, %v1152
    %v1154 = vadd.f32 %v1150, %v1153
    %vm1155 = vweird.f32 %v1086
    %vm1156 = vweird.f32 %v1150
    %vm1157 = vmor %vm1155, %vm1156
    %v1158 = vsel %vm1157, %v1150, %v1154
    %v1159 = vand.u32 2147483647, %v1086
    %vm1160 = vcmp.eq.f32.partialorder %v1159, 8.507059e+37
    %v1161 = vand.u32 %v1086, 2147483648
    %v1162 = vor.u32 1.1754944e-38, %v1161
    %v1163 = vsel %vm1160, %v1162, %v1158
    %v1164 = vmul.f32 1.0, %v1163
    %v1165 = vrcp.pop %v1087
    %v1166 = vmul.f32 %v1087, %v1165
    %v1167 = vsub.f32 1.0, %v1166
    %v1168 = vmul.f32 %v1165, %v1167
    %v1169 = vadd.f32 %v1165, %v1168
    %vm1170 = vweird.f32 %v1087
    %vm1171 = vweird.f32 %v1165
    %vm1172 = vmor %vm1170, %vm1171
    %v1173 = vsel %vm1172, %v1165, %v1169
    %v1174 = vand.u32 2147483647, %v1087
    %vm1175 = vcmp.eq.f32.partialorder %v1174, 8.507059e+37
    %v1176 = vand.u32 %v1087, 2147483648
    %v1177 = vor.u32 1.1754944e-38, %v1176
    %v1178 = vsel %vm1175, %v1177, %v1173
    %v1179 = vmul.f32 1.0, %v1178
    %v1180 = vrcp.pop %v1088
    %v1181 = vmul.f32 %v1088, %v1180
    %v1182 = vsub.f32 1.0, %v1181
    %v1183 = vmul.f32 %v1180, %v1182
    %v1184 = vadd.f32 %v1180, %v1183
    %vm1185 = vweird.f32 %v1088
    %vm1186 = vweird.f32 %v1180
    %vm1187 = vmor %vm1185, %vm1186
    %v1188 = vsel %vm1187, %v1180, %v1184
    %v1189 = vand.u32 2147483647, %v1088
    %vm1190 = vcmp.eq.f32.partialorder %v1189, 8.507059e+37
    %v1191 = vand.u32 %v1088, 2147483648
    %v1192 = vor.u32 1.1754944e-38, %v1191
    %v1193 = vsel %vm1190, %v1192, %v1188
    %v1194 = vmul.f32 1.0, %v1193
    %v1195 = vrcp.pop %v1089
    %v1196 = vmul.f32 %v1089, %v1195
    %v1197 = vsub.f32 1.0, %v1196
    %v1198 = vmul.f32 %v1195, %v1197
    %v1199 = vadd.f32 %v1195, %v1198
    %vm1200 = vweird.f32 %v1089
    %vm1201 = vweird.f32 %v1195
    %vm1202 = vmor %vm1200, %vm1201
    %v1203 = vsel %vm1202, %v1195, %v1199
    %v1204 = vand.u32 2147483647, %v1089
    %vm1205 = vcmp.eq.f32.partialorder %v1204, 8.507059e+37
    %v1206 = vand.u32 %v1089, 2147483648
    %v1207 = vor.u32 1.1754944e-38, %v1206
    %v1208 = vsel %vm1205, %v1207, %v1203
    %v1209 = vmul.f32 1.0, %v1208
    %v1210 = vmul.f32 %v1104, 1.0614054
    %v1211 = vmul.f32 %v1119, 1.0614054
    %v1212 = vmul.f32 %v1134, 1.0614054
    %v1213 = vmul.f32 %v1149, 1.0614054
    %v1214 = vmul.f32 %v1164, 1.0614054
    %v1215 = vmul.f32 %v1179, 1.0614054
    %v1216 = vmul.f32 %v1194, 1.0614054
    %v1217 = vmul.f32 %v1209, 1.0614054
    %v1218 = vadd.f32 %v1210, -1.4531521
    %v1219 = vadd.f32 %v1211, -1.4531521
    %v1220 = vadd.f32 %v1212, -1.4531521
    %v1221 = vadd.f32 %v1213, -1.4531521
    %v1222 = vadd.f32 %v1214, -1.4531521
    %v1223 = vadd.f32 %v1215, -1.4531521
    %v1224 = vadd.f32 %v1216, -1.4531521
    %v1225 = vadd.f32 %v1217, -1.4531521
    %v1226 = vmul.f32 %v1218, %v1104
    %v1227 = vmul.f32 %v1219, %v1119
    %v1228 = vmul.f32 %v1220, %v1134
    %v1229 = vmul.f32 %v1221, %v1149
    %v1230 = vmul.f32 %v1222, %v1164
    %v1231 = vmul.f32 %v1223, %v1179
    %v1232 = vmul.f32 %v1224, %v1194
    %v1233 = vmul.f32 %v1225, %v1209
    %v1234 = vadd.f32 %v1226, 1.4214138
    %v1235 = vadd.f32 %v1227, 1.4214138
    %v1236 = vadd.f32 %v1228, 1.4214138
    %v1237 = vadd.f32 %v1229, 1.4214138
    %v1238 = vadd.f32 %v1230, 1.4214138
    %v1239 = vadd.f32 %v1231, 1.4214138
    %v1240 = vadd.f32 %v1232, 1.4214138
    %v1241 = vadd.f32 %v1233, 1.4214138
    %v1242 = vmul.f32 %v1234, %v1104
    %v1243 = vmul.f32 %v1235, %v1119
    %v1244 = vmul.f32 %v1236, %v1134
    %v1245 = vmul.f32 %v1237, %v1149
    %v1246 = vmul.f32 %v1238, %v1164
    %v1247 = vmul.f32 %v1239, %v1179
    %v1248 = vmul.f32 %v1240, %v1194
    %v1249 = vmul.f32 %v1241, %v1209
    %v1250 = vadd.f32 %v1242, -0.28449672
    %v1251 = vadd.f32 %v1243, -0.28449672
    %v1252 = vadd.f32 %v1244, -0.28449672
    %v1253 = vadd.f32 %v1245, -0.28449672
    %v1254 = vadd.f32 %v1246, -0.28449672
    %v1255 = vadd.f32 %v1247, -0.28449672
    %v1256 = vadd.f32 %v1248, -0.28449672
    %v1257 = vadd.f32 %v1249, -0.28449672
    %v1258 = vmul.f32 %v1250, %v1104
    %v1259 = vmul.f32 %v1251, %v1119
    %v1260 = vmul.f32 %v1252, %v1134
    %v1261 = vmul.f32 %v1253, %v1149
    %v1262 = vmul.f32 %v1254, %v1164
    %v1263 = vmul.f32 %v1255, %v1179
    %v1264 = vmul.f32 %v1256, %v1194
    %v1265 = vmul.f32 %v1257, %v1209
    %v1266 = vadd.f32 %v1258, 0.2548296
    %v1267 = vadd.f32 %v1259, 0.2548296
    %v1268 = vadd.f32 %v1260, 0.2548296
    %v1269 = vadd.f32 %v1261, 0.2548296
    %v1270 = vadd.f32 %v1262, 0.2548296
    %v1271 = vadd.f32 %v1263, 0.2548296
    %v1272 = vadd.f32 %v1264, 0.2548296
    %v1273 = vadd.f32 %v1265, 0.2548296
    %v1274 = vmul.f32 %v1266, %v1104
    %v1275 = vmul.f32 %v1267, %v1119
    %v1276 = vmul.f32 %v1268, %v1134
    %v1277 = vmul.f32 %v1269, %v1149
    %v1278 = vmul.f32 %v1270, %v1164
    %v1279 = vmul.f32 %v1271, %v1179
    %v1280 = vmul.f32 %v1272, %v1194
    %v1281 = vmul.f32 %v1273, %v1209
    %v1282 = vsub.f32 0.0, %v1066
    %v1283 = vsub.f32 0.0, %v1067
    %v1284 = vsub.f32 0.0, %v1068
    %v1285 = vsub.f32 0.0, %v1069
    %v1286 = vsub.f32 0.0, %v1070
    %v1287 = vsub.f32 0.0, %v1071
    %v1288 = vsub.f32 0.0, %v1072
    %v1289 = vsub.f32 0.0, %v1073
    %v1290 = vmul.f32 %v1282, %v1066
    %v1291 = vmul.f32 %v1283, %v1067
    %v1292 = vmul.f32 %v1284, %v1068
    %v1293 = vmul.f32 %v1285, %v1069
    %v1294 = vmul.f32 %v1286, %v1070
    %v1295 = vmul.f32 %v1287, %v1071
    %v1296 = vmul.f32 %v1288, %v1072
    %v1297 = vmul.f32 %v1289, %v1073
    %v1298 = vmul.f32 %v1290, 1.442695
    %v1299 = vpow.pop %v1298
    %v1300 = vmul.f32 %v1291, 1.442695
    %v1301 = vpow.pop %v1300
    %v1302 = vmul.f32 %v1292, 1.442695
    %v1303 = vpow.pop %v1302
    %v1304 = vmul.f32 %v1293, 1.442695
    %v1305 = vpow.pop %v1304
    %v1306 = vmul.f32 %v1294, 1.442695
    %v1307 = vpow.pop %v1306
    %v1308 = vmul.f32 %v1295, 1.442695
    %v1309 = vpow.pop %v1308
    %v1310 = vmul.f32 %v1296, 1.442695
    %v1311 = vpow.pop %v1310
    %v1312 = vmul.f32 %v1297, 1.442695
    %v1313 = vpow.pop %v1312
    %v1314 = vmul.f32 %v1274, %v1299
    %v1315 = vmul.f32 %v1275, %v1301
    %v1316 = vmul.f32 %v1276, %v1303
    %v1317 = vmul.f32 %v1277, %v1305
    %v1318 = vmul.f32 %v1278, %v1307
    %v1319 = vmul.f32 %v1279, %v1309
    %v1320 = vmul.f32 %v1280, %v1311
    %v1321 = vmul.f32 %v1281, %v1313
    %v1322 = vsub.f32 1.0, %v1314
    %v1323 = vsub.f32 1.0, %v1315
    %v1324 = vsub.f32 1.0, %v1316
    %v1325 = vsub.f32 1.0, %v1317
    %v1326 = vsub.f32 1.0, %v1318
    %v1327 = vsub.f32 1.0, %v1319
    %v1328 = vsub.f32 1.0, %v1320
    %v1329 = vsub.f32 1.0, %v1321
    %vm1330 = vcmp.ge.f32.partialorder %v1058, 0.0
    %vm1331 = vcmp.ge.f32.partialorder %v1059, 0.0
    %vm1332 = vcmp.ge.f32.partialorder %v1060, 0.0
    %vm1333 = vcmp.ge.f32.partialorder %v1061, 0.0
    %vm1334 = vcmp.ge.f32.partialorder %v1062, 0.0
    %vm1335 = vcmp.ge.f32.partialorder %v1063, 0.0
    %vm1336 = vcmp.ge.f32.partialorder %v1064, 0.0
    %vm1337 = vcmp.ge.f32.partialorder %v1065, 0.0
    %v1338 = vsub.f32 0.0, %v1322
    %v1339 = vsub.f32 0.0, %v1323
    %v1340 = vsub.f32 0.0, %v1324
    %v1341 = vsub.f32 0.0, %v1325
    %v1342 = vsub.f32 0.0, %v1326
    %v1343 = vsub.f32 0.0, %v1327
    %v1344 = vsub.f32 0.0, %v1328
    %v1345 = vsub.f32 0.0, %v1329
    %v1346 = vsel %vm1330, %v1322, %v1338
    %v1347 = vsel %vm1331, %v1323, %v1339
    %v1348 = vsel %vm1332, %v1324, %v1340
    %v1349 = vsel %vm1333, %v1325, %v1341
    %v1350 = vsel %vm1334, %v1326, %v1342
    %v1351 = vsel %vm1335, %v1327, %v1343
    %v1352 = vsel %vm1336, %v1328, %v1344
    %v1353 = vsel %vm1337, %v1329, %v1345
    %v1354 = vadd.f32 %v1346, 1.0
    %v1355 = vadd.f32 %v1347, 1.0
    %v1356 = vadd.f32 %v1348, 1.0
    %v1357 = vadd.f32 %v1349, 1.0
    %v1358 = vadd.f32 %v1350, 1.0
    %v1359 = vadd.f32 %v1351, 1.0
    %v1360 = vadd.f32 %v1352, 1.0
    %v1361 = vadd.f32 %v1353, 1.0
    %v1362 = vmul.f32 %v1050, %v1354
    %v1363 = vmul.f32 %v1051, %v1355
    %v1364 = vmul.f32 %v1052, %v1356
    %v1365 = vmul.f32 %v1053, %v1357
    %v1366 = vmul.f32 %v1054, %v1358
    %v1367 = vmul.f32 %v1055, %v1359
    %v1368 = vmul.f32 %v1056, %v1360
    %v1369 = vmul.f32 %v1057, %v1361
    %v1371 = vsel %vm120, %v1362, 0
    %v1374 = vsel %vm120, %v1363, 0
    %v1377 = vsel %vm120, %v1364, 0
    %v1380 = vsel %vm120, %v1365, 0
    %v1383 = vsel %vm120, %v1366, 0
    %v1386 = vsel %vm120, %v1367, 0
    %v1389 = vsel %vm120, %v1368, 0
    %v1392 = vsel %vm120, %v1369, 0
    %1394 = vmatpush.msra.mxu0 0.0
    %1395 = vmatpush.msra.mxu0 0.0
    %1396 = vmatpush.msra.mxu0 0.0
    %1397 = vmatpush.msra.mxu0 0.0
    %1398 = vmatpush.msra.mxu0 0.0
    %1399 = vmatpush.msra.mxu0 0.0
    %1400 = vmatpush.msra.mxu0 0.0
    %1401 = vmatpush.msra.mxu0 0.0
    %1402 = vmatpush.msra.mxu0 0.0
    %1403 = vmatpush.msra.mxu0 0.0
    %1404 = vmatpush.msra.mxu0 0.0
    %1405 = vmatpush.msra.mxu0 0.0
    %1406 = vmatpush.msra.mxu0 %v105
    %1407 = vmatpush.msra.mxu0 %v104
    %1408 = vmatpush.msra.mxu0 %v103
    %1409 = vmatpush.msra.mxu0 %v102
    %1410 = vmatmul.f32.gmra.mxu0 %v1371
    %v1411 = vpop.f32.mrf.mxu0
    %v1412 = vadd.f32 0.0, %v1411
    %1413 = vmatmul.f32.gmra.mxu0 %v1374
    %v1414 = vpop.f32.mrf.mxu0
    %v1415 = vadd.f32 0.0, %v1414
    %1416 = vmatmul.f32.gmra.mxu0 %v1377
    %v1417 = vpop.f32.mrf.mxu0
    %v1418 = vadd.f32 0.0, %v1417
    %1419 = vmatmul.f32.gmra.mxu0 %v1380
    %v1420 = vpop.f32.mrf.mxu0
    %v1421 = vadd.f32 0.0, %v1420
    %1422 = vmatmul.f32.gmra.mxu0 %v1383
    %v1423 = vpop.f32.mrf.mxu0
    %v1424 = vadd.f32 0.0, %v1423
    %1425 = vmatmul.f32.gmra.mxu0 %v1386
    %v1426 = vpop.f32.mrf.mxu0
    %v1427 = vadd.f32 0.0, %v1426
    %1428 = vmatmul.f32.gmra.mxu0 %v1389
    %v1429 = vpop.f32.mrf.mxu0
    %v1430 = vadd.f32 0.0, %v1429
    %1431 = vmatmul.f32.gmra.mxu0 %v1392
    %v1432 = vpop.f32.mrf.mxu0
    %v1433 = vadd.f32 0.0, %v1432
    %1434 = vdwg.mxu0
    %v1435 = vadd.f32 %v782, %v1412
    %v1436 = vadd.f32 %v783, %v1415
    %v1437 = vadd.f32 %v784, %v1418
    %v1438 = vadd.f32 %v785, %v1421
    %v1439 = vadd.f32 %v786, %v1424
    %v1440 = vadd.f32 %v787, %v1427
    %v1441 = vadd.f32 %v788, %v1430
    %v1442 = vadd.f32 %v789, %v1433
    %v1443 = vperm.slane %v119, 0
    %v1444 = vadd.f32 %v1435, %v1443
    %v1445 = vadd.f32 %v1436, %v1443
    %v1446 = vadd.f32 %v1437, %v1443
    %v1447 = vadd.f32 %v1438, %v1443
    %v1448 = vadd.f32 %v1439, %v1443
    %v1449 = vadd.f32 %v1440, %v1443
    %v1450 = vadd.f32 %v1441, %v1443
    %v1451 = vadd.f32 %v1442, %v1443
    %s1452 = scalar_lea.vmem %s2, 192
    %v1453 = vld [vmem:[%s1452] sm:$0xff]
    %v1454 = vld [vmem:[%s1452 + $0x8] sm:$0xff]
    %v1455 = vld [vmem:[%s1452 + $0x10] sm:$0xff]
    %v1456 = vld [vmem:[%s1452 + $0x18] sm:$0xff]
    %v1457 = vld [vmem:[%s1452 + $0x20] sm:$0xff]
    %v1458 = vld [vmem:[%s1452 + $0x28] sm:$0xff]
    %v1459 = vld [vmem:[%s1452 + $0x30] sm:$0xff]
    %v1460 = vld [vmem:[%s1452 + $0x38] sm:$0xff]
    %v1461 = vld [vmem:[%s1452 + $0x40] sm:$0xff]
    %v1462 = vld [vmem:[%s1452 + $0x48] sm:$0xff]
    %v1463 = vld [vmem:[%s1452 + $0x50] sm:$0xff]
    %v1464 = vld [vmem:[%s1452 + $0x58] sm:$0xff]
    %v1465 = vld [vmem:[%s1452 + $0x60] sm:$0xff]
    %v1466 = vld [vmem:[%s1452 + $0x68] sm:$0xff]
    %v1467 = vld [vmem:[%s1452 + $0x70] sm:$0xff]
    %v1468 = vld [vmem:[%s1452 + $0x78] sm:$0xff]
    %v1469 = vld [vmem:[%s1452 + $0x80] sm:$0xff]
    %v1470 = vld [vmem:[%s1452 + $0x88] sm:$0xff]
    %v1471 = vld [vmem:[%s1452 + $0x90] sm:$0xff]
    %v1472 = vld [vmem:[%s1452 + $0x98] sm:$0xff]
    %v1473 = vld [vmem:[%s1452 + $0xa0] sm:$0xff]
    %v1474 = vld [vmem:[%s1452 + $0xa8] sm:$0xff]
    %v1475 = vld [vmem:[%s1452 + $0xb0] sm:$0xff]
    %v1476 = vld [vmem:[%s1452 + $0xb8] sm:$0xff]
    %s1477 = scalar_lea.vmem %s3, 8
    %v1478 = vld [vmem:[%s1477] sm:$0x1]
    %v1479 = vld [vmem:[%s1477 + $0x1] sm:$0x1]
    %v1480 = vld [vmem:[%s1477 + $0x2] sm:$0x1]
    %v1481 = vld [vmem:[%s1477 + $0x3] sm:$0x1]
    %v1482 = vld [vmem:[%s1477 + $0x4] sm:$0x1]
    %v1483 = vld [vmem:[%s1477 + $0x5] sm:$0x1]
    %v1484 = vsel %vm120, %v1444, 0.0
    %1485 = vadd.xlane.f32.xlu0 %v1484
    %v1486 = vpop.xlane.xlu0 %1485
    %v1487 = vsel %vm120, %v1445, 0.0
    %1488 = vadd.xlane.f32.xlu0 %v1487
    %v1489 = vpop.xlane.xlu0 %1488
    %v1490 = vsel %vm120, %v1446, 0.0
    %1491 = vadd.xlane.f32.xlu0 %v1490
    %v1492 = vpop.xlane.xlu0 %1491
    %v1493 = vsel %vm120, %v1447, 0.0
    %1494 = vadd.xlane.f32.xlu0 %v1493
    %v1495 = vpop.xlane.xlu0 %1494
    %v1496 = vsel %vm120, %v1448, 0.0
    %1497 = vadd.xlane.f32.xlu0 %v1496
    %v1498 = vpop.xlane.xlu0 %1497
    %v1499 = vsel %vm120, %v1449, 0.0
    %1500 = vadd.xlane.f32.xlu0 %v1499
    %v1501 = vpop.xlane.xlu0 %1500
    %v1502 = vsel %vm120, %v1450, 0.0
    %1503 = vadd.xlane.f32.xlu0 %v1502
    %v1504 = vpop.xlane.xlu0 %1503
    %v1505 = vsel %vm120, %v1451, 0.0
    %1506 = vadd.xlane.f32.xlu0 %v1505
    %v1507 = vpop.xlane.xlu0 %1506
    %v1508 = vmul.f32 %v1486, %v151
    %v1509 = vmul.f32 %v1489, %v151
    %v1510 = vmul.f32 %v1492, %v151
    %v1511 = vmul.f32 %v1495, %v151
    %v1512 = vmul.f32 %v1498, %v151
    %v1513 = vmul.f32 %v1501, %v151
    %v1514 = vmul.f32 %v1504, %v151
    %v1515 = vmul.f32 %v1507, %v151
    %v1516 = vsub.f32 %v1444, %v1508
    %v1517 = vsub.f32 %v1445, %v1509
    %v1518 = vsub.f32 %v1446, %v1510
    %v1519 = vsub.f32 %v1447, %v1511
    %v1520 = vsub.f32 %v1448, %v1512
    %v1521 = vsub.f32 %v1449, %v1513
    %v1522 = vsub.f32 %v1450, %v1514
    %v1523 = vsub.f32 %v1451, %v1515
    %v1524 = vmul.f32 %v1516, %v1516
    %v1525 = vmul.f32 %v1517, %v1517
    %v1526 = vmul.f32 %v1518, %v1518
    %v1527 = vmul.f32 %v1519, %v1519
    %v1528 = vmul.f32 %v1520, %v1520
    %v1529 = vmul.f32 %v1521, %v1521
    %v1530 = vmul.f32 %v1522, %v1522
    %v1531 = vmul.f32 %v1523, %v1523
    %v1532 = vsel %vm120, %v1524, 0.0
    %1533 = vadd.xlane.f32.xlu0 %v1532
    %v1534 = vpop.xlane.xlu0 %1533
    %v1535 = vsel %vm120, %v1525, 0.0
    %1536 = vadd.xlane.f32.xlu0 %v1535
    %v1537 = vpop.xlane.xlu0 %1536
    %v1538 = vsel %vm120, %v1526, 0.0
    %1539 = vadd.xlane.f32.xlu0 %v1538
    %v1540 = vpop.xlane.xlu0 %1539
    %v1541 = vsel %vm120, %v1527, 0.0
    %1542 = vadd.xlane.f32.xlu0 %v1541
    %v1543 = vpop.xlane.xlu0 %1542
    %v1544 = vsel %vm120, %v1528, 0.0
    %1545 = vadd.xlane.f32.xlu0 %v1544
    %v1546 = vpop.xlane.xlu0 %1545
    %v1547 = vsel %vm120, %v1529, 0.0
    %1548 = vadd.xlane.f32.xlu0 %v1547
    %v1549 = vpop.xlane.xlu0 %1548
    %v1550 = vsel %vm120, %v1530, 0.0
    %1551 = vadd.xlane.f32.xlu0 %v1550
    %v1552 = vpop.xlane.xlu0 %1551
    %v1553 = vsel %vm120, %v1531, 0.0
    %1554 = vadd.xlane.f32.xlu0 %v1553
    %v1555 = vpop.xlane.xlu0 %1554
    %v1556 = vmul.f32 %v1534, %v151
    %v1557 = vmul.f32 %v1537, %v151
    %v1558 = vmul.f32 %v1540, %v151
    %v1559 = vmul.f32 %v1543, %v151
    %v1560 = vmul.f32 %v1546, %v151
    %v1561 = vmul.f32 %v1549, %v151
    %v1562 = vmul.f32 %v1552, %v151
    %v1563 = vmul.f32 %v1555, %v151
    %v1564 = vadd.f32 %v1556, 1e-05
    %v1565 = vadd.f32 %v1557, 1e-05
    %v1566 = vadd.f32 %v1558, 1e-05
    %v1567 = vadd.f32 %v1559, 1e-05
    %v1568 = vadd.f32 %v1560, 1e-05
    %v1569 = vadd.f32 %v1561, 1e-05
    %v1570 = vadd.f32 %v1562, 1e-05
    %v1571 = vadd.f32 %v1563, 1e-05
    %v1572 = vrsqrt.pop %v1564
    %v1573 = vmul.f32 %v1572, %v1564
    %v1574 = vmul.f32 %v1573, %v1572
    %v1575 = vmul.f32 0.5, %v1574
    %v1576 = vsub.f32 1.5, %v1575
    %v1577 = vmul.f32 %v1572, %v1576
    %vm1578 = vweird.f32 %v1564
    %vm1579 = vweird.f32 %v1572
    %vm1580 = vmor %vm1578, %vm1579
    %v1581 = vsel %vm1580, %v1572, %v1577
    %v1582 = vrsqrt.pop %v1565
    %v1583 = vmul.f32 %v1582, %v1565
    %v1584 = vmul.f32 %v1583, %v1582
    %v1585 = vmul.f32 0.5, %v1584
    %v1586 = vsub.f32 1.5, %v1585
    %v1587 = vmul.f32 %v1582, %v1586
    %vm1588 = vweird.f32 %v1565
    %vm1589 = vweird.f32 %v1582
    %vm1590 = vmor %vm1588, %vm1589
    %v1591 = vsel %vm1590, %v1582, %v1587
    %v1592 = vrsqrt.pop %v1566
    %v1593 = vmul.f32 %v1592, %v1566
    %v1594 = vmul.f32 %v1593, %v1592
    %v1595 = vmul.f32 0.5, %v1594
    %v1596 = vsub.f32 1.5, %v1595
    %v1597 = vmul.f32 %v1592, %v1596
    %vm1598 = vweird.f32 %v1566
    %vm1599 = vweird.f32 %v1592
    %vm1600 = vmor %vm1598, %vm1599
    %v1601 = vsel %vm1600, %v1592, %v1597
    %v1602 = vrsqrt.pop %v1567
    %v1603 = vmul.f32 %v1602, %v1567
    %v1604 = vmul.f32 %v1603, %v1602
    %v1605 = vmul.f32 0.5, %v1604
    %v1606 = vsub.f32 1.5, %v1605
    %v1607 = vmul.f32 %v1602, %v1606
    %vm1608 = vweird.f32 %v1567
    %vm1609 = vweird.f32 %v1602
    %vm1610 = vmor %vm1608, %vm1609
    %v1611 = vsel %vm1610, %v1602, %v1607
    %v1612 = vrsqrt.pop %v1568
    %v1613 = vmul.f32 %v1612, %v1568
    %v1614 = vmul.f32 %v1613, %v1612
    %v1615 = vmul.f32 0.5, %v1614
    %v1616 = vsub.f32 1.5, %v1615
    %v1617 = vmul.f32 %v1612, %v1616
    %vm1618 = vweird.f32 %v1568
    %vm1619 = vweird.f32 %v1612
    %vm1620 = vmor %vm1618, %vm1619
    %v1621 = vsel %vm1620, %v1612, %v1617
    %v1622 = vrsqrt.pop %v1569
    %v1623 = vmul.f32 %v1622, %v1569
    %v1624 = vmul.f32 %v1623, %v1622
    %v1625 = vmul.f32 0.5, %v1624
    %v1626 = vsub.f32 1.5, %v1625
    %v1627 = vmul.f32 %v1622, %v1626
    %vm1628 = vweird.f32 %v1569
    %vm1629 = vweird.f32 %v1622
    %vm1630 = vmor %vm1628, %vm1629
    %v1631 = vsel %vm1630, %v1622, %v1627
    %v1632 = vrsqrt.pop %v1570
    %v1633 = vmul.f32 %v1632, %v1570
    %v1634 = vmul.f32 %v1633, %v1632
    %v1635 = vmul.f32 0.5, %v1634
    %v1636 = vsub.f32 1.5, %v1635
    %v1637 = vmul.f32 %v1632, %v1636
    %vm1638 = vweird.f32 %v1570
    %vm1639 = vweird.f32 %v1632
    %vm1640 = vmor %vm1638, %vm1639
    %v1641 = vsel %vm1640, %v1632, %v1637
    %v1642 = vrsqrt.pop %v1571
    %v1643 = vmul.f32 %v1642, %v1571
    %v1644 = vmul.f32 %v1643, %v1642
    %v1645 = vmul.f32 0.5, %v1644
    %v1646 = vsub.f32 1.5, %v1645
    %v1647 = vmul.f32 %v1642, %v1646
    %vm1648 = vweird.f32 %v1571
    %vm1649 = vweird.f32 %v1642
    %vm1650 = vmor %vm1648, %vm1649
    %v1651 = vsel %vm1650, %v1642, %v1647
    %v1652 = vmul.f32 %v1516, %v1581
    %v1653 = vmul.f32 %v1517, %v1591
    %v1654 = vmul.f32 %v1518, %v1601
    %v1655 = vmul.f32 %v1519, %v1611
    %v1656 = vmul.f32 %v1520, %v1621
    %v1657 = vmul.f32 %v1521, %v1631
    %v1658 = vmul.f32 %v1522, %v1641
    %v1659 = vmul.f32 %v1523, %v1651
    %v1660 = vperm.slane %v1478, 0
    %v1661 = vmul.f32 %v1652, %v1660
    %v1662 = vmul.f32 %v1653, %v1660
    %v1663 = vmul.f32 %v1654, %v1660
    %v1664 = vmul.f32 %v1655, %v1660
    %v1665 = vmul.f32 %v1656, %v1660
    %v1666 = vmul.f32 %v1657, %v1660
    %v1667 = vmul.f32 %v1658, %v1660
    %v1668 = vmul.f32 %v1659, %v1660
    %v1669 = vperm.slane %v1479, 0
    %v1670 = vadd.f32 %v1661, %v1669
    %v1671 = vadd.f32 %v1662, %v1669
    %v1672 = vadd.f32 %v1663, %v1669
    %v1673 = vadd.f32 %v1664, %v1669
    %v1674 = vadd.f32 %v1665, %v1669
    %v1675 = vadd.f32 %v1666, %v1669
    %v1676 = vadd.f32 %v1667, %v1669
    %v1677 = vadd.f32 %v1668, %v1669
    %v1679 = vsel %vm120, %v1453, 0
    %v1682 = vsel %vm120, %v1454, 0
    %v1685 = vsel %vm120, %v1455, 0
    %v1688 = vsel %vm120, %v1456, 0
    %1690 = vmatpush.msra.mxu0 0.0
    %1691 = vmatpush.msra.mxu0 0.0
    %1692 = vmatpush.msra.mxu0 0.0
    %1693 = vmatpush.msra.mxu0 0.0
    %1694 = vmatpush.msra.mxu0 0.0
    %1695 = vmatpush.msra.mxu0 0.0
    %1696 = vmatpush.msra.mxu0 0.0
    %1697 = vmatpush.msra.mxu0 0.0
    %1698 = vmatpush.msra.mxu0 0.0
    %1699 = vmatpush.msra.mxu0 0.0
    %1700 = vmatpush.msra.mxu0 0.0
    %1701 = vmatpush.msra.mxu0 0.0
    %1702 = vmatpush.msra.mxu0 %v1673
    %1703 = vmatpush.msra.mxu0 %v1672
    %1704 = vmatpush.msra.mxu0 %v1671
    %1705 = vmatpush.msra.mxu0 %v1670
    %1706 = vmatmul.f32.gmra.mxu0 %v1679
    %v1707 = vpop.f32.mrf.mxu0
    %v1708 = vadd.f32 %v1469, %v1707
    %1709 = vmatmul.f32.gmra.mxu0 %v1682
    %v1710 = vpop.f32.mrf.mxu0
    %v1711 = vadd.f32 %v1470, %v1710
    %1712 = vmatmul.f32.gmra.mxu0 %v1685
    %v1713 = vpop.f32.mrf.mxu0
    %v1714 = vadd.f32 %v1471, %v1713
    %1715 = vmatmul.f32.gmra.mxu0 %v1688
    %v1716 = vpop.f32.mrf.mxu0
    %v1717 = vadd.f32 %v1472, %v1716
    %1718 = vdwg.mxu0
    %v1719 = vmul.f32 %v1708, 0.5
    %v1720 = vmul.f32 %v1711, 0.5
    %v1721 = vmul.f32 %v1714, 0.5
    %v1722 = vmul.f32 %v1717, 0.5
    %v1723 = vmul.f32 %v1708, 0.70710677
    %v1724 = vmul.f32 %v1711, 0.70710677
    %v1725 = vmul.f32 %v1714, 0.70710677
    %v1726 = vmul.f32 %v1717, 0.70710677
    %v1727 = vand.u32 2147483647, %v1723
    %v1728 = vand.u32 2147483647, %v1724
    %v1729 = vand.u32 2147483647, %v1725
    %v1730 = vand.u32 2147483647, %v1726
    %v1731 = vmul.f32 %v1727, 0.3275911
    %v1732 = vmul.f32 %v1728, 0.3275911
    %v1733 = vmul.f32 %v1729, 0.3275911
    %v1734 = vmul.f32 %v1730, 0.3275911
    %v1735 = vadd.f32 %v1731, 1.0
    %v1736 = vadd.f32 %v1732, 1.0
    %v1737 = vadd.f32 %v1733, 1.0
    %v1738 = vadd.f32 %v1734, 1.0
    %v1739 = vrcp.pop %v1735
    %v1740 = vmul.f32 %v1735, %v1739
    %v1741 = vsub.f32 1.0, %v1740
    %v1742 = vmul.f32 %v1739, %v1741
    %v1743 = vadd.f32 %v1739, %v1742
    %vm1744 = vweird.f32 %v1735
    %vm1745 = vweird.f32 %v1739
    %vm1746 = vmor %vm1744, %vm1745
    %v1747 = vsel %vm1746, %v1739, %v1743
    %v1748 = vand.u32 2147483647, %v1735
    %vm1749 = vcmp.eq.f32.partialorder %v1748, 8.507059e+37
    %v1750 = vand.u32 %v1735, 2147483648
    %v1751 = vor.u32 1.1754944e-38, %v1750
    %v1752 = vsel %vm1749, %v1751, %v1747
    %v1753 = vmul.f32 1.0, %v1752
    %v1754 = vrcp.pop %v1736
    %v1755 = vmul.f32 %v1736, %v1754
    %v1756 = vsub.f32 1.0, %v1755
    %v1757 = vmul.f32 %v1754, %v1756
    %v1758 = vadd.f32 %v1754, %v1757
    %vm1759 = vweird.f32 %v1736
    %vm1760 = vweird.f32 %v1754
    %vm1761 = vmor %vm1759, %vm1760
    %v1762 = vsel %vm1761, %v1754, %v1758
    %v1763 = vand.u32 2147483647, %v1736
    %vm1764 = vcmp.eq.f32.partialorder %v1763, 8.507059e+37
    %v1765 = vand.u32 %v1736, 2147483648
    %v1766 = vor.u32 1.1754944e-38, %v1765
    %v1767 = vsel %vm1764, %v1766, %v1762
    %v1768 = vmul.f32 1.0, %v1767
    %v1769 = vrcp.pop %v1737
    %v1770 = vmul.f32 %v1737, %v1769
    %v1771 = vsub.f32 1.0, %v1770
    %v1772 = vmul.f32 %v1769, %v1771
    %v1773 = vadd.f32 %v1769, %v1772
    %vm1774 = vweird.f32 %v1737
    %vm1775 = vweird.f32 %v1769
    %vm1776 = vmor %vm1774, %vm1775
    %v1777 = vsel %vm1776, %v1769, %v1773
    %v1778 = vand.u32 2147483647, %v1737
    %vm1779 = vcmp.eq.f32.partialorder %v1778, 8.507059e+37
    %v1780 = vand.u32 %v1737, 2147483648
    %v1781 = vor.u32 1.1754944e-38, %v1780
    %v1782 = vsel %vm1779, %v1781, %v1777
    %v1783 = vmul.f32 1.0, %v1782
    %v1784 = vrcp.pop %v1738
    %v1785 = vmul.f32 %v1738, %v1784
    %v1786 = vsub.f32 1.0, %v1785
    %v1787 = vmul.f32 %v1784, %v1786
    %v1788 = vadd.f32 %v1784, %v1787
    %vm1789 = vweird.f32 %v1738
    %vm1790 = vweird.f32 %v1784
    %vm1791 = vmor %vm1789, %vm1790
    %v1792 = vsel %vm1791, %v1784, %v1788
    %v1793 = vand.u32 2147483647, %v1738
    %vm1794 = vcmp.eq.f32.partialorder %v1793, 8.507059e+37
    %v1795 = vand.u32 %v1738, 2147483648
    %v1796 = vor.u32 1.1754944e-38, %v1795
    %v1797 = vsel %vm1794, %v1796, %v1792
    %v1798 = vmul.f32 1.0, %v1797
    %v1799 = vmul.f32 %v1753, 1.0614054
    %v1800 = vmul.f32 %v1768, 1.0614054
    %v1801 = vmul.f32 %v1783, 1.0614054
    %v1802 = vmul.f32 %v1798, 1.0614054
    %v1803 = vadd.f32 %v1799, -1.4531521
    %v1804 = vadd.f32 %v1800, -1.4531521
    %v1805 = vadd.f32 %v1801, -1.4531521
    %v1806 = vadd.f32 %v1802, -1.4531521
    %v1807 = vmul.f32 %v1803, %v1753
    %v1808 = vmul.f32 %v1804, %v1768
    %v1809 = vmul.f32 %v1805, %v1783
    %v1810 = vmul.f32 %v1806, %v1798
    %v1811 = vadd.f32 %v1807, 1.4214138
    %v1812 = vadd.f32 %v1808, 1.4214138
    %v1813 = vadd.f32 %v1809, 1.4214138
    %v1814 = vadd.f32 %v1810, 1.4214138
    %v1815 = vmul.f32 %v1811, %v1753
    %v1816 = vmul.f32 %v1812, %v1768
    %v1817 = vmul.f32 %v1813, %v1783
    %v1818 = vmul.f32 %v1814, %v1798
    %v1819 = vadd.f32 %v1815, -0.28449672
    %v1820 = vadd.f32 %v1816, -0.28449672
    %v1821 = vadd.f32 %v1817, -0.28449672
    %v1822 = vadd.f32 %v1818, -0.28449672
    %v1823 = vmul.f32 %v1819, %v1753
    %v1824 = vmul.f32 %v1820, %v1768
    %v1825 = vmul.f32 %v1821, %v1783
    %v1826 = vmul.f32 %v1822, %v1798
    %v1827 = vadd.f32 %v1823, 0.2548296
    %v1828 = vadd.f32 %v1824, 0.2548296
    %v1829 = vadd.f32 %v1825, 0.2548296
    %v1830 = vadd.f32 %v1826, 0.2548296
    %v1831 = vmul.f32 %v1827, %v1753
    %v1832 = vmul.f32 %v1828, %v1768
    %v1833 = vmul.f32 %v1829, %v1783
    %v1834 = vmul.f32 %v1830, %v1798
    %v1835 = vsub.f32 0.0, %v1727
    %v1836 = vsub.f32 0.0, %v1728
    %v1837 = vsub.f32 0.0, %v1729
    %v1838 = vsub.f32 0.0, %v1730
    %v1839 = vmul.f32 %v1835, %v1727
    %v1840 = vmul.f32 %v1836, %v1728
    %v1841 = vmul.f32 %v1837, %v1729
    %v1842 = vmul.f32 %v1838, %v1730
    %v1843 = vmul.f32 %v1839, 1.442695
    %v1844 = vpow.pop %v1843
    %v1845 = vmul.f32 %v1840, 1.442695
    %v1846 = vpow.pop %v1845
    %v1847 = vmul.f32 %v1841, 1.442695
    %v1848 = vpow.pop %v1847
    %v1849 = vmul.f32 %v1842, 1.442695
    %v1850 = vpow.pop %v1849
    %v1851 = vmul.f32 %v1831, %v1844
    %v1852 = vmul.f32 %v1832, %v1846
    %v1853 = vmul.f32 %v1833, %v1848
    %v1854 = vmul.f32 %v1834, %v1850
    %v1855 = vsub.f32 1.0, %v1851
    %v1856 = vsub.f32 1.0, %v1852
    %v1857 = vsub.f32 1.0, %v1853
    %v1858 = vsub.f32 1.0, %v1854
    %vm1859 = vcmp.ge.f32.partialorder %v1723, 0.0
    %vm1860 = vcmp.ge.f32.partialorder %v1724, 0.0
    %vm1861 = vcmp.ge.f32.partialorder %v1725, 0.0
    %vm1862 = vcmp.ge.f32.partialorder %v1726, 0.0
    %v1863 = vsub.f32 0.0, %v1855
    %v1864 = vsub.f32 0.0, %v1856
    %v1865 = vsub.f32 0.0, %v1857
    %v1866 = vsub.f32 0.0, %v1858
    %v1867 = vsel %vm1859, %v1855, %v1863
    %v1868 = vsel %vm1860, %v1856, %v1864
    %v1869 = vsel %vm1861, %v1857, %v1865
    %v1870 = vsel %vm1862, %v1858, %v1866
    %v1871 = vadd.f32 %v1867, 1.0
    %v1872 = vadd.f32 %v1868, 1.0
    %v1873 = vadd.f32 %v1869, 1.0
    %v1874 = vadd.f32 %v1870, 1.0
    %v1875 = vmul.f32 %v1719, %v1871
    %v1876 = vmul.f32 %v1720, %v1872
    %v1877 = vmul.f32 %v1721, %v1873
    %v1878 = vmul.f32 %v1722, %v1874
    %v1880 = vsel %vm120, %v1457, 0
    %v1883 = vsel %vm120, %v1458, 0
    %v1886 = vsel %vm120, %v1459, 0
    %v1889 = vsel %vm120, %v1460, 0
    %1891 = vmatpush.msra.mxu0 0.0
    %1892 = vmatpush.msra.mxu0 0.0
    %1893 = vmatpush.msra.mxu0 0.0
    %1894 = vmatpush.msra.mxu0 0.0
    %1895 = vmatpush.msra.mxu0 0.0
    %1896 = vmatpush.msra.mxu0 0.0
    %1897 = vmatpush.msra.mxu0 0.0
    %1898 = vmatpush.msra.mxu0 0.0
    %1899 = vmatpush.msra.mxu0 0.0
    %1900 = vmatpush.msra.mxu0 0.0
    %1901 = vmatpush.msra.mxu0 0.0
    %1902 = vmatpush.msra.mxu0 0.0
    %1903 = vmatpush.msra.mxu0 %v1878
    %1904 = vmatpush.msra.mxu0 %v1877
    %1905 = vmatpush.msra.mxu0 %v1876
    %1906 = vmatpush.msra.mxu0 %v1875
    %1907 = vmatmul.f32.gmra.mxu0 %v1880
    %v1908 = vpop.f32.mrf.mxu0
    %v1909 = vadd.f32 %v1473, %v1908
    %1910 = vmatmul.f32.gmra.mxu0 %v1883
    %v1911 = vpop.f32.mrf.mxu0
    %v1912 = vadd.f32 %v1474, %v1911
    %1913 = vmatmul.f32.gmra.mxu0 %v1886
    %v1914 = vpop.f32.mrf.mxu0
    %v1915 = vadd.f32 %v1475, %v1914
    %1916 = vmatmul.f32.gmra.mxu0 %v1889
    %v1917 = vpop.f32.mrf.mxu0
    %v1918 = vadd.f32 %v1476, %v1917
    %1919 = vdwg.mxu0
    %1920 = vmatpush.msra.mxu0 0.0
    %1921 = vmatpush.msra.mxu0 0.0
    %1922 = vmatpush.msra.mxu0 0.0
    %1923 = vmatpush.msra.mxu0 0.0
    %1924 = vmatpush.msra.mxu0 0.0
    %1925 = vmatpush.msra.mxu0 0.0
    %1926 = vmatpush.msra.mxu0 0.0
    %1927 = vmatpush.msra.mxu0 0.0
    %1928 = vmatpush.msra.mxu0 0.0
    %1929 = vmatpush.msra.mxu0 0.0
    %1930 = vmatpush.msra.mxu0 0.0
    %1931 = vmatpush.msra.mxu0 0.0
    %1932 = vmatpush.msra.mxu0 %v1677
    %1933 = vmatpush.msra.mxu0 %v1676
    %1934 = vmatpush.msra.mxu0 %v1675
    %1935 = vmatpush.msra.mxu0 %v1674
    %1936 = vmatmul.f32.gmra.mxu0 %v1679
    %v1937 = vpop.f32.mrf.mxu0
    %v1938 = vadd.f32 %v1469, %v1937
    %1939 = vmatmul.f32.gmra.mxu0 %v1682
    %v1940 = vpop.f32.mrf.mxu0
    %v1941 = vadd.f32 %v1470, %v1940
    %1942 = vmatmul.f32.gmra.mxu0 %v1685
    %v1943 = vpop.f32.mrf.mxu0
    %v1944 = vadd.f32 %v1471, %v1943
    %1945 = vmatmul.f32.gmra.mxu0 %v1688
    %v1946 = vpop.f32.mrf.mxu0
    %v1947 = vadd.f32 %v1472, %v1946
    %1948 = vdwg.mxu0
    %v1949 = vmul.f32 %v1938, 0.5
    %v1950 = vmul.f32 %v1941, 0.5
    %v1951 = vmul.f32 %v1944, 0.5
    %v1952 = vmul.f32 %v1947, 0.5
    %v1953 = vmul.f32 %v1938, 0.70710677
    %v1954 = vmul.f32 %v1941, 0.70710677
    %v1955 = vmul.f32 %v1944, 0.70710677
    %v1956 = vmul.f32 %v1947, 0.70710677
    %v1957 = vand.u32 2147483647, %v1953
    %v1958 = vand.u32 2147483647, %v1954
    %v1959 = vand.u32 2147483647, %v1955
    %v1960 = vand.u32 2147483647, %v1956
    %v1961 = vmul.f32 %v1957, 0.3275911
    %v1962 = vmul.f32 %v1958, 0.3275911
    %v1963 = vmul.f32 %v1959, 0.3275911
    %v1964 = vmul.f32 %v1960, 0.3275911
    %v1965 = vadd.f32 %v1961, 1.0
    %v1966 = vadd.f32 %v1962, 1.0
    %v1967 = vadd.f32 %v1963, 1.0
    %v1968 = vadd.f32 %v1964, 1.0
    %v1969 = vrcp.pop %v1965
    %v1970 = vmul.f32 %v1965, %v1969
    %v1971 = vsub.f32 1.0, %v1970
    %v1972 = vmul.f32 %v1969, %v1971
    %v1973 = vadd.f32 %v1969, %v1972
    %vm1974 = vweird.f32 %v1965
    %vm1975 = vweird.f32 %v1969
    %vm1976 = vmor %vm1974, %vm1975
    %v1977 = vsel %vm1976, %v1969, %v1973
    %v1978 = vand.u32 2147483647, %v1965
    %vm1979 = vcmp.eq.f32.partialorder %v1978, 8.507059e+37
    %v1980 = vand.u32 %v1965, 2147483648
    %v1981 = vor.u32 1.1754944e-38, %v1980
    %v1982 = vsel %vm1979, %v1981, %v1977
    %v1983 = vmul.f32 1.0, %v1982
    %v1984 = vrcp.pop %v1966
    %v1985 = vmul.f32 %v1966, %v1984
    %v1986 = vsub.f32 1.0, %v1985
    %v1987 = vmul.f32 %v1984, %v1986
    %v1988 = vadd.f32 %v1984, %v1987
    %vm1989 = vweird.f32 %v1966
    %vm1990 = vweird.f32 %v1984
    %vm1991 = vmor %vm1989, %vm1990
    %v1992 = vsel %vm1991, %v1984, %v1988
    %v1993 = vand.u32 2147483647, %v1966
    %vm1994 = vcmp.eq.f32.partialorder %v1993, 8.507059e+37
    %v1995 = vand.u32 %v1966, 2147483648
    %v1996 = vor.u32 1.1754944e-38, %v1995
    %v1997 = vsel %vm1994, %v1996, %v1992
    %v1998 = vmul.f32 1.0, %v1997
    %v1999 = vrcp.pop %v1967
    %v2000 = vmul.f32 %v1967, %v1999
    %v2001 = vsub.f32 1.0, %v2000
    %v2002 = vmul.f32 %v1999, %v2001
    %v2003 = vadd.f32 %v1999, %v2002
    %vm2004 = vweird.f32 %v1967
    %vm2005 = vweird.f32 %v1999
    %vm2006 = vmor %vm2004, %vm2005
    %v2007 = vsel %vm2006, %v1999, %v2003
    %v2008 = vand.u32 2147483647, %v1967
    %vm2009 = vcmp.eq.f32.partialorder %v2008, 8.507059e+37
    %v2010 = vand.u32 %v1967, 2147483648
    %v2011 = vor.u32 1.1754944e-38, %v2010
    %v2012 = vsel %vm2009, %v2011, %v2007
    %v2013 = vmul.f32 1.0, %v2012
    %v2014 = vrcp.pop %v1968
    %v2015 = vmul.f32 %v1968, %v2014
    %v2016 = vsub.f32 1.0, %v2015
    %v2017 = vmul.f32 %v2014, %v2016
    %v2018 = vadd.f32 %v2014, %v2017
    %vm2019 = vweird.f32 %v1968
    %vm2020 = vweird.f32 %v2014
    %vm2021 = vmor %vm2019, %vm2020
    %v2022 = vsel %vm2021, %v2014, %v2018
    %v2023 = vand.u32 2147483647, %v1968
    %vm2024 = vcmp.eq.f32.partialorder %v2023, 8.507059e+37
    %v2025 = vand.u32 %v1968, 2147483648
    %v2026 = vor.u32 1.1754944e-38, %v2025
    %v2027 = vsel %vm2024, %v2026, %v2022
    %v2028 = vmul.f32 1.0, %v2027
    %v2029 = vmul.f32 %v1983, 1.0614054
    %v2030 = vmul.f32 %v1998, 1.0614054
    %v2031 = vmul.f32 %v2013, 1.0614054
    %v2032 = vmul.f32 %v2028, 1.0614054
    %v2033 = vadd.f32 %v2029, -1.4531521
    %v2034 = vadd.f32 %v2030, -1.4531521
    %v2035 = vadd.f32 %v2031, -1.4531521
    %v2036 = vadd.f32 %v2032, -1.4531521
    %v2037 = vmul.f32 %v2033, %v1983
    %v2038 = vmul.f32 %v2034, %v1998
    %v2039 = vmul.f32 %v2035, %v2013
    %v2040 = vmul.f32 %v2036, %v2028
    %v2041 = vadd.f32 %v2037, 1.4214138
    %v2042 = vadd.f32 %v2038, 1.4214138
    %v2043 = vadd.f32 %v2039, 1.4214138
    %v2044 = vadd.f32 %v2040, 1.4214138
    %v2045 = vmul.f32 %v2041, %v1983
    %v2046 = vmul.f32 %v2042, %v1998
    %v2047 = vmul.f32 %v2043, %v2013
    %v2048 = vmul.f32 %v2044, %v2028
    %v2049 = vadd.f32 %v2045, -0.28449672
    %v2050 = vadd.f32 %v2046, -0.28449672
    %v2051 = vadd.f32 %v2047, -0.28449672
    %v2052 = vadd.f32 %v2048, -0.28449672
    %v2053 = vmul.f32 %v2049, %v1983
    %v2054 = vmul.f32 %v2050, %v1998
    %v2055 = vmul.f32 %v2051, %v2013
    %v2056 = vmul.f32 %v2052, %v2028
    %v2057 = vadd.f32 %v2053, 0.2548296
    %v2058 = vadd.f32 %v2054, 0.2548296
    %v2059 = vadd.f32 %v2055, 0.2548296
    %v2060 = vadd.f32 %v2056, 0.2548296
    %v2061 = vmul.f32 %v2057, %v1983
    %v2062 = vmul.f32 %v2058, %v1998
    %v2063 = vmul.f32 %v2059, %v2013
    %v2064 = vmul.f32 %v2060, %v2028
    %v2065 = vsub.f32 0.0, %v1957
    %v2066 = vsub.f32 0.0, %v1958
    %v2067 = vsub.f32 0.0, %v1959
    %v2068 = vsub.f32 0.0, %v1960
    %v2069 = vmul.f32 %v2065, %v1957
    %v2070 = vmul.f32 %v2066, %v1958
    %v2071 = vmul.f32 %v2067, %v1959
    %v2072 = vmul.f32 %v2068, %v1960
    %v2073 = vmul.f32 %v2069, 1.442695
    %v2074 = vpow.pop %v2073
    %v2075 = vmul.f32 %v2070, 1.442695
    %v2076 = vpow.pop %v2075
    %v2077 = vmul.f32 %v2071, 1.442695
    %v2078 = vpow.pop %v2077
    %v2079 = vmul.f32 %v2072, 1.442695
    %v2080 = vpow.pop %v2079
    %v2081 = vmul.f32 %v2061, %v2074
    %v2082 = vmul.f32 %v2062, %v2076
    %v2083 = vmul.f32 %v2063, %v2078
    %v2084 = vmul.f32 %v2064, %v2080
    %v2085 = vsub.f32 1.0, %v2081
    %v2086 = vsub.f32 1.0, %v2082
    %v2087 = vsub.f32 1.0, %v2083
    %v2088 = vsub.f32 1.0, %v2084
    %vm2089 = vcmp.ge.f32.partialorder %v1953, 0.0
    %vm2090 = vcmp.ge.f32.partialorder %v1954, 0.0
    %vm2091 = vcmp.ge.f32.partialorder %v1955, 0.0
    %vm2092 = vcmp.ge.f32.partialorder %v1956, 0.0
    %v2093 = vsub.f32 0.0, %v2085
    %v2094 = vsub.f32 0.0, %v2086
    %v2095 = vsub.f32 0.0, %v2087
    %v2096 = vsub.f32 0.0, %v2088
    %v2097 = vsel %vm2089, %v2085, %v2093
    %v2098 = vsel %vm2090, %v2086, %v2094
    %v2099 = vsel %vm2091, %v2087, %v2095
    %v2100 = vsel %vm2092, %v2088, %v2096
    %v2101 = vadd.f32 %v2097, 1.0
    %v2102 = vadd.f32 %v2098, 1.0
    %v2103 = vadd.f32 %v2099, 1.0
    %v2104 = vadd.f32 %v2100, 1.0
    %v2105 = vmul.f32 %v1949, %v2101
    %v2106 = vmul.f32 %v1950, %v2102
    %v2107 = vmul.f32 %v1951, %v2103
    %v2108 = vmul.f32 %v1952, %v2104
    %2109 = vmatpush.msra.mxu0 0.0
    %2110 = vmatpush.msra.mxu0 0.0
    %2111 = vmatpush.msra.mxu0 0.0
    %2112 = vmatpush.msra.mxu0 0.0
    %2113 = vmatpush.msra.mxu0 0.0
    %2114 = vmatpush.msra.mxu0 0.0
    %2115 = vmatpush.msra.mxu0 0.0
    %2116 = vmatpush.msra.mxu0 0.0
    %2117 = vmatpush.msra.mxu0 0.0
    %2118 = vmatpush.msra.mxu0 0.0
    %2119 = vmatpush.msra.mxu0 0.0
    %2120 = vmatpush.msra.mxu0 0.0
    %2121 = vmatpush.msra.mxu0 %v2108
    %2122 = vmatpush.msra.mxu0 %v2107
    %2123 = vmatpush.msra.mxu0 %v2106
    %2124 = vmatpush.msra.mxu0 %v2105
    %2125 = vmatmul.f32.gmra.mxu0 %v1880
    %v2126 = vpop.f32.mrf.mxu0
    %v2127 = vadd.f32 %v1473, %v2126
    %2128 = vmatmul.f32.gmra.mxu0 %v1883
    %v2129 = vpop.f32.mrf.mxu0
    %v2130 = vadd.f32 %v1474, %v2129
    %2131 = vmatmul.f32.gmra.mxu0 %v1886
    %v2132 = vpop.f32.mrf.mxu0
    %v2133 = vadd.f32 %v1475, %v2132
    %2134 = vmatmul.f32.gmra.mxu0 %v1889
    %v2135 = vpop.f32.mrf.mxu0
    %v2136 = vadd.f32 %v1476, %v2135
    %2137 = vdwg.mxu0
    %v2138 = vadd.f32 %v1444, %v1909
    %v2139 = vadd.f32 %v1445, %v1912
    %v2140 = vadd.f32 %v1446, %v1915
    %v2141 = vadd.f32 %v1447, %v1918
    %v2142 = vadd.f32 %v1448, %v2127
    %v2143 = vadd.f32 %v1449, %v2130
    %v2144 = vadd.f32 %v1450, %v2133
    %v2145 = vadd.f32 %v1451, %v2136
    %v2146 = vsel %vm120, %v2138, 0.0
    %2147 = vadd.xlane.f32.xlu0 %v2146
    %v2148 = vpop.xlane.xlu0 %2147
    %v2149 = vsel %vm120, %v2139, 0.0
    %2150 = vadd.xlane.f32.xlu0 %v2149
    %v2151 = vpop.xlane.xlu0 %2150
    %v2152 = vsel %vm120, %v2140, 0.0
    %2153 = vadd.xlane.f32.xlu0 %v2152
    %v2154 = vpop.xlane.xlu0 %2153
    %v2155 = vsel %vm120, %v2141, 0.0
    %2156 = vadd.xlane.f32.xlu0 %v2155
    %v2157 = vpop.xlane.xlu0 %2156
    %v2158 = vsel %vm120, %v2142, 0.0
    %2159 = vadd.xlane.f32.xlu0 %v2158
    %v2160 = vpop.xlane.xlu0 %2159
    %v2161 = vsel %vm120, %v2143, 0.0
    %2162 = vadd.xlane.f32.xlu0 %v2161
    %v2163 = vpop.xlane.xlu0 %2162
    %v2164 = vsel %vm120, %v2144, 0.0
    %2165 = vadd.xlane.f32.xlu0 %v2164
    %v2166 = vpop.xlane.xlu0 %2165
    %v2167 = vsel %vm120, %v2145, 0.0
    %2168 = vadd.xlane.f32.xlu0 %v2167
    %v2169 = vpop.xlane.xlu0 %2168
    %v2170 = vmul.f32 %v2148, %v151
    %v2171 = vmul.f32 %v2151, %v151
    %v2172 = vmul.f32 %v2154, %v151
    %v2173 = vmul.f32 %v2157, %v151
    %v2174 = vmul.f32 %v2160, %v151
    %v2175 = vmul.f32 %v2163, %v151
    %v2176 = vmul.f32 %v2166, %v151
    %v2177 = vmul.f32 %v2169, %v151
    %v2178 = vsub.f32 %v2138, %v2170
    %v2179 = vsub.f32 %v2139, %v2171
    %v2180 = vsub.f32 %v2140, %v2172
    %v2181 = vsub.f32 %v2141, %v2173
    %v2182 = vsub.f32 %v2142, %v2174
    %v2183 = vsub.f32 %v2143, %v2175
    %v2184 = vsub.f32 %v2144, %v2176
    %v2185 = vsub.f32 %v2145, %v2177
    %v2186 = vmul.f32 %v2178, %v2178
    %v2187 = vmul.f32 %v2179, %v2179
    %v2188 = vmul.f32 %v2180, %v2180
    %v2189 = vmul.f32 %v2181, %v2181
    %v2190 = vmul.f32 %v2182, %v2182
    %v2191 = vmul.f32 %v2183, %v2183
    %v2192 = vmul.f32 %v2184, %v2184
    %v2193 = vmul.f32 %v2185, %v2185
    %v2194 = vsel %vm120, %v2186, 0.0
    %2195 = vadd.xlane.f32.xlu0 %v2194
    %v2196 = vpop.xlane.xlu0 %2195
    %v2197 = vsel %vm120, %v2187, 0.0
    %2198 = vadd.xlane.f32.xlu0 %v2197
    %v2199 = vpop.xlane.xlu0 %2198
    %v2200 = vsel %vm120, %v2188, 0.0
    %2201 = vadd.xlane.f32.xlu0 %v2200
    %v2202 = vpop.xlane.xlu0 %2201
    %v2203 = vsel %vm120, %v2189, 0.0
    %2204 = vadd.xlane.f32.xlu0 %v2203
    %v2205 = vpop.xlane.xlu0 %2204
    %v2206 = vsel %vm120, %v2190, 0.0
    %2207 = vadd.xlane.f32.xlu0 %v2206
    %v2208 = vpop.xlane.xlu0 %2207
    %v2209 = vsel %vm120, %v2191, 0.0
    %2210 = vadd.xlane.f32.xlu0 %v2209
    %v2211 = vpop.xlane.xlu0 %2210
    %v2212 = vsel %vm120, %v2192, 0.0
    %2213 = vadd.xlane.f32.xlu0 %v2212
    %v2214 = vpop.xlane.xlu0 %2213
    %v2215 = vsel %vm120, %v2193, 0.0
    %2216 = vadd.xlane.f32.xlu0 %v2215
    %v2217 = vpop.xlane.xlu0 %2216
    %v2218 = vmul.f32 %v2196, %v151
    %v2219 = vmul.f32 %v2199, %v151
    %v2220 = vmul.f32 %v2202, %v151
    %v2221 = vmul.f32 %v2205, %v151
    %v2222 = vmul.f32 %v2208, %v151
    %v2223 = vmul.f32 %v2211, %v151
    %v2224 = vmul.f32 %v2214, %v151
    %v2225 = vmul.f32 %v2217, %v151
    %v2226 = vadd.f32 %v2218, 1e-05
    %v2227 = vadd.f32 %v2219, 1e-05
    %v2228 = vadd.f32 %v2220, 1e-05
    %v2229 = vadd.f32 %v2221, 1e-05
    %v2230 = vadd.f32 %v2222, 1e-05
    %v2231 = vadd.f32 %v2223, 1e-05
    %v2232 = vadd.f32 %v2224, 1e-05
    %v2233 = vadd.f32 %v2225, 1e-05
    %v2234 = vrsqrt.pop %v2226
    %v2235 = vmul.f32 %v2234, %v2226
    %v2236 = vmul.f32 %v2235, %v2234
    %v2237 = vmul.f32 0.5, %v2236
    %v2238 = vsub.f32 1.5, %v2237
    %v2239 = vmul.f32 %v2234, %v2238
    %vm2240 = vweird.f32 %v2226
    %vm2241 = vweird.f32 %v2234
    %vm2242 = vmor %vm2240, %vm2241
    %v2243 = vsel %vm2242, %v2234, %v2239
    %v2244 = vrsqrt.pop %v2227
    %v2245 = vmul.f32 %v2244, %v2227
    %v2246 = vmul.f32 %v2245, %v2244
    %v2247 = vmul.f32 0.5, %v2246
    %v2248 = vsub.f32 1.5, %v2247
    %v2249 = vmul.f32 %v2244, %v2248
    %vm2250 = vweird.f32 %v2227
    %vm2251 = vweird.f32 %v2244
    %vm2252 = vmor %vm2250, %vm2251
    %v2253 = vsel %vm2252, %v2244, %v2249
    %v2254 = vrsqrt.pop %v2228
    %v2255 = vmul.f32 %v2254, %v2228
    %v2256 = vmul.f32 %v2255, %v2254
    %v2257 = vmul.f32 0.5, %v2256
    %v2258 = vsub.f32 1.5, %v2257
    %v2259 = vmul.f32 %v2254, %v2258
    %vm2260 = vweird.f32 %v2228
    %vm2261 = vweird.f32 %v2254
    %vm2262 = vmor %vm2260, %vm2261
    %v2263 = vsel %vm2262, %v2254, %v2259
    %v2264 = vrsqrt.pop %v2229
    %v2265 = vmul.f32 %v2264, %v2229
    %v2266 = vmul.f32 %v2265, %v2264
    %v2267 = vmul.f32 0.5, %v2266
    %v2268 = vsub.f32 1.5, %v2267
    %v2269 = vmul.f32 %v2264, %v2268
    %vm2270 = vweird.f32 %v2229
    %vm2271 = vweird.f32 %v2264
    %vm2272 = vmor %vm2270, %vm2271
    %v2273 = vsel %vm2272, %v2264, %v2269
    %v2274 = vrsqrt.pop %v2230
    %v2275 = vmul.f32 %v2274, %v2230
    %v2276 = vmul.f32 %v2275, %v2274
    %v2277 = vmul.f32 0.5, %v2276
    %v2278 = vsub.f32 1.5, %v2277
    %v2279 = vmul.f32 %v2274, %v2278
    %vm2280 = vweird.f32 %v2230
    %vm2281 = vweird.f32 %v2274
    %vm2282 = vmor %vm2280, %vm2281
    %v2283 = vsel %vm2282, %v2274, %v2279
    %v2284 = vrsqrt.pop %v2231
    %v2285 = vmul.f32 %v2284, %v2231
    %v2286 = vmul.f32 %v2285, %v2284
    %v2287 = vmul.f32 0.5, %v2286
    %v2288 = vsub.f32 1.5, %v2287
    %v2289 = vmul.f32 %v2284, %v2288
    %vm2290 = vweird.f32 %v2231
    %vm2291 = vweird.f32 %v2284
    %vm2292 = vmor %vm2290, %vm2291
    %v2293 = vsel %vm2292, %v2284, %v2289
    %v2294 = vrsqrt.pop %v2232
    %v2295 = vmul.f32 %v2294, %v2232
    %v2296 = vmul.f32 %v2295, %v2294
    %v2297 = vmul.f32 0.5, %v2296
    %v2298 = vsub.f32 1.5, %v2297
    %v2299 = vmul.f32 %v2294, %v2298
    %vm2300 = vweird.f32 %v2232
    %vm2301 = vweird.f32 %v2294
    %vm2302 = vmor %vm2300, %vm2301
    %v2303 = vsel %vm2302, %v2294, %v2299
    %v2304 = vrsqrt.pop %v2233
    %v2305 = vmul.f32 %v2304, %v2233
    %v2306 = vmul.f32 %v2305, %v2304
    %v2307 = vmul.f32 0.5, %v2306
    %v2308 = vsub.f32 1.5, %v2307
    %v2309 = vmul.f32 %v2304, %v2308
    %vm2310 = vweird.f32 %v2233
    %vm2311 = vweird.f32 %v2304
    %vm2312 = vmor %vm2310, %vm2311
    %v2313 = vsel %vm2312, %v2304, %v2309
    %v2314 = vmul.f32 %v2178, %v2243
    %v2315 = vmul.f32 %v2179, %v2253
    %v2316 = vmul.f32 %v2180, %v2263
    %v2317 = vmul.f32 %v2181, %v2273
    %v2318 = vmul.f32 %v2182, %v2283
    %v2319 = vmul.f32 %v2183, %v2293
    %v2320 = vmul.f32 %v2184, %v2303
    %v2321 = vmul.f32 %v2185, %v2313
    %v2322 = vperm.slane %v1480, 0
    %v2323 = vmul.f32 %v2314, %v2322
    %v2324 = vmul.f32 %v2315, %v2322
    %v2325 = vmul.f32 %v2316, %v2322
    %v2326 = vmul.f32 %v2317, %v2322
    %v2327 = vmul.f32 %v2318, %v2322
    %v2328 = vmul.f32 %v2319, %v2322
    %v2329 = vmul.f32 %v2320, %v2322
    %v2330 = vmul.f32 %v2321, %v2322
    %v2331 = vperm.slane %v1481, 0
    %v2332 = vadd.f32 %v2323, %v2331
    %v2333 = vadd.f32 %v2324, %v2331
    %v2334 = vadd.f32 %v2325, %v2331
    %v2335 = vadd.f32 %v2326, %v2331
    %v2336 = vadd.f32 %v2327, %v2331
    %v2337 = vadd.f32 %v2328, %v2331
    %v2338 = vadd.f32 %v2329, %v2331
    %v2339 = vadd.f32 %v2330, %v2331
    %v2340 = vperm.slane %v1482, 0
    %v2342 = vsel %vm120, %v2332, 0
    %v2345 = vsel %vm120, %v2333, 0
    %v2348 = vsel %vm120, %v2334, 0
    %v2351 = vsel %vm120, %v2335, 0
    %v2354 = vsel %vm120, %v2336, 0
    %v2357 = vsel %vm120, %v2337, 0
    %v2360 = vsel %vm120, %v2338, 0
    %v2363 = vsel %vm120, %v2339, 0
    %2365 = vmatpush.msra.mxu0 0.0
    %2366 = vmatpush.msra.mxu0 0.0
    %2367 = vmatpush.msra.mxu0 0.0
    %2368 = vmatpush.msra.mxu0 0.0
    %2369 = vmatpush.msra.mxu0 0.0
    %2370 = vmatpush.msra.mxu0 0.0
    %2371 = vmatpush.msra.mxu0 0.0
    %2372 = vmatpush.msra.mxu0 0.0
    %2373 = vmatpush.msra.mxu0 0.0
    %2374 = vmatpush.msra.mxu0 0.0
    %2375 = vmatpush.msra.mxu0 0.0
    %2376 = vmatpush.msra.mxu0 0.0
    %2377 = vmatpush.msra.mxu0 %v1464
    %2378 = vmatpush.msra.mxu0 %v1463
    %2379 = vmatpush.msra.mxu0 %v1462
    %2380 = vmatpush.msra.mxu0 %v1461
    %2381 = vmatmul.f32.gmra.mxu0 %v2342
    %v2382 = vpop.f32.mrf.mxu0
    %v2383 = vadd.f32 %v2340, %v2382
    %2384 = vmatmul.f32.gmra.mxu0 %v2345
    %v2385 = vpop.f32.mrf.mxu0
    %v2386 = vadd.f32 %v2340, %v2385
    %2387 = vmatmul.f32.gmra.mxu0 %v2348
    %v2388 = vpop.f32.mrf.mxu0
    %v2389 = vadd.f32 %v2340, %v2388
    %2390 = vmatmul.f32.gmra.mxu0 %v2351
    %v2391 = vpop.f32.mrf.mxu0
    %v2392 = vadd.f32 %v2340, %v2391
    %2393 = vmatmul.f32.gmra.mxu0 %v2354
    %v2394 = vpop.f32.mrf.mxu0
    %v2395 = vadd.f32 %v2340, %v2394
    %2396 = vmatmul.f32.gmra.mxu0 %v2357
    %v2397 = vpop.f32.mrf.mxu0
    %v2398 = vadd.f32 %v2340, %v2397
    %2399 = vmatmul.f32.gmra.mxu0 %v2360
    %v2400 = vpop.f32.mrf.mxu0
    %v2401 = vadd.f32 %v2340, %v2400
    %2402 = vmatmul.f32.gmra.mxu0 %v2363
    %v2403 = vpop.f32.mrf.mxu0
    %v2404 = vadd.f32 %v2340, %v2403
    %2405 = vdwg.mxu0
    %v2406 = vmul.f32 %v2383, 0.5
    %v2407 = vmul.f32 %v2386, 0.5
    %v2408 = vmul.f32 %v2389, 0.5
    %v2409 = vmul.f32 %v2392, 0.5
    %v2410 = vmul.f32 %v2395, 0.5
    %v2411 = vmul.f32 %v2398, 0.5
    %v2412 = vmul.f32 %v2401, 0.5
    %v2413 = vmul.f32 %v2404, 0.5
    %v2414 = vmul.f32 %v2383, 0.70710677
    %v2415 = vmul.f32 %v2386, 0.70710677
    %v2416 = vmul.f32 %v2389, 0.70710677
    %v2417 = vmul.f32 %v2392, 0.70710677
    %v2418 = vmul.f32 %v2395, 0.70710677
    %v2419 = vmul.f32 %v2398, 0.70710677
    %v2420 = vmul.f32 %v2401, 0.70710677
    %v2421 = vmul.f32 %v2404, 0.70710677
    %v2422 = vand.u32 2147483647, %v2414
    %v2423 = vand.u32 2147483647, %v2415
    %v2424 = vand.u32 2147483647, %v2416
    %v2425 = vand.u32 2147483647, %v2417
    %v2426 = vand.u32 2147483647, %v2418
    %v2427 = vand.u32 2147483647, %v2419
    %v2428 = vand.u32 2147483647, %v2420
    %v2429 = vand.u32 2147483647, %v2421
    %v2430 = vmul.f32 %v2422, 0.3275911
    %v2431 = vmul.f32 %v2423, 0.3275911
    %v2432 = vmul.f32 %v2424, 0.3275911
    %v2433 = vmul.f32 %v2425, 0.3275911
    %v2434 = vmul.f32 %v2426, 0.3275911
    %v2435 = vmul.f32 %v2427, 0.3275911
    %v2436 = vmul.f32 %v2428, 0.3275911
    %v2437 = vmul.f32 %v2429, 0.3275911
    %v2438 = vadd.f32 %v2430, 1.0
    %v2439 = vadd.f32 %v2431, 1.0
    %v2440 = vadd.f32 %v2432, 1.0
    %v2441 = vadd.f32 %v2433, 1.0
    %v2442 = vadd.f32 %v2434, 1.0
    %v2443 = vadd.f32 %v2435, 1.0
    %v2444 = vadd.f32 %v2436, 1.0
    %v2445 = vadd.f32 %v2437, 1.0
    %v2446 = vrcp.pop %v2438
    %v2447 = vmul.f32 %v2438, %v2446
    %v2448 = vsub.f32 1.0, %v2447
    %v2449 = vmul.f32 %v2446, %v2448
    %v2450 = vadd.f32 %v2446, %v2449
    %vm2451 = vweird.f32 %v2438
    %vm2452 = vweird.f32 %v2446
    %vm2453 = vmor %vm2451, %vm2452
    %v2454 = vsel %vm2453, %v2446, %v2450
    %v2455 = vand.u32 2147483647, %v2438
    %vm2456 = vcmp.eq.f32.partialorder %v2455, 8.507059e+37
    %v2457 = vand.u32 %v2438, 2147483648
    %v2458 = vor.u32 1.1754944e-38, %v2457
    %v2459 = vsel %vm2456, %v2458, %v2454
    %v2460 = vmul.f32 1.0, %v2459
    %v2461 = vrcp.pop %v2439
    %v2462 = vmul.f32 %v2439, %v2461
    %v2463 = vsub.f32 1.0, %v2462
    %v2464 = vmul.f32 %v2461, %v2463
    %v2465 = vadd.f32 %v2461, %v2464
    %vm2466 = vweird.f32 %v2439
    %vm2467 = vweird.f32 %v2461
    %vm2468 = vmor %vm2466, %vm2467
    %v2469 = vsel %vm2468, %v2461, %v2465
    %v2470 = vand.u32 2147483647, %v2439
    %vm2471 = vcmp.eq.f32.partialorder %v2470, 8.507059e+37
    %v2472 = vand.u32 %v2439, 2147483648
    %v2473 = vor.u32 1.1754944e-38, %v2472
    %v2474 = vsel %vm2471, %v2473, %v2469
    %v2475 = vmul.f32 1.0, %v2474
    %v2476 = vrcp.pop %v2440
    %v2477 = vmul.f32 %v2440, %v2476
    %v2478 = vsub.f32 1.0, %v2477
    %v2479 = vmul.f32 %v2476, %v2478
    %v2480 = vadd.f32 %v2476, %v2479
    %vm2481 = vweird.f32 %v2440
    %vm2482 = vweird.f32 %v2476
    %vm2483 = vmor %vm2481, %vm2482
    %v2484 = vsel %vm2483, %v2476, %v2480
    %v2485 = vand.u32 2147483647, %v2440
    %vm2486 = vcmp.eq.f32.partialorder %v2485, 8.507059e+37
    %v2487 = vand.u32 %v2440, 2147483648
    %v2488 = vor.u32 1.1754944e-38, %v2487
    %v2489 = vsel %vm2486, %v2488, %v2484
    %v2490 = vmul.f32 1.0, %v2489
    %v2491 = vrcp.pop %v2441
    %v2492 = vmul.f32 %v2441, %v2491
    %v2493 = vsub.f32 1.0, %v2492
    %v2494 = vmul.f32 %v2491, %v2493
    %v2495 = vadd.f32 %v2491, %v2494
    %vm2496 = vweird.f32 %v2441
    %vm2497 = vweird.f32 %v2491
    %vm2498 = vmor %vm2496, %vm2497
    %v2499 = vsel %vm2498, %v2491, %v2495
    %v2500 = vand.u32 2147483647, %v2441
    %vm2501 = vcmp.eq.f32.partialorder %v2500, 8.507059e+37
    %v2502 = vand.u32 %v2441, 2147483648
    %v2503 = vor.u32 1.1754944e-38, %v2502
    %v2504 = vsel %vm2501, %v2503, %v2499
    %v2505 = vmul.f32 1.0, %v2504
    %v2506 = vrcp.pop %v2442
    %v2507 = vmul.f32 %v2442, %v2506
    %v2508 = vsub.f32 1.0, %v2507
    %v2509 = vmul.f32 %v2506, %v2508
    %v2510 = vadd.f32 %v2506, %v2509
    %vm2511 = vweird.f32 %v2442
    %vm2512 = vweird.f32 %v2506
    %vm2513 = vmor %vm2511, %vm2512
    %v2514 = vsel %vm2513, %v2506, %v2510
    %v2515 = vand.u32 2147483647, %v2442
    %vm2516 = vcmp.eq.f32.partialorder %v2515, 8.507059e+37
    %v2517 = vand.u32 %v2442, 2147483648
    %v2518 = vor.u32 1.1754944e-38, %v2517
    %v2519 = vsel %vm2516, %v2518, %v2514
    %v2520 = vmul.f32 1.0, %v2519
    %v2521 = vrcp.pop %v2443
    %v2522 = vmul.f32 %v2443, %v2521
    %v2523 = vsub.f32 1.0, %v2522
    %v2524 = vmul.f32 %v2521, %v2523
    %v2525 = vadd.f32 %v2521, %v2524
    %vm2526 = vweird.f32 %v2443
    %vm2527 = vweird.f32 %v2521
    %vm2528 = vmor %vm2526, %vm2527
    %v2529 = vsel %vm2528, %v2521, %v2525
    %v2530 = vand.u32 2147483647, %v2443
    %vm2531 = vcmp.eq.f32.partialorder %v2530, 8.507059e+37
    %v2532 = vand.u32 %v2443, 2147483648
    %v2533 = vor.u32 1.1754944e-38, %v2532
    %v2534 = vsel %vm2531, %v2533, %v2529
    %v2535 = vmul.f32 1.0, %v2534
    %v2536 = vrcp.pop %v2444
    %v2537 = vmul.f32 %v2444, %v2536
    %v2538 = vsub.f32 1.0, %v2537
    %v2539 = vmul.f32 %v2536, %v2538
    %v2540 = vadd.f32 %v2536, %v2539
    %vm2541 = vweird.f32 %v2444
    %vm2542 = vweird.f32 %v2536
    %vm2543 = vmor %vm2541, %vm2542
    %v2544 = vsel %vm2543, %v2536, %v2540
    %v2545 = vand.u32 2147483647, %v2444
    %vm2546 = vcmp.eq.f32.partialorder %v2545, 8.507059e+37
    %v2547 = vand.u32 %v2444, 2147483648
    %v2548 = vor.u32 1.1754944e-38, %v2547
    %v2549 = vsel %vm2546, %v2548, %v2544
    %v2550 = vmul.f32 1.0, %v2549
    %v2551 = vrcp.pop %v2445
    %v2552 = vmul.f32 %v2445, %v2551
    %v2553 = vsub.f32 1.0, %v2552
    %v2554 = vmul.f32 %v2551, %v2553
    %v2555 = vadd.f32 %v2551, %v2554
    %vm2556 = vweird.f32 %v2445
    %vm2557 = vweird.f32 %v2551
    %vm2558 = vmor %vm2556, %vm2557
    %v2559 = vsel %vm2558, %v2551, %v2555
    %v2560 = vand.u32 2147483647, %v2445
    %vm2561 = vcmp.eq.f32.partialorder %v2560, 8.507059e+37
    %v2562 = vand.u32 %v2445, 2147483648
    %v2563 = vor.u32 1.1754944e-38, %v2562
    %v2564 = vsel %vm2561, %v2563, %v2559
    %v2565 = vmul.f32 1.0, %v2564
    %v2566 = vmul.f32 %v2460, 1.0614054
    %v2567 = vmul.f32 %v2475, 1.0614054
    %v2568 = vmul.f32 %v2490, 1.0614054
    %v2569 = vmul.f32 %v2505, 1.0614054
    %v2570 = vmul.f32 %v2520, 1.0614054
    %v2571 = vmul.f32 %v2535, 1.0614054
    %v2572 = vmul.f32 %v2550, 1.0614054
    %v2573 = vmul.f32 %v2565, 1.0614054
    %v2574 = vadd.f32 %v2566, -1.4531521
    %v2575 = vadd.f32 %v2567, -1.4531521
    %v2576 = vadd.f32 %v2568, -1.4531521
    %v2577 = vadd.f32 %v2569, -1.4531521
    %v2578 = vadd.f32 %v2570, -1.4531521
    %v2579 = vadd.f32 %v2571, -1.4531521
    %v2580 = vadd.f32 %v2572, -1.4531521
    %v2581 = vadd.f32 %v2573, -1.4531521
    %v2582 = vmul.f32 %v2574, %v2460
    %v2583 = vmul.f32 %v2575, %v2475
    %v2584 = vmul.f32 %v2576, %v2490
    %v2585 = vmul.f32 %v2577, %v2505
    %v2586 = vmul.f32 %v2578, %v2520
    %v2587 = vmul.f32 %v2579, %v2535
    %v2588 = vmul.f32 %v2580, %v2550
    %v2589 = vmul.f32 %v2581, %v2565
    %v2590 = vadd.f32 %v2582, 1.4214138
    %v2591 = vadd.f32 %v2583, 1.4214138
    %v2592 = vadd.f32 %v2584, 1.4214138
    %v2593 = vadd.f32 %v2585, 1.4214138
    %v2594 = vadd.f32 %v2586, 1.4214138
    %v2595 = vadd.f32 %v2587, 1.4214138
    %v2596 = vadd.f32 %v2588, 1.4214138
    %v2597 = vadd.f32 %v2589, 1.4214138
    %v2598 = vmul.f32 %v2590, %v2460
    %v2599 = vmul.f32 %v2591, %v2475
    %v2600 = vmul.f32 %v2592, %v2490
    %v2601 = vmul.f32 %v2593, %v2505
    %v2602 = vmul.f32 %v2594, %v2520
    %v2603 = vmul.f32 %v2595, %v2535
    %v2604 = vmul.f32 %v2596, %v2550
    %v2605 = vmul.f32 %v2597, %v2565
    %v2606 = vadd.f32 %v2598, -0.28449672
    %v2607 = vadd.f32 %v2599, -0.28449672
    %v2608 = vadd.f32 %v2600, -0.28449672
    %v2609 = vadd.f32 %v2601, -0.28449672
    %v2610 = vadd.f32 %v2602, -0.28449672
    %v2611 = vadd.f32 %v2603, -0.28449672
    %v2612 = vadd.f32 %v2604, -0.28449672
    %v2613 = vadd.f32 %v2605, -0.28449672
    %v2614 = vmul.f32 %v2606, %v2460
    %v2615 = vmul.f32 %v2607, %v2475
    %v2616 = vmul.f32 %v2608, %v2490
    %v2617 = vmul.f32 %v2609, %v2505
    %v2618 = vmul.f32 %v2610, %v2520
    %v2619 = vmul.f32 %v2611, %v2535
    %v2620 = vmul.f32 %v2612, %v2550
    %v2621 = vmul.f32 %v2613, %v2565
    %v2622 = vadd.f32 %v2614, 0.2548296
    %v2623 = vadd.f32 %v2615, 0.2548296
    %v2624 = vadd.f32 %v2616, 0.2548296
    %v2625 = vadd.f32 %v2617, 0.2548296
    %v2626 = vadd.f32 %v2618, 0.2548296
    %v2627 = vadd.f32 %v2619, 0.2548296
    %v2628 = vadd.f32 %v2620, 0.2548296
    %v2629 = vadd.f32 %v2621, 0.2548296
    %v2630 = vmul.f32 %v2622, %v2460
    %v2631 = vmul.f32 %v2623, %v2475
    %v2632 = vmul.f32 %v2624, %v2490
    %v2633 = vmul.f32 %v2625, %v2505
    %v2634 = vmul.f32 %v2626, %v2520
    %v2635 = vmul.f32 %v2627, %v2535
    %v2636 = vmul.f32 %v2628, %v2550
    %v2637 = vmul.f32 %v2629, %v2565
    %v2638 = vsub.f32 0.0, %v2422
    %v2639 = vsub.f32 0.0, %v2423
    %v2640 = vsub.f32 0.0, %v2424
    %v2641 = vsub.f32 0.0, %v2425
    %v2642 = vsub.f32 0.0, %v2426
    %v2643 = vsub.f32 0.0, %v2427
    %v2644 = vsub.f32 0.0, %v2428
    %v2645 = vsub.f32 0.0, %v2429
    %v2646 = vmul.f32 %v2638, %v2422
    %v2647 = vmul.f32 %v2639, %v2423
    %v2648 = vmul.f32 %v2640, %v2424
    %v2649 = vmul.f32 %v2641, %v2425
    %v2650 = vmul.f32 %v2642, %v2426
    %v2651 = vmul.f32 %v2643, %v2427
    %v2652 = vmul.f32 %v2644, %v2428
    %v2653 = vmul.f32 %v2645, %v2429
    %v2654 = vmul.f32 %v2646, 1.442695
    %v2655 = vpow.pop %v2654
    %v2656 = vmul.f32 %v2647, 1.442695
    %v2657 = vpow.pop %v2656
    %v2658 = vmul.f32 %v2648, 1.442695
    %v2659 = vpow.pop %v2658
    %v2660 = vmul.f32 %v2649, 1.442695
    %v2661 = vpow.pop %v2660
    %v2662 = vmul.f32 %v2650, 1.442695
    %v2663 = vpow.pop %v2662
    %v2664 = vmul.f32 %v2651, 1.442695
    %v2665 = vpow.pop %v2664
    %v2666 = vmul.f32 %v2652, 1.442695
    %v2667 = vpow.pop %v2666
    %v2668 = vmul.f32 %v2653, 1.442695
    %v2669 = vpow.pop %v2668
    %v2670 = vmul.f32 %v2630, %v2655
    %v2671 = vmul.f32 %v2631, %v2657
    %v2672 = vmul.f32 %v2632, %v2659
    %v2673 = vmul.f32 %v2633, %v2661
    %v2674 = vmul.f32 %v2634, %v2663
    %v2675 = vmul.f32 %v2635, %v2665
    %v2676 = vmul.f32 %v2636, %v2667
    %v2677 = vmul.f32 %v2637, %v2669
    %v2678 = vsub.f32 1.0, %v2670
    %v2679 = vsub.f32 1.0, %v2671
    %v2680 = vsub.f32 1.0, %v2672
    %v2681 = vsub.f32 1.0, %v2673
    %v2682 = vsub.f32 1.0, %v2674
    %v2683 = vsub.f32 1.0, %v2675
    %v2684 = vsub.f32 1.0, %v2676
    %v2685 = vsub.f32 1.0, %v2677
    %vm2686 = vcmp.ge.f32.partialorder %v2414, 0.0
    %vm2687 = vcmp.ge.f32.partialorder %v2415, 0.0
    %vm2688 = vcmp.ge.f32.partialorder %v2416, 0.0
    %vm2689 = vcmp.ge.f32.partialorder %v2417, 0.0
    %vm2690 = vcmp.ge.f32.partialorder %v2418, 0.0
    %vm2691 = vcmp.ge.f32.partialorder %v2419, 0.0
    %vm2692 = vcmp.ge.f32.partialorder %v2420, 0.0
    %vm2693 = vcmp.ge.f32.partialorder %v2421, 0.0
    %v2694 = vsub.f32 0.0, %v2678
    %v2695 = vsub.f32 0.0, %v2679
    %v2696 = vsub.f32 0.0, %v2680
    %v2697 = vsub.f32 0.0, %v2681
    %v2698 = vsub.f32 0.0, %v2682
    %v2699 = vsub.f32 0.0, %v2683
    %v2700 = vsub.f32 0.0, %v2684
    %v2701 = vsub.f32 0.0, %v2685
    %v2702 = vsel %vm2686, %v2678, %v2694
    %v2703 = vsel %vm2687, %v2679, %v2695
    %v2704 = vsel %vm2688, %v2680, %v2696
    %v2705 = vsel %vm2689, %v2681, %v2697
    %v2706 = vsel %vm2690, %v2682, %v2698
    %v2707 = vsel %vm2691, %v2683, %v2699
    %v2708 = vsel %vm2692, %v2684, %v2700
    %v2709 = vsel %vm2693, %v2685, %v2701
    %v2710 = vadd.f32 %v2702, 1.0
    %v2711 = vadd.f32 %v2703, 1.0
    %v2712 = vadd.f32 %v2704, 1.0
    %v2713 = vadd.f32 %v2705, 1.0
    %v2714 = vadd.f32 %v2706, 1.0
    %v2715 = vadd.f32 %v2707, 1.0
    %v2716 = vadd.f32 %v2708, 1.0
    %v2717 = vadd.f32 %v2709, 1.0
    %v2718 = vmul.f32 %v2406, %v2710
    %v2719 = vmul.f32 %v2407, %v2711
    %v2720 = vmul.f32 %v2408, %v2712
    %v2721 = vmul.f32 %v2409, %v2713
    %v2722 = vmul.f32 %v2410, %v2714
    %v2723 = vmul.f32 %v2411, %v2715
    %v2724 = vmul.f32 %v2412, %v2716
    %v2725 = vmul.f32 %v2413, %v2717
    %v2727 = vsel %vm120, %v2718, 0
    %v2730 = vsel %vm120, %v2719, 0
    %v2733 = vsel %vm120, %v2720, 0
    %v2736 = vsel %vm120, %v2721, 0
    %v2739 = vsel %vm120, %v2722, 0
    %v2742 = vsel %vm120, %v2723, 0
    %v2745 = vsel %vm120, %v2724, 0
    %v2748 = vsel %vm120, %v2725, 0
    %2750 = vmatpush.msra.mxu0 0.0
    %2751 = vmatpush.msra.mxu0 0.0
    %2752 = vmatpush.msra.mxu0 0.0
    %2753 = vmatpush.msra.mxu0 0.0
    %2754 = vmatpush.msra.mxu0 0.0
    %2755 = vmatpush.msra.mxu0 0.0
    %2756 = vmatpush.msra.mxu0 0.0
    %2757 = vmatpush.msra.mxu0 0.0
    %2758 = vmatpush.msra.mxu0 0.0
    %2759 = vmatpush.msra.mxu0 0.0
    %2760 = vmatpush.msra.mxu0 0.0
    %2761 = vmatpush.msra.mxu0 0.0
    %2762 = vmatpush.msra.mxu0 %v1468
    %2763 = vmatpush.msra.mxu0 %v1467
    %2764 = vmatpush.msra.mxu0 %v1466
    %2765 = vmatpush.msra.mxu0 %v1465
    %2766 = vmatmul.f32.gmra.mxu0 %v2727
    %v2767 = vpop.f32.mrf.mxu0
    %v2768 = vadd.f32 0.0, %v2767
    %2769 = vmatmul.f32.gmra.mxu0 %v2730
    %v2770 = vpop.f32.mrf.mxu0
    %v2771 = vadd.f32 0.0, %v2770
    %2772 = vmatmul.f32.gmra.mxu0 %v2733
    %v2773 = vpop.f32.mrf.mxu0
    %v2774 = vadd.f32 0.0, %v2773
    %2775 = vmatmul.f32.gmra.mxu0 %v2736
    %v2776 = vpop.f32.mrf.mxu0
    %v2777 = vadd.f32 0.0, %v2776
    %2778 = vmatmul.f32.gmra.mxu0 %v2739
    %v2779 = vpop.f32.mrf.mxu0
    %v2780 = vadd.f32 0.0, %v2779
    %2781 = vmatmul.f32.gmra.mxu0 %v2742
    %v2782 = vpop.f32.mrf.mxu0
    %v2783 = vadd.f32 0.0, %v2782
    %2784 = vmatmul.f32.gmra.mxu0 %v2745
    %v2785 = vpop.f32.mrf.mxu0
    %v2786 = vadd.f32 0.0, %v2785
    %2787 = vmatmul.f32.gmra.mxu0 %v2748
    %v2788 = vpop.f32.mrf.mxu0
    %v2789 = vadd.f32 0.0, %v2788
    %2790 = vdwg.mxu0
    %v2791 = vadd.f32 %v2138, %v2768
    %v2792 = vadd.f32 %v2139, %v2771
    %v2793 = vadd.f32 %v2140, %v2774
    %v2794 = vadd.f32 %v2141, %v2777
    %v2795 = vadd.f32 %v2142, %v2780
    %v2796 = vadd.f32 %v2143, %v2783
    %v2797 = vadd.f32 %v2144, %v2786
    %v2798 = vadd.f32 %v2145, %v2789
    %v2799 = vperm.slane %v1483, 0
    %v2800 = vadd.f32 %v2791, %v2799
    %v2801 = vadd.f32 %v2792, %v2799
    %v2802 = vadd.f32 %v2793, %v2799
    %v2803 = vadd.f32 %v2794, %v2799
    %v2804 = vadd.f32 %v2795, %v2799
    %v2805 = vadd.f32 %v2796, %v2799
    %v2806 = vadd.f32 %v2797, %v2799
    %v2807 = vadd.f32 %v2798, %v2799
    %v2808 = vsel %vm120, %v2800, 0.0
    %2809 = vadd.xlane.f32.xlu0 %v2808
    %v2810 = vpop.xlane.xlu0 %2809
    %v2811 = vsel %vm120, %v2801, 0.0
    %2812 = vadd.xlane.f32.xlu0 %v2811
    %v2813 = vpop.xlane.xlu0 %2812
    %v2814 = vsel %vm120, %v2802, 0.0
    %2815 = vadd.xlane.f32.xlu0 %v2814
    %v2816 = vpop.xlane.xlu0 %2815
    %v2817 = vsel %vm120, %v2803, 0.0
    %2818 = vadd.xlane.f32.xlu0 %v2817
    %v2819 = vpop.xlane.xlu0 %2818
    %v2820 = vsel %vm120, %v2804, 0.0
    %2821 = vadd.xlane.f32.xlu0 %v2820
    %v2822 = vpop.xlane.xlu0 %2821
    %v2823 = vsel %vm120, %v2805, 0.0
    %2824 = vadd.xlane.f32.xlu0 %v2823
    %v2825 = vpop.xlane.xlu0 %2824
    %v2826 = vsel %vm120, %v2806, 0.0
    %2827 = vadd.xlane.f32.xlu0 %v2826
    %v2828 = vpop.xlane.xlu0 %2827
    %v2829 = vsel %vm120, %v2807, 0.0
    %2830 = vadd.xlane.f32.xlu0 %v2829
    %v2831 = vpop.xlane.xlu0 %2830
    %v2832 = vmul.f32 %v2810, %v151
    %v2833 = vmul.f32 %v2813, %v151
    %v2834 = vmul.f32 %v2816, %v151
    %v2835 = vmul.f32 %v2819, %v151
    %v2836 = vmul.f32 %v2822, %v151
    %v2837 = vmul.f32 %v2825, %v151
    %v2838 = vmul.f32 %v2828, %v151
    %v2839 = vmul.f32 %v2831, %v151
    %v2840 = vsub.f32 %v2800, %v2832
    %v2841 = vsub.f32 %v2801, %v2833
    %v2842 = vsub.f32 %v2802, %v2834
    %v2843 = vsub.f32 %v2803, %v2835
    %v2844 = vsub.f32 %v2804, %v2836
    %v2845 = vsub.f32 %v2805, %v2837
    %v2846 = vsub.f32 %v2806, %v2838
    %v2847 = vsub.f32 %v2807, %v2839
    %v2848 = vmul.f32 %v2840, %v2840
    %v2849 = vmul.f32 %v2841, %v2841
    %v2850 = vmul.f32 %v2842, %v2842
    %v2851 = vmul.f32 %v2843, %v2843
    %v2852 = vmul.f32 %v2844, %v2844
    %v2853 = vmul.f32 %v2845, %v2845
    %v2854 = vmul.f32 %v2846, %v2846
    %v2855 = vmul.f32 %v2847, %v2847
    %v2856 = vsel %vm120, %v2848, 0.0
    %2857 = vadd.xlane.f32.xlu0 %v2856
    %v2858 = vpop.xlane.xlu0 %2857
    %v2859 = vsel %vm120, %v2849, 0.0
    %2860 = vadd.xlane.f32.xlu0 %v2859
    %v2861 = vpop.xlane.xlu0 %2860
    %v2862 = vsel %vm120, %v2850, 0.0
    %2863 = vadd.xlane.f32.xlu0 %v2862
    %v2864 = vpop.xlane.xlu0 %2863
    %v2865 = vsel %vm120, %v2851, 0.0
    %2866 = vadd.xlane.f32.xlu0 %v2865
    %v2867 = vpop.xlane.xlu0 %2866
    %v2868 = vsel %vm120, %v2852, 0.0
    %2869 = vadd.xlane.f32.xlu0 %v2868
    %v2870 = vpop.xlane.xlu0 %2869
    %v2871 = vsel %vm120, %v2853, 0.0
    %2872 = vadd.xlane.f32.xlu0 %v2871
    %v2873 = vpop.xlane.xlu0 %2872
    %v2874 = vsel %vm120, %v2854, 0.0
    %2875 = vadd.xlane.f32.xlu0 %v2874
    %v2876 = vpop.xlane.xlu0 %2875
    %v2877 = vsel %vm120, %v2855, 0.0
    %2878 = vadd.xlane.f32.xlu0 %v2877
    %v2879 = vpop.xlane.xlu0 %2878
    %v2880 = vmul.f32 %v2858, %v151
    %v2881 = vmul.f32 %v2861, %v151
    %v2882 = vmul.f32 %v2864, %v151
    %v2883 = vmul.f32 %v2867, %v151
    %v2884 = vmul.f32 %v2870, %v151
    %v2885 = vmul.f32 %v2873, %v151
    %v2886 = vmul.f32 %v2876, %v151
    %v2887 = vmul.f32 %v2879, %v151
    %v2888 = vadd.f32 %v2880, 1e-05
    %v2889 = vadd.f32 %v2881, 1e-05
    %v2890 = vadd.f32 %v2882, 1e-05
    %v2891 = vadd.f32 %v2883, 1e-05
    %v2892 = vadd.f32 %v2884, 1e-05
    %v2893 = vadd.f32 %v2885, 1e-05
    %v2894 = vadd.f32 %v2886, 1e-05
    %v2895 = vadd.f32 %v2887, 1e-05
    %v2896 = vrsqrt.pop %v2888
    %v2897 = vmul.f32 %v2896, %v2888
    %v2898 = vmul.f32 %v2897, %v2896
    %v2899 = vmul.f32 0.5, %v2898
    %v2900 = vsub.f32 1.5, %v2899
    %v2901 = vmul.f32 %v2896, %v2900
    %vm2902 = vweird.f32 %v2888
    %vm2903 = vweird.f32 %v2896
    %vm2904 = vmor %vm2902, %vm2903
    %v2905 = vsel %vm2904, %v2896, %v2901
    %v2906 = vrsqrt.pop %v2889
    %v2907 = vmul.f32 %v2906, %v2889
    %v2908 = vmul.f32 %v2907, %v2906
    %v2909 = vmul.f32 0.5, %v2908
    %v2910 = vsub.f32 1.5, %v2909
    %v2911 = vmul.f32 %v2906, %v2910
    %vm2912 = vweird.f32 %v2889
    %vm2913 = vweird.f32 %v2906
    %vm2914 = vmor %vm2912, %vm2913
    %v2915 = vsel %vm2914, %v2906, %v2911
    %v2916 = vrsqrt.pop %v2890
    %v2917 = vmul.f32 %v2916, %v2890
    %v2918 = vmul.f32 %v2917, %v2916
    %v2919 = vmul.f32 0.5, %v2918
    %v2920 = vsub.f32 1.5, %v2919
    %v2921 = vmul.f32 %v2916, %v2920
    %vm2922 = vweird.f32 %v2890
    %vm2923 = vweird.f32 %v2916
    %vm2924 = vmor %vm2922, %vm2923
    %v2925 = vsel %vm2924, %v2916, %v2921
    %v2926 = vrsqrt.pop %v2891
    %v2927 = vmul.f32 %v2926, %v2891
    %v2928 = vmul.f32 %v2927, %v2926
    %v2929 = vmul.f32 0.5, %v2928
    %v2930 = vsub.f32 1.5, %v2929
    %v2931 = vmul.f32 %v2926, %v2930
    %vm2932 = vweird.f32 %v2891
    %vm2933 = vweird.f32 %v2926
    %vm2934 = vmor %vm2932, %vm2933
    %v2935 = vsel %vm2934, %v2926, %v2931
    %v2936 = vrsqrt.pop %v2892
    %v2937 = vmul.f32 %v2936, %v2892
    %v2938 = vmul.f32 %v2937, %v2936
    %v2939 = vmul.f32 0.5, %v2938
    %v2940 = vsub.f32 1.5, %v2939
    %v2941 = vmul.f32 %v2936, %v2940
    %vm2942 = vweird.f32 %v2892
    %vm2943 = vweird.f32 %v2936
    %vm2944 = vmor %vm2942, %vm2943
    %v2945 = vsel %vm2944, %v2936, %v2941
    %v2946 = vrsqrt.pop %v2893
    %v2947 = vmul.f32 %v2946, %v2893
    %v2948 = vmul.f32 %v2947, %v2946
    %v2949 = vmul.f32 0.5, %v2948
    %v2950 = vsub.f32 1.5, %v2949
    %v2951 = vmul.f32 %v2946, %v2950
    %vm2952 = vweird.f32 %v2893
    %vm2953 = vweird.f32 %v2946
    %vm2954 = vmor %vm2952, %vm2953
    %v2955 = vsel %vm2954, %v2946, %v2951
    %v2956 = vrsqrt.pop %v2894
    %v2957 = vmul.f32 %v2956, %v2894
    %v2958 = vmul.f32 %v2957, %v2956
    %v2959 = vmul.f32 0.5, %v2958
    %v2960 = vsub.f32 1.5, %v2959
    %v2961 = vmul.f32 %v2956, %v2960
    %vm2962 = vweird.f32 %v2894
    %vm2963 = vweird.f32 %v2956
    %vm2964 = vmor %vm2962, %vm2963
    %v2965 = vsel %vm2964, %v2956, %v2961
    %v2966 = vrsqrt.pop %v2895
    %v2967 = vmul.f32 %v2966, %v2895
    %v2968 = vmul.f32 %v2967, %v2966
    %v2969 = vmul.f32 0.5, %v2968
    %v2970 = vsub.f32 1.5, %v2969
    %v2971 = vmul.f32 %v2966, %v2970
    %vm2972 = vweird.f32 %v2895
    %vm2973 = vweird.f32 %v2966
    %vm2974 = vmor %vm2972, %vm2973
    %v2975 = vsel %vm2974, %v2966, %v2971
    %v2976 = vmul.f32 %v2840, %v2905
    %v2977 = vmul.f32 %v2841, %v2915
    %v2978 = vmul.f32 %v2842, %v2925
    %v2979 = vmul.f32 %v2843, %v2935
    %v2980 = vmul.f32 %v2844, %v2945
    %v2981 = vmul.f32 %v2845, %v2955
    %v2982 = vmul.f32 %v2846, %v2965
    %v2983 = vmul.f32 %v2847, %v2975
    %v2984 = vperm.slane %v38, 0
    %v2985 = vmul.f32 %v2976, %v2984
    %v2986 = vmul.f32 %v2977, %v2984
    %v2987 = vmul.f32 %v2978, %v2984
    %v2988 = vmul.f32 %v2979, %v2984
    %v2989 = vmul.f32 %v2980, %v2984
    %v2990 = vmul.f32 %v2981, %v2984
    %v2991 = vmul.f32 %v2982, %v2984
    %v2992 = vmul.f32 %v2983, %v2984
    %v2993 = vperm.slane %v39, 0
    %v2994 = vadd.f32 %v2985, %v2993
    %v2995 = vadd.f32 %v2986, %v2993
    %v2996 = vadd.f32 %v2987, %v2993
    %v2997 = vadd.f32 %v2988, %v2993
    %v2998 = vadd.f32 %v2989, %v2993
    %v2999 = vadd.f32 %v2990, %v2993
    %v3000 = vadd.f32 %v2991, %v2993
    %v3001 = vadd.f32 %v2992, %v2993
    %v3002 = vlaneseq
    %v3003 = vshrl.u32 %v3002, 7
    %v3004 = vlaneseq
    %v3005 = vand.u32 %v3004, 127
    %v3006 = vmul.u32 %v3003, 32
    %vm3007 = vcmp.ge.s32.totalorder %v3005, %v3006
    %v3008 = vadd.s32 %v3006, 32
    %vm3009 = vcmp.lt.s32.totalorder %v3005, %v3008
    %vm3010 = vmand %vm3007, %vm3009
    %v3011 = vsel %vm3010, 0.03125, 0.0
    %vm3012 = vcmask 523264
    %v3014 = vsel %vm3012, %v3011, 0
    %3016 = vmatpush.msra.mxu0 0.0
    %3017 = vmatpush.msra.mxu0 0.0
    %3018 = vmatpush.msra.mxu0 0.0
    %3019 = vmatpush.msra.mxu0 0.0
    %3020 = vmatpush.msra.mxu0 0.0
    %3021 = vmatpush.msra.mxu0 0.0
    %3022 = vmatpush.msra.mxu0 0.0
    %3023 = vmatpush.msra.mxu0 0.0
    %3024 = vmatpush.msra.mxu0 %v3001
    %3025 = vmatpush.msra.mxu0 %v3000
    %3026 = vmatpush.msra.mxu0 %v2999
    %3027 = vmatpush.msra.mxu0 %v2998
    %3028 = vmatpush.msra.mxu0 %v2997
    %3029 = vmatpush.msra.mxu0 %v2996
    %3030 = vmatpush.msra.mxu0 %v2995
    %3031 = vmatpush.msra.mxu0 %v2994
    %3032 = vmatmul.f32.gmra.mxu0 %v3014
    %v3033 = vpop.f32.mrf.mxu0
    %v3034 = vadd.f32 0.0, %v3033
    %3035 = vdwg.mxu0
    %v3036 = vld [vmem:[%s4] sm:$0xff]
    %v3037 = vld [vmem:[%s4 + $0x8] sm:$0xff]
    %v3038 = vld [vmem:[%s4 + $0x10] sm:$0xff]
    %v3039 = vld [vmem:[%s4 + $0x18] sm:$0xff]
    %v3040 = vld [vmem:[%s4 + $0x20] sm:$0x1]
    %v3041 = vperm.slane %v3040, 0
    %v3043 = vsel %vm120, %v3034, 0
    %3045 = vmatpush.msra.mxu0 0.0
    %3046 = vmatpush.msra.mxu0 0.0
    %3047 = vmatpush.msra.mxu0 0.0
    %3048 = vmatpush.msra.mxu0 0.0
    %3049 = vmatpush.msra.mxu0 0.0
    %3050 = vmatpush.msra.mxu0 0.0
    %3051 = vmatpush.msra.mxu0 0.0
    %3052 = vmatpush.msra.mxu0 0.0
    %3053 = vmatpush.msra.mxu0 0.0
    %3054 = vmatpush.msra.mxu0 0.0
    %3055 = vmatpush.msra.mxu0 0.0
    %3056 = vmatpush.msra.mxu0 0.0
    %3057 = vmatpush.msra.mxu0 %v3039
    %3058 = vmatpush.msra.mxu0 %v3038
    %3059 = vmatpush.msra.mxu0 %v3037
    %3060 = vmatpush.msra.mxu0 %v3036
    %3061 = vmatmul.f32.gmra.mxu0 %v3043
    %v3062 = vpop.f32.mrf.mxu0
    %v3063 = vadd.f32 %v3041, %v3062
    %3064 = vdwg.mxu0
    %3065 = vst [vmem:[#allocation2] sm:$0x3] %v3063
    // Predicated region
    $region22: #{tpu_custom_call.1} parent=1 // pred_check
      _
    $region23: #{tpu_custom_call.1} parent=1 // pred_check_branch
      %3067 = sbr.rel (0) target = $region25
    $region24: #{tpu_custom_call.1} parent=1 // pred_region
      %3069 = vsyncadd [#allocation3], 0
      %s3071 = sshll.u32 [#allocation2], 4
      %s3072 = int_to_ptr.vmem [resolvable:$true] %s3071
      %s3073 = sshll.u32 %s5, 4
      %s3074 = int_to_ptr.hbm [resolvable:$true] %s3073
      %3076 = dma.vmem_to_hbm [thread:$0]  %s3072, 32, %s3074, [#allocation3]
    $region25: #{tpu_custom_call.1} parent=1 // pred_fallthru
      _
    // Predicated region
    $region26: #{tpu_custom_call.1} parent=1 // pred_check
      _
    $region27: #{tpu_custom_call.1} parent=1 // pred_check_branch
      %3078 = sbr.rel (0) target = $region29
    $region28: #{tpu_custom_call.1} parent=1 // pred_region
      %3080 = dma.done [#allocation3], 32
    $region29: #{tpu_custom_call.1} parent=1 // pred_fallthru
      _
    %3081 = vsyncpa [#allocation3], 1

</llo_original>
